<compile_context>
chip_gen: v7x
topology: tpu7x:2x2x1
jax: 0.10.0
libtpu: 0.0.40
codegen_flags: <defaults>
</compile_context>

<pallas_src>
import functools
import math

import numpy as np

import jax
import jax.numpy as jnp
from jax.experimental import pallas as pl
from jax.experimental.pallas import tpu as pltpu


def _sigmoid(x):
    # 1/(1+exp(-x)); approx reciprocal lowers to the EUP slot (essentially
    # free).  The softmax normalization below remains an exact division.
    return pl.reciprocal(1.0 + jnp.exp(-x), approx=True)


# ------------------------- the fused Pallas kernel --------------------------

def _lenet_kernel(pcols_ref, w1_ref, b1_ref, w2_ref, b2_ref, pool2_ref,
                  wfc1_ref, bfc1_ref, wfc2_ref, bfc2_ref, wfc3_ref, bfc3_ref,
                  out_ref, *, nb, w2_row_stride, l_rows, n_pool2):
    f32 = jnp.float32

    # conv1 (+ pool1 folded into the patches): (nb*R, 25) @ (25, 8) on the MXU
    # bf16 inputs, f32 accumulation.  Channels 6..7 are zero padding.
    p1 = jnp.dot(pcols_ref[...], w1_ref[...], preferred_element_type=f32)
    p1 = p1 + b1_ref[...]                                   # (nb*R, 8) f32

    # conv2 via 25 shifted matmuls over the pooled slab, accumulated in f32.
    # Output row r (= image*R + ho2*W2 + wo2) of `acc` is the conv2 value at
    # (ho2, wo2); rows outside the valid 4x4 grid are garbage and are never
    # selected by the pool2 matrix below.
    acc = jnp.zeros((l_rows, 16), f32)
    for di in range(5):
        for dj in range(5):
            k = di * 5 + dj
            shift = di * w2_row_stride + dj
            win = p1[shift:shift + l_rows, :]                # (l_rows, 8)
            acc = acc + jnp.dot(win, w2_ref[k * 8:(k + 1) * 8, :],
                                preferred_element_type=f32)
    y2 = acc + b2_ref[...]                                   # (l_rows, 16)

    # pool2 + valid-row selection fused into one matmul with a constant
    # 0 / 0.25 matrix.  Rows of p2 are ordered (spatial position, image).
    p2 = jnp.dot(pool2_ref[...], y2, preferred_element_type=f32)  # (n_pool2*nb, 16)

    # fc1: the NCHW flatten permutation is folded into wfc1's row order, so
    # the contraction is a short sum of (nb,16)@(16,120) matmuls.
    h = jnp.zeros((nb, 120), f32) + bfc1_ref[...]
    for s in range(n_pool2):
        h = h + jnp.dot(p2[s * nb:(s + 1) * nb, :],
                        wfc1_ref[s * 16:(s + 1) * 16, :],
                        preferred_element_type=f32)
    h = _sigmoid(h)
    h = _sigmoid(jnp.dot(h, wfc2_ref[...], preferred_element_type=f32)
                 + bfc2_ref[...])
    z = _sigmoid(jnp.dot(h, wfc3_ref[...], preferred_element_type=f32)
                 + bfc3_ref[...])

    # softmax over the class dim (nn.Softmax() on a 2-D tensor -> dim=1)
    z = z - jnp.max(z, axis=-1, keepdims=True)
    e = jnp.exp(z)
    probs = e / jnp.sum(e, axis=-1, keepdims=True)           # (nb, 10)

    for i in range(nb):
        out_ref[i] = probs[i:i + 1, :].astype(out_ref.dtype)


# ------------------------------ wrapper -------------------------------------

def lenet_forward(x_nchw, p, images_per_block=8):
    """LeNet forward.  x_nchw: (N, 1, H, W) f32, H and W divisible by 4."""
    N, C, H, W = x_nchw.shape
    assert C == 1 and H % 4 == 0 and W % 4 == 0 and H >= 12 and W >= 12

    H2, W2 = H // 2, W // 2            # pool1 output spatial dims
    H3, W3 = H2 - 4, W2 - 4            # conv2 output spatial dims
    H4, W4 = H3 // 2, W3 // 2          # pool2 output spatial dims
    R = H2 * W2                        # pool1 rows per image in the slab
    n_pool2 = H4 * W4                  # pool2 spatial positions per image
    assert 16 * n_pool2 == p["w_fc1"].shape[0]

    nb = max(1, min(int(images_per_block), N))     # images per grid step
    if nb < N and (nb * R) % 16 != 0:              # keep bf16 block 16-aligned
        nb = N
    n_blocks = pl.cdiv(N, nb)
    Np = n_blocks * nb
    Lv = (H3 - 1) * W2 + W3            # last valid conv2 "full-grid" row + 1
    L = (nb - 1) * R + Lv              # conv2 slab rows processed per block

    # ---- input prep (XLA glue on the raw input only): pooled im2col --------
    # pool1(conv1(x)) == conv1 applied to 2x2-averaged patches (both linear).
    xs = x_nchw[:, 0].astype(jnp.float32)                   # (N, H, W)
    xp = jnp.pad(xs, ((0, 0), (2, 2), (2, 2)))              # conv1 padding=2
    xavg = 0.25 * (xp[:, :-1, :-1] + xp[:, :-1, 1:]
                   + xp[:, 1:, :-1] + xp[:, 1:, 1:])        # (N, H+3, W+3)
    patches = jnp.stack([xavg[:, di:di + H:2, dj:dj + W:2]
                         for di in range(5) for dj in range(5)],
                        axis=-1)                            # (N, H2, W2, 25)
    pcols = patches.reshape(N, R, 25)
    if Np != N:                                             # pad batch to block multiple
        pcols = jnp.pad(pcols, ((0, Np - N), (0, 0), (0, 0)))
    pcols = pcols.reshape(Np * R, 25).astype(jnp.bfloat16)

    # ---- weight packing (trace-time only, negligible) -----------------------
    w1 = jnp.pad(p["w_conv1"].reshape(6, 25).T, ((0, 0), (0, 2)))    # (25, 8)
    b1 = jnp.pad(p["b_conv1"], (0, 2)).reshape(1, 8)
    # (Cout, Cin, 5, 5) -> rows ordered (kh*5+kw, cin padded 6->8), cols Cout
    w2 = jnp.transpose(p["w_conv2"], (2, 3, 1, 0))                    # (5,5,6,16)
    w2 = jnp.pad(w2, ((0, 0), (0, 0), (0, 2), (0, 0))).reshape(200, 16)
    b2 = p["b_conv2"].reshape(1, 16)
    # fc1: fold the PyTorch NCHW flatten (c, h, w) into the row order (s, c)
    wfc1 = jnp.transpose(p["w_fc1"].reshape(16, n_pool2, 120),
                         (1, 0, 2)).reshape(16 * n_pool2, 120)
    bfc1 = p["b_fc1"].reshape(1, 120)
    wfc2, bfc2 = p["w_fc2"], p["b_fc2"].reshape(1, 84)
    wfc3, bfc3 = p["w_fc3"], p["b_fc3"].reshape(1, 10)

    # pool2 + valid-row selection matrix; rows ordered (spatial s, image i)
    pool2_mat = np.zeros((n_pool2 * nb, L), np.float32)
    for h3 in range(H4):
        for w3 in range(W4):
            s = h3 * W4 + w3
            for i in range(nb):
                for a in range(2):
                    for b in range(2):
                        col = i * R + (2 * h3 + a) * W2 + (2 * w3 + b)
                        pool2_mat[s * nb + i, col] = 0.25
    pool2_mat = jnp.asarray(pool2_mat)

    kern = functools.partial(_lenet_kernel, nb=nb, w2_row_stride=W2,
                             l_rows=L, n_pool2=n_pool2)
    full = lambda ib: (0, 0)

    out = pl.pallas_call(
        kern,
        out_shape=jax.ShapeDtypeStruct((Np, 1, 10), jnp.float32),
        grid=(n_blocks,),
        in_specs=[
            pl.BlockSpec((nb * R, 25), lambda ib: (ib, 0)),    # pooled patches
            pl.BlockSpec((25, 8), full),                        # conv1 weight
            pl.BlockSpec((1, 8), full),                         # conv1 bias
            pl.BlockSpec((200, 16), full),                      # conv2 weight
            pl.BlockSpec((1, 16), full),                        # conv2 bias
            pl.BlockSpec((n_pool2 * nb, L), full),              # pool2 matrix
            pl.BlockSpec((16 * n_pool2, 120), full),            # fc1 weight
            pl.BlockSpec((1, 120), full),                       # fc1 bias
            pl.BlockSpec((120, 84), full),                      # fc2 weight
            pl.BlockSpec((1, 84), full),                        # fc2 bias
            pl.BlockSpec((84, 10), full),                       # fc3 weight
            pl.BlockSpec((1, 10), full),                        # fc3 bias
        ],
        out_specs=pl.BlockSpec((nb, 1, 10), lambda ib: (ib, 0, 0)),
        compiler_params=pltpu.CompilerParams(
            dimension_semantics=("parallel",)),                 # v7x: 2 TCs
    )(pcols,
      w1.astype(jnp.bfloat16), b1.astype(jnp.float32),
      w2.astype(jnp.float32), b2.astype(jnp.float32),
      pool2_mat,
      wfc1.astype(jnp.float32), bfc1.astype(jnp.float32),
      wfc2.astype(jnp.float32), bfc2.astype(jnp.float32),
      wfc3.astype(jnp.float32), bfc3.astype(jnp.float32))

    return out[:N, 0, :]


# ------------------------------ params --------------------------------------

def init_params(key, H, W):
    """Deterministic synthetic init mirroring the PyTorch init scheme."""
    ks = jax.random.split(key, 8)
    p = {}
    # Conv weights: kaiming_normal_(mode='fan_out', nonlinearity='relu')
    p["w_conv1"] = jax.random.normal(ks[0], (6, 1, 5, 5), jnp.float32) * math.sqrt(2.0 / (6 * 25))
    p["b_conv1"] = jax.random.uniform(ks[1], (6,), jnp.float32,
                                      -1.0 / math.sqrt(1 * 25), 1.0 / math.sqrt(1 * 25))
    p["w_conv2"] = jax.random.normal(ks[2], (16, 6, 5, 5), jnp.float32) * math.sqrt(2.0 / (16 * 25))
    p["b_conv2"] = jax.random.uniform(ks[3], (16,), jnp.float32,
                                      -1.0 / math.sqrt(6 * 25), 1.0 / math.sqrt(6 * 25))
    # Linear weights: xavier_normal_, biases zero.  Stored transposed (in, out),
    # rows in PyTorch flatten order (c, h, w).
    feat = int(16 * (H / 4 - 2) * (W / 4 - 2))
    p["w_fc1"] = jax.random.normal(ks[4], (feat, 120), jnp.float32) * math.sqrt(2.0 / (feat + 120))
    p["b_fc1"] = jnp.zeros((120,), jnp.float32)
    p["w_fc2"] = jax.random.normal(ks[5], (120, 84), jnp.float32) * math.sqrt(2.0 / (120 + 84))
    p["b_fc2"] = jnp.zeros((84,), jnp.float32)
    p["w_fc3"] = jax.random.normal(ks[6], (84, 10), jnp.float32) * math.sqrt(2.0 / (84 + 10))
    p["b_fc3"] = jnp.zeros((10,), jnp.float32)
    return p


if __name__ == "__main__":
    key = jax.random.PRNGKey(0)
    kx, kp = jax.random.split(key)

    N, C, H, W = 2, 1, 16, 16          # C must be 1; H, W divisible by 4, >= 12
    x = jax.random.normal(kx, (N, C, H, W), jnp.float32)
    params = init_params(kp, H, W)

    # default path: whole batch in one grid step (fully fused, single launch)
    fwd = jax.jit(lenet_forward)
    out = jax.block_until_ready(fwd(x, params))
    assert out.shape == (N, 10)
    assert bool(jnp.all(jnp.isfinite(out)))
    assert bool(jnp.allclose(jnp.sum(out, axis=-1), 1.0, atol=1e-5))

    # batch-blocked path: 1 image / grid step (the "parallel" axis that shards
    # across v7x's two TensorCores) -- must agree with the single-block path.
    fwd_blocked = jax.jit(functools.partial(lenet_forward, images_per_block=1))
    out_blocked = jax.block_until_ready(fwd_blocked(x, params))
    assert out_blocked.shape == (N, 10)
    assert bool(jnp.allclose(out, out_blocked, atol=1e-5, rtol=1e-5))

    print("KERNEL_OK")
</pallas_src>

<mosaic_0001>
module attributes {stable_mosaic.version = 11 : i64} {
  func.func @_lenet_kernel(%arg0: i32, %arg1: memref<128x25xbf16, #tpu.memory_space<vmem>>, %arg2: memref<25x8xbf16, #tpu.memory_space<vmem>>, %arg3: memref<1x8xf32, #tpu.memory_space<vmem>>, %arg4: memref<200x16xf32, #tpu.memory_space<vmem>>, %arg5: memref<1x16xf32, #tpu.memory_space<vmem>>, %arg6: memref<8x92xf32, #tpu.memory_space<vmem>>, %arg7: memref<64x120xf32, #tpu.memory_space<vmem>>, %arg8: memref<1x120xf32, #tpu.memory_space<vmem>>, %arg9: memref<120x84xf32, #tpu.memory_space<vmem>>, %arg10: memref<1x84xf32, #tpu.memory_space<vmem>>, %arg11: memref<84x10xf32, #tpu.memory_space<vmem>>, %arg12: memref<1x10xf32, #tpu.memory_space<vmem>>, %arg13: memref<2x1x10xf32, #tpu.memory_space<vmem>>) attributes {dimension_semantics = [#tpu.dimension_semantics<parallel>], iteration_bounds = array<i64: 1>, scalar_prefetch = 0 : i64, scratch_operands = 0 : i64, tpu.core_type = #tpu.core_type<tc>, window_params = [{transform_indices = @transform_0, window_bounds = array<i64: 128, 25>}, {pipeline_mode = #tpu.pipeline_mode<synchronous>, transform_indices = @transform_1, window_bounds = array<i64: 25, 8>}, {pipeline_mode = #tpu.pipeline_mode<synchronous>, transform_indices = @transform_2, window_bounds = array<i64: 1, 8>}, {pipeline_mode = #tpu.pipeline_mode<synchronous>, transform_indices = @transform_3, window_bounds = array<i64: 200, 16>}, {pipeline_mode = #tpu.pipeline_mode<synchronous>, transform_indices = @transform_4, window_bounds = array<i64: 1, 16>}, {pipeline_mode = #tpu.pipeline_mode<synchronous>, transform_indices = @transform_5, window_bounds = array<i64: 8, 92>}, {pipeline_mode = #tpu.pipeline_mode<synchronous>, transform_indices = @transform_6, window_bounds = array<i64: 64, 120>}, {pipeline_mode = #tpu.pipeline_mode<synchronous>, transform_indices = @transform_7, window_bounds = array<i64: 1, 120>}, {pipeline_mode = #tpu.pipeline_mode<synchronous>, transform_indices = @transform_8, window_bounds = array<i64: 120, 84>}, {pipeline_mode = #tpu.pipeline_mode<synchronous>, transform_indices = @transform_9, window_bounds = array<i64: 1, 84>}, {pipeline_mode = #tpu.pipeline_mode<synchronous>, transform_indices = @transform_10, window_bounds = array<i64: 84, 10>}, {pipeline_mode = #tpu.pipeline_mode<synchronous>, transform_indices = @transform_11, window_bounds = array<i64: 1, 10>}, {transform_indices = @transform_12, window_bounds = array<i64: 2, 1, 10>}]} {
    %c0 = arith.constant 0 : index
    %c0_0 = arith.constant 0 : index
    %0 = vector.load %arg1[%c0, %c0_0] : memref<128x25xbf16, #tpu.memory_space<vmem>>, vector<128x25xbf16>
    %c0_1 = arith.constant 0 : index
    %c0_2 = arith.constant 0 : index
    %1 = vector.load %arg2[%c0_1, %c0_2] : memref<25x8xbf16, #tpu.memory_space<vmem>>, vector<25x8xbf16>
    %cst = arith.constant dense<0.000000e+00> : vector<128x8xf32>
    %2 = tpu.matmul %0, %1, %cst {dimension_numbers = #tpu.dot_dimension_numbers<[1], [0], [0], [1], [0, 0, 1, 1], [], []>} : vector<128x25xbf16>, vector<25x8xbf16>, vector<128x8xf32> -> vector<128x8xf32>
    %c0_3 = arith.constant 0 : index
    %c0_4 = arith.constant 0 : index
    %3 = vector.load %arg3[%c0_3, %c0_4] : memref<1x8xf32, #tpu.memory_space<vmem>>, vector<1x8xf32>
    %4 = vector.broadcast %3 : vector<1x8xf32> to vector<128x8xf32>
    %5 = arith.addf %2, %4 : vector<128x8xf32>
    %cst_5 = arith.constant 0.000000e+00 : f32
    %6 = vector.broadcast %cst_5 : f32 to vector<92x16xf32>
    %7 = vector.extract_strided_slice %5 {offsets = [0, 0], sizes = [92, 8], strides = [1, 1]} : vector<128x8xf32> to vector<92x8xf32>
    %c0_6 = arith.constant 0 : index
    %c0_7 = arith.constant 0 : index
    %8 = vector.load %arg4[%c0_6, %c0_7] : memref<200x16xf32, #tpu.memory_space<vmem>>, vector<8x16xf32>
    %cst_8 = arith.constant dense<0.000000e+00> : vector<92x16xf32>
    %9 = tpu.matmul %7, %8, %cst_8 {dimension_numbers = #tpu.dot_dimension_numbers<[1], [0], [0], [1], [0, 0, 1, 1], [], []>} : vector<92x8xf32>, vector<8x16xf32>, vector<92x16xf32> -> vector<92x16xf32>
    %10 = arith.addf %6, %9 : vector<92x16xf32>
    %11 = vector.extract_strided_slice %5 {offsets = [1, 0], sizes = [92, 8], strides = [1, 1]} : vector<128x8xf32> to vector<92x8xf32>
    %c8 = arith.constant 8 : index
    %c0_9 = arith.constant 0 : index
    %12 = vector.load %arg4[%c8, %c0_9] : memref<200x16xf32, #tpu.memory_space<vmem>>, vector<8x16xf32>
    %cst_10 = arith.constant dense<0.000000e+00> : vector<92x16xf32>
    %13 = tpu.matmul %11, %12, %cst_10 {dimension_numbers = #tpu.dot_dimension_numbers<[1], [0], [0], [1], [0, 0, 1, 1], [], []>} : vector<92x8xf32>, vector<8x16xf32>, vector<92x16xf32> -> vector<92x16xf32>
    %14 = arith.addf %10, %13 : vector<92x16xf32>
    %15 = vector.extract_strided_slice %5 {offsets = [2, 0], sizes = [92, 8], strides = [1, 1]} : vector<128x8xf32> to vector<92x8xf32>
    %c16 = arith.constant 16 : index
    %c0_11 = arith.constant 0 : index
    %16 = vector.load %arg4[%c16, %c0_11] : memref<200x16xf32, #tpu.memory_space<vmem>>, vector<8x16xf32>
    %cst_12 = arith.constant dense<0.000000e+00> : vector<92x16xf32>
    %17 = tpu.matmul %15, %16, %cst_12 {dimension_numbers = #tpu.dot_dimension_numbers<[1], [0], [0], [1], [0, 0, 1, 1], [], []>} : vector<92x8xf32>, vector<8x16xf32>, vector<92x16xf32> -> vector<92x16xf32>
    %18 = arith.addf %14, %17 : vector<92x16xf32>
    %19 = vector.extract_strided_slice %5 {offsets = [3, 0], sizes = [92, 8], strides = [1, 1]} : vector<128x8xf32> to vector<92x8xf32>
    %c24 = arith.constant 24 : index
    %c0_13 = arith.constant 0 : index
    %20 = vector.load %arg4[%c24, %c0_13] : memref<200x16xf32, #tpu.memory_space<vmem>>, vector<8x16xf32>
    %cst_14 = arith.constant dense<0.000000e+00> : vector<92x16xf32>
    %21 = tpu.matmul %19, %20, %cst_14 {dimension_numbers = #tpu.dot_dimension_numbers<[1], [0], [0], [1], [0, 0, 1, 1], [], []>} : vector<92x8xf32>, vector<8x16xf32>, vector<92x16xf32> -> vector<92x16xf32>
    %22 = arith.addf %18, %21 : vector<92x16xf32>
    %23 = vector.extract_strided_slice %5 {offsets = [4, 0], sizes = [92, 8], strides = [1, 1]} : vector<128x8xf32> to vector<92x8xf32>
    %c32 = arith.constant 32 : index
    %c0_15 = arith.constant 0 : index
    %24 = vector.load %arg4[%c32, %c0_15] : memref<200x16xf32, #tpu.memory_space<vmem>>, vector<8x16xf32>
    %cst_16 = arith.constant dense<0.000000e+00> : vector<92x16xf32>
    %25 = tpu.matmul %23, %24, %cst_16 {dimension_numbers = #tpu.dot_dimension_numbers<[1], [0], [0], [1], [0, 0, 1, 1], [], []>} : vector<92x8xf32>, vector<8x16xf32>, vector<92x16xf32> -> vector<92x16xf32>
    %26 = arith.addf %22, %25 : vector<92x16xf32>
    %27 = vector.extract_strided_slice %5 {offsets = [8, 0], sizes = [92, 8], strides = [1, 1]} : vector<128x8xf32> to vector<92x8xf32>
    %c40 = arith.constant 40 : index
    %c0_17 = arith.constant 0 : index
    %28 = vector.load %arg4[%c40, %c0_17] : memref<200x16xf32, #tpu.memory_space<vmem>>, vector<8x16xf32>
    %cst_18 = arith.constant dense<0.000000e+00> : vector<92x16xf32>
    %29 = tpu.matmul %27, %28, %cst_18 {dimension_numbers = #tpu.dot_dimension_numbers<[1], [0], [0], [1], [0, 0, 1, 1], [], []>} : vector<92x8xf32>, vector<8x16xf32>, vector<92x16xf32> -> vector<92x16xf32>
    %30 = arith.addf %26, %29 : vector<92x16xf32>
    %31 = vector.extract_strided_slice %5 {offsets = [9, 0], sizes = [92, 8], strides = [1, 1]} : vector<128x8xf32> to vector<92x8xf32>
    %c48 = arith.constant 48 : index
    %c0_19 = arith.constant 0 : index
    %32 = vector.load %arg4[%c48, %c0_19] : memref<200x16xf32, #tpu.memory_space<vmem>>, vector<8x16xf32>
    %cst_20 = arith.constant dense<0.000000e+00> : vector<92x16xf32>
    %33 = tpu.matmul %31, %32, %cst_20 {dimension_numbers = #tpu.dot_dimension_numbers<[1], [0], [0], [1], [0, 0, 1, 1], [], []>} : vector<92x8xf32>, vector<8x16xf32>, vector<92x16xf32> -> vector<92x16xf32>
    %34 = arith.addf %30, %33 : vector<92x16xf32>
    %35 = vector.extract_strided_slice %5 {offsets = [10, 0], sizes = [92, 8], strides = [1, 1]} : vector<128x8xf32> to vector<92x8xf32>
    %c56 = arith.constant 56 : index
    %c0_21 = arith.constant 0 : index
    %36 = vector.load %arg4[%c56, %c0_21] : memref<200x16xf32, #tpu.memory_space<vmem>>, vector<8x16xf32>
    %cst_22 = arith.constant dense<0.000000e+00> : vector<92x16xf32>
    %37 = tpu.matmul %35, %36, %cst_22 {dimension_numbers = #tpu.dot_dimension_numbers<[1], [0], [0], [1], [0, 0, 1, 1], [], []>} : vector<92x8xf32>, vector<8x16xf32>, vector<92x16xf32> -> vector<92x16xf32>
    %38 = arith.addf %34, %37 : vector<92x16xf32>
    %39 = vector.extract_strided_slice %5 {offsets = [11, 0], sizes = [92, 8], strides = [1, 1]} : vector<128x8xf32> to vector<92x8xf32>
    %c64 = arith.constant 64 : index
    %c0_23 = arith.constant 0 : index
    %40 = vector.load %arg4[%c64, %c0_23] : memref<200x16xf32, #tpu.memory_space<vmem>>, vector<8x16xf32>
    %cst_24 = arith.constant dense<0.000000e+00> : vector<92x16xf32>
    %41 = tpu.matmul %39, %40, %cst_24 {dimension_numbers = #tpu.dot_dimension_numbers<[1], [0], [0], [1], [0, 0, 1, 1], [], []>} : vector<92x8xf32>, vector<8x16xf32>, vector<92x16xf32> -> vector<92x16xf32>
    %42 = arith.addf %38, %41 : vector<92x16xf32>
    %43 = vector.extract_strided_slice %5 {offsets = [12, 0], sizes = [92, 8], strides = [1, 1]} : vector<128x8xf32> to vector<92x8xf32>
    %c72 = arith.constant 72 : index
    %c0_25 = arith.constant 0 : index
    %44 = vector.load %arg4[%c72, %c0_25] : memref<200x16xf32, #tpu.memory_space<vmem>>, vector<8x16xf32>
    %cst_26 = arith.constant dense<0.000000e+00> : vector<92x16xf32>
    %45 = tpu.matmul %43, %44, %cst_26 {dimension_numbers = #tpu.dot_dimension_numbers<[1], [0], [0], [1], [0, 0, 1, 1], [], []>} : vector<92x8xf32>, vector<8x16xf32>, vector<92x16xf32> -> vector<92x16xf32>
    %46 = arith.addf %42, %45 : vector<92x16xf32>
    %47 = vector.extract_strided_slice %5 {offsets = [16, 0], sizes = [92, 8], strides = [1, 1]} : vector<128x8xf32> to vector<92x8xf32>
    %c80 = arith.constant 80 : index
    %c0_27 = arith.constant 0 : index
    %48 = vector.load %arg4[%c80, %c0_27] : memref<200x16xf32, #tpu.memory_space<vmem>>, vector<8x16xf32>
    %cst_28 = arith.constant dense<0.000000e+00> : vector<92x16xf32>
    %49 = tpu.matmul %47, %48, %cst_28 {dimension_numbers = #tpu.dot_dimension_numbers<[1], [0], [0], [1], [0, 0, 1, 1], [], []>} : vector<92x8xf32>, vector<8x16xf32>, vector<92x16xf32> -> vector<92x16xf32>
    %50 = arith.addf %46, %49 : vector<92x16xf32>
    %51 = vector.extract_strided_slice %5 {offsets = [17, 0], sizes = [92, 8], strides = [1, 1]} : vector<128x8xf32> to vector<92x8xf32>
    %c88 = arith.constant 88 : index
    %c0_29 = arith.constant 0 : index
    %52 = vector.load %arg4[%c88, %c0_29] : memref<200x16xf32, #tpu.memory_space<vmem>>, vector<8x16xf32>
    %cst_30 = arith.constant dense<0.000000e+00> : vector<92x16xf32>
    %53 = tpu.matmul %51, %52, %cst_30 {dimension_numbers = #tpu.dot_dimension_numbers<[1], [0], [0], [1], [0, 0, 1, 1], [], []>} : vector<92x8xf32>, vector<8x16xf32>, vector<92x16xf32> -> vector<92x16xf32>
    %54 = arith.addf %50, %53 : vector<92x16xf32>
    %55 = vector.extract_strided_slice %5 {offsets = [18, 0], sizes = [92, 8], strides = [1, 1]} : vector<128x8xf32> to vector<92x8xf32>
    %c96 = arith.constant 96 : index
    %c0_31 = arith.constant 0 : index
    %56 = vector.load %arg4[%c96, %c0_31] : memref<200x16xf32, #tpu.memory_space<vmem>>, vector<8x16xf32>
    %cst_32 = arith.constant dense<0.000000e+00> : vector<92x16xf32>
    %57 = tpu.matmul %55, %56, %cst_32 {dimension_numbers = #tpu.dot_dimension_numbers<[1], [0], [0], [1], [0, 0, 1, 1], [], []>} : vector<92x8xf32>, vector<8x16xf32>, vector<92x16xf32> -> vector<92x16xf32>
    %58 = arith.addf %54, %57 : vector<92x16xf32>
    %59 = vector.extract_strided_slice %5 {offsets = [19, 0], sizes = [92, 8], strides = [1, 1]} : vector<128x8xf32> to vector<92x8xf32>
    %c104 = arith.constant 104 : index
    %c0_33 = arith.constant 0 : index
    %60 = vector.load %arg4[%c104, %c0_33] : memref<200x16xf32, #tpu.memory_space<vmem>>, vector<8x16xf32>
    %cst_34 = arith.constant dense<0.000000e+00> : vector<92x16xf32>
    %61 = tpu.matmul %59, %60, %cst_34 {dimension_numbers = #tpu.dot_dimension_numbers<[1], [0], [0], [1], [0, 0, 1, 1], [], []>} : vector<92x8xf32>, vector<8x16xf32>, vector<92x16xf32> -> vector<92x16xf32>
    %62 = arith.addf %58, %61 : vector<92x16xf32>
    %63 = vector.extract_strided_slice %5 {offsets = [20, 0], sizes = [92, 8], strides = [1, 1]} : vector<128x8xf32> to vector<92x8xf32>
    %c112 = arith.constant 112 : index
    %c0_35 = arith.constant 0 : index
    %64 = vector.load %arg4[%c112, %c0_35] : memref<200x16xf32, #tpu.memory_space<vmem>>, vector<8x16xf32>
    %cst_36 = arith.constant dense<0.000000e+00> : vector<92x16xf32>
    %65 = tpu.matmul %63, %64, %cst_36 {dimension_numbers = #tpu.dot_dimension_numbers<[1], [0], [0], [1], [0, 0, 1, 1], [], []>} : vector<92x8xf32>, vector<8x16xf32>, vector<92x16xf32> -> vector<92x16xf32>
    %66 = arith.addf %62, %65 : vector<92x16xf32>
    %67 = vector.extract_strided_slice %5 {offsets = [24, 0], sizes = [92, 8], strides = [1, 1]} : vector<128x8xf32> to vector<92x8xf32>
    %c120 = arith.constant 120 : index
    %c0_37 = arith.constant 0 : index
    %68 = vector.load %arg4[%c120, %c0_37] : memref<200x16xf32, #tpu.memory_space<vmem>>, vector<8x16xf32>
    %cst_38 = arith.constant dense<0.000000e+00> : vector<92x16xf32>
    %69 = tpu.matmul %67, %68, %cst_38 {dimension_numbers = #tpu.dot_dimension_numbers<[1], [0], [0], [1], [0, 0, 1, 1], [], []>} : vector<92x8xf32>, vector<8x16xf32>, vector<92x16xf32> -> vector<92x16xf32>
    %70 = arith.addf %66, %69 : vector<92x16xf32>
    %71 = vector.extract_strided_slice %5 {offsets = [25, 0], sizes = [92, 8], strides = [1, 1]} : vector<128x8xf32> to vector<92x8xf32>
    %c128 = arith.constant 128 : index
    %c0_39 = arith.constant 0 : index
    %72 = vector.load %arg4[%c128, %c0_39] : memref<200x16xf32, #tpu.memory_space<vmem>>, vector<8x16xf32>
    %cst_40 = arith.constant dense<0.000000e+00> : vector<92x16xf32>
    %73 = tpu.matmul %71, %72, %cst_40 {dimension_numbers = #tpu.dot_dimension_numbers<[1], [0], [0], [1], [0, 0, 1, 1], [], []>} : vector<92x8xf32>, vector<8x16xf32>, vector<92x16xf32> -> vector<92x16xf32>
    %74 = arith.addf %70, %73 : vector<92x16xf32>
    %75 = vector.extract_strided_slice %5 {offsets = [26, 0], sizes = [92, 8], strides = [1, 1]} : vector<128x8xf32> to vector<92x8xf32>
    %c136 = arith.constant 136 : index
    %c0_41 = arith.constant 0 : index
    %76 = vector.load %arg4[%c136, %c0_41] : memref<200x16xf32, #tpu.memory_space<vmem>>, vector<8x16xf32>
    %cst_42 = arith.constant dense<0.000000e+00> : vector<92x16xf32>
    %77 = tpu.matmul %75, %76, %cst_42 {dimension_numbers = #tpu.dot_dimension_numbers<[1], [0], [0], [1], [0, 0, 1, 1], [], []>} : vector<92x8xf32>, vector<8x16xf32>, vector<92x16xf32> -> vector<92x16xf32>
    %78 = arith.addf %74, %77 : vector<92x16xf32>
    %79 = vector.extract_strided_slice %5 {offsets = [27, 0], sizes = [92, 8], strides = [1, 1]} : vector<128x8xf32> to vector<92x8xf32>
    %c144 = arith.constant 144 : index
    %c0_43 = arith.constant 0 : index
    %80 = vector.load %arg4[%c144, %c0_43] : memref<200x16xf32, #tpu.memory_space<vmem>>, vector<8x16xf32>
    %cst_44 = arith.constant dense<0.000000e+00> : vector<92x16xf32>
    %81 = tpu.matmul %79, %80, %cst_44 {dimension_numbers = #tpu.dot_dimension_numbers<[1], [0], [0], [1], [0, 0, 1, 1], [], []>} : vector<92x8xf32>, vector<8x16xf32>, vector<92x16xf32> -> vector<92x16xf32>
    %82 = arith.addf %78, %81 : vector<92x16xf32>
    %83 = vector.extract_strided_slice %5 {offsets = [28, 0], sizes = [92, 8], strides = [1, 1]} : vector<128x8xf32> to vector<92x8xf32>
    %c152 = arith.constant 152 : index
    %c0_45 = arith.constant 0 : index
    %84 = vector.load %arg4[%c152, %c0_45] : memref<200x16xf32, #tpu.memory_space<vmem>>, vector<8x16xf32>
    %cst_46 = arith.constant dense<0.000000e+00> : vector<92x16xf32>
    %85 = tpu.matmul %83, %84, %cst_46 {dimension_numbers = #tpu.dot_dimension_numbers<[1], [0], [0], [1], [0, 0, 1, 1], [], []>} : vector<92x8xf32>, vector<8x16xf32>, vector<92x16xf32> -> vector<92x16xf32>
    %86 = arith.addf %82, %85 : vector<92x16xf32>
    %87 = vector.extract_strided_slice %5 {offsets = [32, 0], sizes = [92, 8], strides = [1, 1]} : vector<128x8xf32> to vector<92x8xf32>
    %c160 = arith.constant 160 : index
    %c0_47 = arith.constant 0 : index
    %88 = vector.load %arg4[%c160, %c0_47] : memref<200x16xf32, #tpu.memory_space<vmem>>, vector<8x16xf32>
    %cst_48 = arith.constant dense<0.000000e+00> : vector<92x16xf32>
    %89 = tpu.matmul %87, %88, %cst_48 {dimension_numbers = #tpu.dot_dimension_numbers<[1], [0], [0], [1], [0, 0, 1, 1], [], []>} : vector<92x8xf32>, vector<8x16xf32>, vector<92x16xf32> -> vector<92x16xf32>
    %90 = arith.addf %86, %89 : vector<92x16xf32>
    %91 = vector.extract_strided_slice %5 {offsets = [33, 0], sizes = [92, 8], strides = [1, 1]} : vector<128x8xf32> to vector<92x8xf32>
    %c168 = arith.constant 168 : index
    %c0_49 = arith.constant 0 : index
    %92 = vector.load %arg4[%c168, %c0_49] : memref<200x16xf32, #tpu.memory_space<vmem>>, vector<8x16xf32>
    %cst_50 = arith.constant dense<0.000000e+00> : vector<92x16xf32>
    %93 = tpu.matmul %91, %92, %cst_50 {dimension_numbers = #tpu.dot_dimension_numbers<[1], [0], [0], [1], [0, 0, 1, 1], [], []>} : vector<92x8xf32>, vector<8x16xf32>, vector<92x16xf32> -> vector<92x16xf32>
    %94 = arith.addf %90, %93 : vector<92x16xf32>
    %95 = vector.extract_strided_slice %5 {offsets = [34, 0], sizes = [92, 8], strides = [1, 1]} : vector<128x8xf32> to vector<92x8xf32>
    %c176 = arith.constant 176 : index
    %c0_51 = arith.constant 0 : index
    %96 = vector.load %arg4[%c176, %c0_51] : memref<200x16xf32, #tpu.memory_space<vmem>>, vector<8x16xf32>
    %cst_52 = arith.constant dense<0.000000e+00> : vector<92x16xf32>
    %97 = tpu.matmul %95, %96, %cst_52 {dimension_numbers = #tpu.dot_dimension_numbers<[1], [0], [0], [1], [0, 0, 1, 1], [], []>} : vector<92x8xf32>, vector<8x16xf32>, vector<92x16xf32> -> vector<92x16xf32>
    %98 = arith.addf %94, %97 : vector<92x16xf32>
    %99 = vector.extract_strided_slice %5 {offsets = [35, 0], sizes = [92, 8], strides = [1, 1]} : vector<128x8xf32> to vector<92x8xf32>
    %c184 = arith.constant 184 : index
    %c0_53 = arith.constant 0 : index
    %100 = vector.load %arg4[%c184, %c0_53] : memref<200x16xf32, #tpu.memory_space<vmem>>, vector<8x16xf32>
    %cst_54 = arith.constant dense<0.000000e+00> : vector<92x16xf32>
    %101 = tpu.matmul %99, %100, %cst_54 {dimension_numbers = #tpu.dot_dimension_numbers<[1], [0], [0], [1], [0, 0, 1, 1], [], []>} : vector<92x8xf32>, vector<8x16xf32>, vector<92x16xf32> -> vector<92x16xf32>
    %102 = arith.addf %98, %101 : vector<92x16xf32>
    %103 = vector.extract_strided_slice %5 {offsets = [36, 0], sizes = [92, 8], strides = [1, 1]} : vector<128x8xf32> to vector<92x8xf32>
    %c192 = arith.constant 192 : index
    %c0_55 = arith.constant 0 : index
    %104 = vector.load %arg4[%c192, %c0_55] : memref<200x16xf32, #tpu.memory_space<vmem>>, vector<8x16xf32>
    %cst_56 = arith.constant dense<0.000000e+00> : vector<92x16xf32>
    %105 = tpu.matmul %103, %104, %cst_56 {dimension_numbers = #tpu.dot_dimension_numbers<[1], [0], [0], [1], [0, 0, 1, 1], [], []>} : vector<92x8xf32>, vector<8x16xf32>, vector<92x16xf32> -> vector<92x16xf32>
    %106 = arith.addf %102, %105 : vector<92x16xf32>
    %c0_57 = arith.constant 0 : index
    %c0_58 = arith.constant 0 : index
    %107 = vector.load %arg5[%c0_57, %c0_58] : memref<1x16xf32, #tpu.memory_space<vmem>>, vector<1x16xf32>
    %108 = vector.broadcast %107 : vector<1x16xf32> to vector<92x16xf32>
    %109 = arith.addf %106, %108 : vector<92x16xf32>
    %c0_59 = arith.constant 0 : index
    %c0_60 = arith.constant 0 : index
    %110 = vector.load %arg6[%c0_59, %c0_60] : memref<8x92xf32, #tpu.memory_space<vmem>>, vector<8x92xf32>
    %cst_61 = arith.constant dense<0.000000e+00> : vector<8x16xf32>
    %111 = tpu.matmul %110, %109, %cst_61 {dimension_numbers = #tpu.dot_dimension_numbers<[1], [0], [0], [1], [0, 0, 1, 1], [], []>} : vector<8x92xf32>, vector<92x16xf32>, vector<8x16xf32> -> vector<8x16xf32>
    %cst_62 = arith.constant 0.000000e+00 : f32
    %112 = vector.broadcast %cst_62 : f32 to vector<2x120xf32>
    %c0_63 = arith.constant 0 : index
    %c0_64 = arith.constant 0 : index
    %113 = vector.load %arg8[%c0_63, %c0_64] : memref<1x120xf32, #tpu.memory_space<vmem>>, vector<1x120xf32>
    %114 = vector.broadcast %113 : vector<1x120xf32> to vector<2x120xf32>
    %115 = arith.addf %112, %114 : vector<2x120xf32>
    %116 = vector.extract_strided_slice %111 {offsets = [0, 0], sizes = [2, 16], strides = [1, 1]} : vector<8x16xf32> to vector<2x16xf32>
    %c0_65 = arith.constant 0 : index
    %c0_66 = arith.constant 0 : index
    %117 = vector.load %arg7[%c0_65, %c0_66] : memref<64x120xf32, #tpu.memory_space<vmem>>, vector<16x120xf32>
    %cst_67 = arith.constant dense<0.000000e+00> : vector<2x120xf32>
    %118 = tpu.matmul %116, %117, %cst_67 {dimension_numbers = #tpu.dot_dimension_numbers<[1], [0], [0], [1], [0, 0, 1, 1], [], []>} : vector<2x16xf32>, vector<16x120xf32>, vector<2x120xf32> -> vector<2x120xf32>
    %119 = arith.addf %115, %118 : vector<2x120xf32>
    %120 = vector.extract_strided_slice %111 {offsets = [2, 0], sizes = [2, 16], strides = [1, 1]} : vector<8x16xf32> to vector<2x16xf32>
    %c16_68 = arith.constant 16 : index
    %c0_69 = arith.constant 0 : index
    %121 = vector.load %arg7[%c16_68, %c0_69] : memref<64x120xf32, #tpu.memory_space<vmem>>, vector<16x120xf32>
    %cst_70 = arith.constant dense<0.000000e+00> : vector<2x120xf32>
    %122 = tpu.matmul %120, %121, %cst_70 {dimension_numbers = #tpu.dot_dimension_numbers<[1], [0], [0], [1], [0, 0, 1, 1], [], []>} : vector<2x16xf32>, vector<16x120xf32>, vector<2x120xf32> -> vector<2x120xf32>
    %123 = arith.addf %119, %122 : vector<2x120xf32>
    %124 = vector.extract_strided_slice %111 {offsets = [4, 0], sizes = [2, 16], strides = [1, 1]} : vector<8x16xf32> to vector<2x16xf32>
    %c32_71 = arith.constant 32 : index
    %c0_72 = arith.constant 0 : index
    %125 = vector.load %arg7[%c32_71, %c0_72] : memref<64x120xf32, #tpu.memory_space<vmem>>, vector<16x120xf32>
    %cst_73 = arith.constant dense<0.000000e+00> : vector<2x120xf32>
    %126 = tpu.matmul %124, %125, %cst_73 {dimension_numbers = #tpu.dot_dimension_numbers<[1], [0], [0], [1], [0, 0, 1, 1], [], []>} : vector<2x16xf32>, vector<16x120xf32>, vector<2x120xf32> -> vector<2x120xf32>
    %127 = arith.addf %123, %126 : vector<2x120xf32>
    %128 = vector.extract_strided_slice %111 {offsets = [6, 0], sizes = [2, 16], strides = [1, 1]} : vector<8x16xf32> to vector<2x16xf32>
    %c48_74 = arith.constant 48 : index
    %c0_75 = arith.constant 0 : index
    %129 = vector.load %arg7[%c48_74, %c0_75] : memref<64x120xf32, #tpu.memory_space<vmem>>, vector<16x120xf32>
    %cst_76 = arith.constant dense<0.000000e+00> : vector<2x120xf32>
    %130 = tpu.matmul %128, %129, %cst_76 {dimension_numbers = #tpu.dot_dimension_numbers<[1], [0], [0], [1], [0, 0, 1, 1], [], []>} : vector<2x16xf32>, vector<16x120xf32>, vector<2x120xf32> -> vector<2x120xf32>
    %131 = arith.addf %127, %130 : vector<2x120xf32>
    %cst_77 = arith.constant 0.000000e+00 : f32
    %132 = vector.broadcast %cst_77 : f32 to vector<2x120xf32>
    %133 = arith.subf %132, %131 : vector<2x120xf32>
    %134 = math.exp %133 : vector<2x120xf32>
    %cst_78 = arith.constant 1.000000e+00 : f32
    %135 = vector.broadcast %cst_78 : f32 to vector<2x120xf32>
    %136 = arith.addf %135, %134 : vector<2x120xf32>
    %137 = tpu.reciprocal %136 {approx = true} : vector<2x120xf32> -> vector<2x120xf32>
    %c0_79 = arith.constant 0 : index
    %c0_80 = arith.constant 0 : index
    %138 = vector.load %arg9[%c0_79, %c0_80] : memref<120x84xf32, #tpu.memory_space<vmem>>, vector<120x84xf32>
    %cst_81 = arith.constant dense<0.000000e+00> : vector<2x84xf32>
    %139 = tpu.matmul %137, %138, %cst_81 {dimension_numbers = #tpu.dot_dimension_numbers<[1], [0], [0], [1], [0, 0, 1, 1], [], []>} : vector<2x120xf32>, vector<120x84xf32>, vector<2x84xf32> -> vector<2x84xf32>
    %c0_82 = arith.constant 0 : index
    %c0_83 = arith.constant 0 : index
    %140 = vector.load %arg10[%c0_82, %c0_83] : memref<1x84xf32, #tpu.memory_space<vmem>>, vector<1x84xf32>
    %141 = vector.broadcast %140 : vector<1x84xf32> to vector<2x84xf32>
    %142 = arith.addf %139, %141 : vector<2x84xf32>
    %cst_84 = arith.constant 0.000000e+00 : f32
    %143 = vector.broadcast %cst_84 : f32 to vector<2x84xf32>
    %144 = arith.subf %143, %142 : vector<2x84xf32>
    %145 = math.exp %144 : vector<2x84xf32>
    %cst_85 = arith.constant 1.000000e+00 : f32
    %146 = vector.broadcast %cst_85 : f32 to vector<2x84xf32>
    %147 = arith.addf %146, %145 : vector<2x84xf32>
    %148 = tpu.reciprocal %147 {approx = true} : vector<2x84xf32> -> vector<2x84xf32>
    %c0_86 = arith.constant 0 : index
    %c0_87 = arith.constant 0 : index
    %149 = vector.load %arg11[%c0_86, %c0_87] : memref<84x10xf32, #tpu.memory_space<vmem>>, vector<84x10xf32>
    %cst_88 = arith.constant dense<0.000000e+00> : vector<2x10xf32>
    %150 = tpu.matmul %148, %149, %cst_88 {dimension_numbers = #tpu.dot_dimension_numbers<[1], [0], [0], [1], [0, 0, 1, 1], [], []>} : vector<2x84xf32>, vector<84x10xf32>, vector<2x10xf32> -> vector<2x10xf32>
    %c0_89 = arith.constant 0 : index
    %c0_90 = arith.constant 0 : index
    %151 = vector.load %arg12[%c0_89, %c0_90] : memref<1x10xf32, #tpu.memory_space<vmem>>, vector<1x10xf32>
    %152 = vector.broadcast %151 : vector<1x10xf32> to vector<2x10xf32>
    %153 = arith.addf %150, %152 : vector<2x10xf32>
    %cst_91 = arith.constant 0.000000e+00 : f32
    %154 = vector.broadcast %cst_91 : f32 to vector<2x10xf32>
    %155 = arith.subf %154, %153 : vector<2x10xf32>
    %156 = math.exp %155 : vector<2x10xf32>
    %cst_92 = arith.constant 1.000000e+00 : f32
    %157 = vector.broadcast %cst_92 : f32 to vector<2x10xf32>
    %158 = arith.addf %157, %156 : vector<2x10xf32>
    %159 = tpu.reciprocal %158 {approx = true} : vector<2x10xf32> -> vector<2x10xf32>
    %cst_93 = arith.constant dense<0xFF800000> : vector<2xf32>
    %160 = vector.multi_reduction <maximumf>, %159, %cst_93 [1] : vector<2x10xf32> to vector<2xf32>
    %161 = vector.shape_cast %160 : vector<2xf32> to vector<2x1xf32>
    %162 = vector.broadcast %161 : vector<2x1xf32> to vector<2x10xf32>
    %163 = arith.subf %159, %162 : vector<2x10xf32>
    %164 = math.exp %163 : vector<2x10xf32>
    %cst_94 = arith.constant dense<0.000000e+00> : vector<2xf32>
    %165 = vector.multi_reduction <add>, %164, %cst_94 [1] : vector<2x10xf32> to vector<2xf32>
    %166 = vector.shape_cast %165 : vector<2xf32> to vector<2x1xf32>
    %167 = vector.broadcast %166 : vector<2x1xf32> to vector<2x10xf32>
    %168 = arith.divf %164, %167 : vector<2x10xf32>
    %169 = vector.extract_strided_slice %168 {offsets = [0, 0], sizes = [1, 10], strides = [1, 1]} : vector<2x10xf32> to vector<1x10xf32>
    %c0_95 = arith.constant 0 : index
    %c0_96 = arith.constant 0 : index
    %c0_97 = arith.constant 0 : index
    %170 = vector.load %arg13[%c0_95, %c0_96, %c0_97] : memref<2x1x10xf32, #tpu.memory_space<vmem>>, vector<1x1x10xf32>
    %171 = vector.shape_cast %170 : vector<1x1x10xf32> to vector<1x10xf32>
    %172 = vector.shape_cast %169 : vector<1x10xf32> to vector<1x1x10xf32>
    tpu.vector_store %arg13[%c0_95, %c0_96, %c0_97], %172 {strides = array<i32>} : memref<2x1x10xf32, #tpu.memory_space<vmem>>, vector<1x1x10xf32>,
    %173 = vector.extract_strided_slice %168 {offsets = [1, 0], sizes = [1, 10], strides = [1, 1]} : vector<2x10xf32> to vector<1x10xf32>
    %c1 = arith.constant 1 : index
    %c0_98 = arith.constant 0 : index
    %c0_99 = arith.constant 0 : index
    %174 = vector.load %arg13[%c1, %c0_98, %c0_99] : memref<2x1x10xf32, #tpu.memory_space<vmem>>, vector<1x1x10xf32>
    %175 = vector.shape_cast %174 : vector<1x1x10xf32> to vector<1x10xf32>
    %176 = vector.shape_cast %173 : vector<1x10xf32> to vector<1x1x10xf32>
    tpu.vector_store %arg13[%c1, %c0_98, %c0_99], %176 {strides = array<i32>} : memref<2x1x10xf32, #tpu.memory_space<vmem>>, vector<1x1x10xf32>,
    return
  }
  func.func @transform_0(%arg0: i32) -> (i32, i32) {
    %c0_i32 = arith.constant 0 : i32
    %c0_i32_0 = arith.constant 0 : i32
    return %arg0, %c0_i32 : i32, i32
  }
  func.func @transform_1(%arg0: i32) -> (i32, i32) {
    %c0_i32 = arith.constant 0 : i32
    %c0_i32_0 = arith.constant 0 : i32
    %c0_i32_1 = arith.constant 0 : i32
    return %c0_i32, %c0_i32_0 : i32, i32
  }
  func.func @transform_2(%arg0: i32) -> (i32, i32) {
    %c0_i32 = arith.constant 0 : i32
    %c0_i32_0 = arith.constant 0 : i32
    %c0_i32_1 = arith.constant 0 : i32
    return %c0_i32, %c0_i32_0 : i32, i32
  }
  func.func @transform_3(%arg0: i32) -> (i32, i32) {
    %c0_i32 = arith.constant 0 : i32
    %c0_i32_0 = arith.constant 0 : i32
    %c0_i32_1 = arith.constant 0 : i32
    return %c0_i32, %c0_i32_0 : i32, i32
  }
  func.func @transform_4(%arg0: i32) -> (i32, i32) {
    %c0_i32 = arith.constant 0 : i32
    %c0_i32_0 = arith.constant 0 : i32
    %c0_i32_1 = arith.constant 0 : i32
    return %c0_i32, %c0_i32_0 : i32, i32
  }
  func.func @transform_5(%arg0: i32) -> (i32, i32) {
    %c0_i32 = arith.constant 0 : i32
    %c0_i32_0 = arith.constant 0 : i32
    %c0_i32_1 = arith.constant 0 : i32
    return %c0_i32, %c0_i32_0 : i32, i32
  }
  func.func @transform_6(%arg0: i32) -> (i32, i32) {
    %c0_i32 = arith.constant 0 : i32
    %c0_i32_0 = arith.constant 0 : i32
    %c0_i32_1 = arith.constant 0 : i32
    return %c0_i32, %c0_i32_0 : i32, i32
  }
  func.func @transform_7(%arg0: i32) -> (i32, i32) {
    %c0_i32 = arith.constant 0 : i32
    %c0_i32_0 = arith.constant 0 : i32
    %c0_i32_1 = arith.constant 0 : i32
    return %c0_i32, %c0_i32_0 : i32, i32
  }
  func.func @transform_8(%arg0: i32) -> (i32, i32) {
    %c0_i32 = arith.constant 0 : i32
    %c0_i32_0 = arith.constant 0 : i32
    %c0_i32_1 = arith.constant 0 : i32
    return %c0_i32, %c0_i32_0 : i32, i32
  }
  func.func @transform_9(%arg0: i32) -> (i32, i32) {
    %c0_i32 = arith.constant 0 : i32
    %c0_i32_0 = arith.constant 0 : i32
    %c0_i32_1 = arith.constant 0 : i32
    return %c0_i32, %c0_i32_0 : i32, i32
  }
  func.func @transform_10(%arg0: i32) -> (i32, i32) {
    %c0_i32 = arith.constant 0 : i32
    %c0_i32_0 = arith.constant 0 : i32
    %c0_i32_1 = arith.constant 0 : i32
    return %c0_i32, %c0_i32_0 : i32, i32
  }
  func.func @transform_11(%arg0: i32) -> (i32, i32) {
    %c0_i32 = arith.constant 0 : i32
    %c0_i32_0 = arith.constant 0 : i32
    %c0_i32_1 = arith.constant 0 : i32
    return %c0_i32, %c0_i32_0 : i32, i32
  }
  func.func @transform_12(%arg0: i32) -> (i32, i32, i32) {
    %c0_i32 = arith.constant 0 : i32
    %c0_i32_0 = arith.constant 0 : i32
    %c0_i32_1 = arith.constant 0 : i32
    return %arg0, %c0_i32, %c0_i32_0 : i32, i32, i32
  }
}

</mosaic_0001>

<llo_original>
// kernel: lenet_forward.1
$region0: #{lenet_forward.1}
  #allocation0 [shape = 'u32[]', space=smem, size = 0x4, offset = 0x4, fixed_abs, tag = 'smem constant byte address 0x4 - core index']
  #allocation1 [shape = 'u32[144,128]{1,0:T(1,128)}', space=vmem, size = 0x12000, scoped, tag = 'internal scratch']
  %s0 = inlined_call_operand.vmem [shape: bf16[128,25], index: 0, kind: input, shape index: {}]
  %s1 = inlined_call_operand.vmem [shape: bf16[25,8], index: 1, kind: input, shape index: {}]
  %s2 = inlined_call_operand.vmem [shape: f32[1,8], index: 2, kind: input, shape index: {}]
  %s3 = inlined_call_operand.vmem [shape: f32[200,16], index: 3, kind: input, shape index: {}]
  %s4 = inlined_call_operand.vmem [shape: f32[1,16], index: 4, kind: input, shape index: {}]
  %s5 = inlined_call_operand.vmem [shape: f32[8,92], index: 5, kind: input, shape index: {}]
  %s6 = inlined_call_operand.vmem [shape: f32[64,120], index: 6, kind: input, shape index: {}]
  %s7 = inlined_call_operand.vmem [shape: f32[1,120], index: 7, kind: input, shape index: {}]
  %s8 = inlined_call_operand.vmem [shape: f32[120,84], index: 8, kind: input, shape index: {}]
  %s9 = inlined_call_operand.vmem [shape: f32[1,84], index: 9, kind: input, shape index: {}]
  %s10 = inlined_call_operand.vmem [shape: f32[84,10], index: 10, kind: input, shape index: {}]
  %s11 = inlined_call_operand.vmem [shape: f32[1,10], index: 11, kind: input, shape index: {}]
  %s12 = inlined_call_operand.hbm [shape: f32[2,1,10], index: 12, kind: output, shape index: {}]
  %s13 = sld [smem:[#allocation0]]
  $region58: #{lenet_forward.1} parent=0
    _
  %s15 = ssub.s32 1, %s13
  %s16 = scalar_select 0, %s15, %s13
  $region1: #{lenet_forward.1} parent=0
    #allocation2 [shape = 'u8[1024]{0}', space=vmem, size = 0x400, scoped, tag = 'output window, operand 0, single buffered']
    #allocation3 [shape = 's32[1]{0}', space=sflag, size = 0x4, scoped, tag = 'scoped memory for lenet_forward.1']
    %17 = vsyncpa [#allocation3], 0
    // Predicated region
    $region2: #{lenet_forward.1} parent=1 // pred_check
      _
    $region3: #{lenet_forward.1} parent=1 // pred_check_branch
      %19 = sbr.rel (0) target = $region5
    $region4: #{lenet_forward.1} parent=1 // pred_region
      _
    $region5: #{lenet_forward.1} parent=1 // pred_fallthru
      _
    // Predicated region
    $region6: #{lenet_forward.1} parent=1 // pred_check
      _
    $region7: #{lenet_forward.1} parent=1 // pred_check_branch
      %21 = sbr.rel (0) target = $region9
    $region8: #{lenet_forward.1} parent=1 // pred_region
      _
    $region9: #{lenet_forward.1} parent=1 // pred_fallthru
      _
    // Predicated region
    $region10: #{lenet_forward.1} parent=1 // pred_check
      _
    $region11: #{lenet_forward.1} parent=1 // pred_check_branch
      %23 = sbr.rel (0) target = $region13
    $region12: #{lenet_forward.1} parent=1 // pred_region
      _
    $region13: #{lenet_forward.1} parent=1 // pred_fallthru
      _
    // Predicated region
    $region14: #{lenet_forward.1} parent=1 // pred_check
      _
    $region15: #{lenet_forward.1} parent=1 // pred_check_branch
      %25 = sbr.rel (0) target = $region17
    $region16: #{lenet_forward.1} parent=1 // pred_region
      _
    $region17: #{lenet_forward.1} parent=1 // pred_fallthru
      _
    // Predicated region
    $region18: #{lenet_forward.1} parent=1 // pred_check
      _
    $region19: #{lenet_forward.1} parent=1 // pred_check_branch
      %27 = sbr.rel (0) target = $region21
    $region20: #{lenet_forward.1} parent=1 // pred_region
      _
    $region21: #{lenet_forward.1} parent=1 // pred_fallthru
      _
    // Predicated region
    $region22: #{lenet_forward.1} parent=1 // pred_check
      _
    $region23: #{lenet_forward.1} parent=1 // pred_check_branch
      %29 = sbr.rel (0) target = $region25
    $region24: #{lenet_forward.1} parent=1 // pred_region
      _
    $region25: #{lenet_forward.1} parent=1 // pred_fallthru
      _
    // Predicated region
    $region26: #{lenet_forward.1} parent=1 // pred_check
      _
    $region27: #{lenet_forward.1} parent=1 // pred_check_branch
      %31 = sbr.rel (0) target = $region29
    $region28: #{lenet_forward.1} parent=1 // pred_region
      _
    $region29: #{lenet_forward.1} parent=1 // pred_fallthru
      _
    // Predicated region
    $region30: #{lenet_forward.1} parent=1 // pred_check
      _
    $region31: #{lenet_forward.1} parent=1 // pred_check_branch
      %33 = sbr.rel (0) target = $region33
    $region32: #{lenet_forward.1} parent=1 // pred_region
      _
    $region33: #{lenet_forward.1} parent=1 // pred_fallthru
      _
    // Predicated region
    $region34: #{lenet_forward.1} parent=1 // pred_check
      _
    $region35: #{lenet_forward.1} parent=1 // pred_check_branch
      %35 = sbr.rel (0) target = $region37
    $region36: #{lenet_forward.1} parent=1 // pred_region
      _
    $region37: #{lenet_forward.1} parent=1 // pred_fallthru
      _
    // Predicated region
    $region38: #{lenet_forward.1} parent=1 // pred_check
      _
    $region39: #{lenet_forward.1} parent=1 // pred_check_branch
      %37 = sbr.rel (0) target = $region41
    $region40: #{lenet_forward.1} parent=1 // pred_region
      _
    $region41: #{lenet_forward.1} parent=1 // pred_fallthru
      _
    // Predicated region
    $region42: #{lenet_forward.1} parent=1 // pred_check
      _
    $region43: #{lenet_forward.1} parent=1 // pred_check_branch
      %39 = sbr.rel (0) target = $region45
    $region44: #{lenet_forward.1} parent=1 // pred_region
      _
    $region45: #{lenet_forward.1} parent=1 // pred_fallthru
      _
    // Predicated region
    $region46: #{lenet_forward.1} parent=1 // pred_check
      _
    $region47: #{lenet_forward.1} parent=1 // pred_check_branch
      %41 = sbr.rel (0) target = $region49
    $region48: #{lenet_forward.1} parent=1 // pred_region
      _
    $region49: #{lenet_forward.1} parent=1 // pred_fallthru
      _
    %v43 = vld [vmem:[%s0] sm:$0xf]
    %v44 = vld [vmem:[%s0 + $0x4] sm:$0xf]
    %v45 = vld [vmem:[%s0 + $0x8] sm:$0xf]
    %v46 = vld [vmem:[%s0 + $0xc] sm:$0xf]
    %v47 = vld [vmem:[%s0 + $0x10] sm:$0xf]
    %v48 = vld [vmem:[%s0 + $0x14] sm:$0xf]
    %v49 = vld [vmem:[%s0 + $0x18] sm:$0xf]
    %v50 = vld [vmem:[%s0 + $0x1c] sm:$0xf]
    %v51 = vld [vmem:[%s0 + $0x20] sm:$0xf]
    %v52 = vld [vmem:[%s0 + $0x24] sm:$0xf]
    %v53 = vld [vmem:[%s0 + $0x28] sm:$0xf]
    %v54 = vld [vmem:[%s0 + $0x2c] sm:$0xf]
    %v55 = vld [vmem:[%s0 + $0x30] sm:$0xf]
    %v56 = vld [vmem:[%s0 + $0x34] sm:$0xf]
    %v57 = vld [vmem:[%s0 + $0x38] sm:$0xf]
    %v58 = vld [vmem:[%s0 + $0x3c] sm:$0xf]
    %v59 = vld [vmem:[%s1] sm:$0xf]
    %v60 = vld [vmem:[%s1 + $0x4] sm:$0xf]
    %v61 = vld [vmem:[%s1 + $0x8] sm:$0xf]
    %v62 = vld [vmem:[%s1 + $0xc] sm:$0x1]
    %v63 = vld [vmem:[%s2] sm:$0x1]
    %v65 = vlaneseq
    %v66 = vshrl.u32 %v65, 7
    %v67 = vsub.s32 0, %v66
    %v68 = vrot.slane %v63, %v67
    %v86 = vunpack.c.l.b16 %v43
    %v87 = vunpack.c.l.b16 %v44
    %v88 = vunpack.c.l.b16 %v45
    %v89 = vunpack.c.l.b16 %v46
    %v90 = vunpack.c.l.b16 %v47
    %v91 = vunpack.c.l.b16 %v48
    %v92 = vunpack.c.l.b16 %v49
    %v93 = vunpack.c.l.b16 %v50
    %v94 = vunpack.c.l.b16 %v51
    %v95 = vunpack.c.l.b16 %v52
    %v96 = vunpack.c.l.b16 %v53
    %v97 = vunpack.c.l.b16 %v54
    %v98 = vunpack.c.l.b16 %v55
    %v99 = vunpack.c.l.b16 %v56
    %v100 = vunpack.c.l.b16 %v57
    %v101 = vunpack.c.l.b16 %v58
    %v102 = vpack.c.b16 %v87, %v86
    %v103 = vpack.c.b16 %v89, %v88
    %v104 = vpack.c.b16 %v91, %v90
    %v105 = vpack.c.b16 %v93, %v92
    %v106 = vpack.c.b16 %v95, %v94
    %v107 = vpack.c.b16 %v97, %v96
    %v108 = vpack.c.b16 %v99, %v98
    %v109 = vpack.c.b16 %v101, %v100
    %v114 = vunpack.c.l.b16 %v59
    %v115 = vunpack.c.l.b16 %v60
    %v116 = vunpack.c.l.b16 %v61
    %v117 = vunpack.c.l.b16 %v62
    %v118 = vpack.c.b16 %v115, %v114
    %v119 = vpack.c.b16 %v117, %v116
    %vm121 = vcmask 203776
    %v123 = vsel %vm121, %v102, 0
    %v126 = vsel %vm121, %v103, 0
    %v129 = vsel %vm121, %v104, 0
    %v132 = vsel %vm121, %v105, 0
    %v135 = vsel %vm121, %v106, 0
    %v138 = vsel %vm121, %v107, 0
    %v141 = vsel %vm121, %v108, 0
    %v144 = vsel %vm121, %v109, 0
    %vm146 = vcmask 1043456
    %vm147 = vcmask 1044480
    %v148 = vsel %vm146, 4294967295, 65535
    %v149 = vsel %vm147, %v148, 0
    %v151 = vand.u32 %v119, %v149
    %153 = vmatprep.subr.bf16.mxu0 0
    %154 = vmatpush1.bf16.msra.mxu0 %v118
    %155 = vmatprep.subr.bf16.mxu0 0
    %156 = vmatpush1.bf16.msra.mxu0 %v151
    %157 = vmatprep.subr.bf16.mxu0 0
    %158 = vmatpush1.bf16.msra.mxu0 0
    %159 = vmatprep.subr.bf16.mxu0 0
    %160 = vmatpush1.bf16.msra.mxu0 0
    %161 = vmatprep.subr.bf16.mxu0 0
    %162 = vmatpush1.bf16.msra.mxu0 0
    %163 = vmatprep.subr.bf16.mxu0 0
    %164 = vmatpush1.bf16.msra.mxu0 0
    %165 = vmatprep.subr.bf16.mxu0 0
    %166 = vmatpush1.bf16.msra.mxu0 0
    %167 = vmatprep.subr.bf16.mxu0 0
    %168 = vmatpush1.bf16.msra.mxu0 0
    %169 = vmatprep.subr.bf16.mxu0 0
    %170 = vmatpush1.bf16.msra.mxu0 0
    %171 = vmatprep.subr.bf16.mxu0 0
    %172 = vmatpush1.bf16.msra.mxu0 0
    %173 = vmatprep.subr.bf16.mxu0 0
    %174 = vmatpush1.bf16.msra.mxu0 0
    %175 = vmatprep.subr.bf16.mxu0 0
    %176 = vmatpush1.bf16.msra.mxu0 0
    %177 = vmatprep.subr.bf16.mxu0 0
    %178 = vmatpush1.bf16.msra.mxu0 0
    %179 = vmatprep.subr.bf16.mxu0 0
    %180 = vmatpush1.bf16.msra.mxu0 0
    %181 = vmatprep.subr.bf16.mxu0 0
    %182 = vmatpush1.bf16.msra.mxu0 0
    %183 = vmatprep.subr.bf16.mxu0 0
    %184 = vmatpush1.bf16.msra.mxu0 0
    %185 = vmatprep.mubr.bf16.mxu0 0
    %186 = vmatmul.mubr.bf16.gmra.mrb[0].mxu0 %v123
    %v187 = vpop.f32.mrb[0].mxu0
    %v188 = vadd.f32 %v68, %v187
    %v189 = vpop.f32.mrb[0].mxu0
    %v190 = vpop.f32.mrb[0].mxu0
    %v191 = vadd.f32 %v68, %v190
    %v192 = vpop.f32.mrb[0].mxu0
    %193 = vmatprep.mubr.bf16.mxu0 0
    %194 = vmatmul.mubr.bf16.gmra.mrb[0].mxu0 %v126
    %v195 = vpop.f32.mrb[0].mxu0
    %v196 = vadd.f32 %v68, %v195
    %v197 = vpop.f32.mrb[0].mxu0
    %v198 = vpop.f32.mrb[0].mxu0
    %v199 = vadd.f32 %v68, %v198
    %v200 = vpop.f32.mrb[0].mxu0
    %201 = vmatprep.mubr.bf16.mxu0 0
    %202 = vmatmul.mubr.bf16.gmra.mrb[0].mxu0 %v129
    %v203 = vpop.f32.mrb[0].mxu0
    %v204 = vadd.f32 %v68, %v203
    %v205 = vpop.f32.mrb[0].mxu0
    %v206 = vpop.f32.mrb[0].mxu0
    %v207 = vadd.f32 %v68, %v206
    %v208 = vpop.f32.mrb[0].mxu0
    %209 = vmatprep.mubr.bf16.mxu0 0
    %210 = vmatmul.mubr.bf16.gmra.mrb[0].mxu0 %v132
    %v211 = vpop.f32.mrb[0].mxu0
    %v212 = vadd.f32 %v68, %v211
    %v213 = vpop.f32.mrb[0].mxu0
    %v214 = vpop.f32.mrb[0].mxu0
    %v215 = vadd.f32 %v68, %v214
    %v216 = vpop.f32.mrb[0].mxu0
    %217 = vmatprep.mubr.bf16.mxu0 0
    %218 = vmatmul.mubr.bf16.gmra.mrb[0].mxu0 %v135
    %v219 = vpop.f32.mrb[0].mxu0
    %v220 = vadd.f32 %v68, %v219
    %v221 = vpop.f32.mrb[0].mxu0
    %v222 = vpop.f32.mrb[0].mxu0
    %v223 = vadd.f32 %v68, %v222
    %v224 = vpop.f32.mrb[0].mxu0
    %225 = vmatprep.mubr.bf16.mxu0 0
    %226 = vmatmul.mubr.bf16.gmra.mrb[0].mxu0 %v138
    %v227 = vpop.f32.mrb[0].mxu0
    %v228 = vadd.f32 %v68, %v227
    %v229 = vpop.f32.mrb[0].mxu0
    %v230 = vpop.f32.mrb[0].mxu0
    %v231 = vadd.f32 %v68, %v230
    %v232 = vpop.f32.mrb[0].mxu0
    %233 = vmatprep.mubr.bf16.mxu0 0
    %234 = vmatmul.mubr.bf16.gmra.mrb[0].mxu0 %v141
    %v235 = vpop.f32.mrb[0].mxu0
    %v236 = vadd.f32 %v68, %v235
    %v237 = vpop.f32.mrb[0].mxu0
    %v238 = vpop.f32.mrb[0].mxu0
    %v239 = vadd.f32 %v68, %v238
    %v240 = vpop.f32.mrb[0].mxu0
    %241 = vmatprep.mubr.bf16.mxu0 0
    %242 = vmatmul.mubr.bf16.gmra.mrb[0].mxu0 %v144
    %v243 = vpop.f32.mrb[0].mxu0
    %v244 = vadd.f32 %v68, %v243
    %v245 = vpop.f32.mrb[0].mxu0
    %v246 = vpop.f32.mrb[0].mxu0
    %v247 = vadd.f32 %v68, %v246
    %v248 = vpop.f32.mrb[0].mxu0
    %249 = vdwg.mxu0
    %v250 = vld [vmem:[%s3] sm:$0xff]
    %v251 = vld [vmem:[%s3 + $0x8] sm:$0xff]
    %vm264 = vcmask 1046528
    %v265 = vrot.slane %v188, 1
    %v266 = vrot.slane %v191, 1
    %v267 = vsel %vm264, %v265, %v266
    %v268 = vrot.slane %v196, 1
    %v269 = vsel %vm264, %v266, %v268
    %v270 = vrot.slane %v199, 1
    %v271 = vsel %vm264, %v268, %v270
    %v272 = vrot.slane %v204, 1
    %v273 = vsel %vm264, %v270, %v272
    %v274 = vrot.slane %v207, 1
    %v275 = vsel %vm264, %v272, %v274
    %v276 = vrot.slane %v212, 1
    %v277 = vsel %vm264, %v274, %v276
    %v278 = vrot.slane %v215, 1
    %v279 = vsel %vm264, %v276, %v278
    %v280 = vrot.slane %v220, 1
    %v281 = vsel %vm264, %v278, %v280
    %v282 = vrot.slane %v223, 1
    %v283 = vsel %vm264, %v280, %v282
    %v284 = vrot.slane %v228, 1
    %v285 = vsel %vm264, %v282, %v284
    %v286 = vrot.slane %v231, 1
    %v287 = vsel %vm264, %v284, %v286
    %vm288 = vcmask 64512
    %v289 = vsel %vm288, %v267, 0
    %v291 = vsel %vm288, %v269, 0
    %v293 = vsel %vm288, %v271, 0
    %v295 = vsel %vm288, %v273, 0
    %v297 = vsel %vm288, %v275, 0
    %v299 = vsel %vm288, %v277, 0
    %v301 = vsel %vm288, %v279, 0
    %v303 = vsel %vm288, %v281, 0
    %v305 = vsel %vm288, %v283, 0
    %v307 = vsel %vm288, %v285, 0
    %v309 = vsel %vm288, %v287, 0
    %v311 = vsel %vm288, %v286, 0
    %313 = vmatprep.subr.mxu0 0.0
    %314 = vmatpush1.msra.mxu0 %v251
    %315 = vmatprep.subr.mxu0 0.0
    %316 = vmatpush1.msra.mxu0 0.0
    %317 = vmatprep.subr.mxu0 0.0
    %318 = vmatpush1.msra.mxu0 0.0
    %319 = vmatprep.subr.mxu0 0.0
    %320 = vmatpush1.msra.mxu0 0.0
    %321 = vmatprep.subr.mxu0 0.0
    %322 = vmatpush1.msra.mxu0 0.0
    %323 = vmatprep.subr.mxu0 0.0
    %324 = vmatpush1.msra.mxu0 0.0
    %325 = vmatprep.subr.mxu0 0.0
    %326 = vmatpush1.msra.mxu0 0.0
    %327 = vmatprep.subr.mxu0 0.0
    %328 = vmatpush1.msra.mxu0 0.0
    %329 = vmatprep.subr.mxu0 0.0
    %330 = vmatpush1.msra.mxu0 0.0
    %331 = vmatprep.subr.mxu0 0.0
    %332 = vmatpush1.msra.mxu0 0.0
    %333 = vmatprep.subr.mxu0 0.0
    %334 = vmatpush1.msra.mxu0 0.0
    %335 = vmatprep.subr.mxu0 0.0
    %336 = vmatpush1.msra.mxu0 0.0
    %337 = vmatprep.subr.mxu0 0.0
    %338 = vmatpush1.msra.mxu0 0.0
    %339 = vmatprep.subr.mxu0 0.0
    %340 = vmatpush1.msra.mxu0 0.0
    %341 = vmatprep.subr.mxu0 0.0
    %342 = vmatpush1.msra.mxu0 0.0
    %343 = vmatprep.subr.mxu0 0.0
    %344 = vmatpush1.msra.mxu0 0.0
    %345 = vmatprep.subr.mxu0 0.0
    %346 = vmatpush1.msra.mxu0 0.0
    %347 = vmatprep.subr.mxu0 0.0
    %348 = vmatpush1.msra.mxu0 0.0
    %349 = vmatprep.subr.mxu0 0.0
    %350 = vmatpush1.msra.mxu0 0.0
    %351 = vmatprep.subr.mxu0 0.0
    %352 = vmatpush1.msra.mxu0 0.0
    %353 = vmatprep.subr.mxu0 0.0
    %354 = vmatpush1.msra.mxu0 0.0
    %355 = vmatprep.subr.mxu0 0.0
    %356 = vmatpush1.msra.mxu0 0.0
    %357 = vmatprep.subr.mxu0 0.0
    %358 = vmatpush1.msra.mxu0 0.0
    %359 = vmatprep.subr.mxu0 0.0
    %360 = vmatpush1.msra.mxu0 0.0
    %361 = vmatprep.subr.mxu0 0.0
    %362 = vmatpush1.msra.mxu0 0.0
    %363 = vmatprep.subr.mxu0 0.0
    %364 = vmatpush1.msra.mxu0 0.0
    %365 = vmatprep.subr.mxu0 0.0
    %366 = vmatpush1.msra.mxu0 0.0
    %367 = vmatprep.subr.mxu0 0.0
    %368 = vmatpush1.msra.mxu0 0.0
    %369 = vmatprep.subr.mxu0 0.0
    %370 = vmatpush1.msra.mxu0 0.0
    %371 = vmatprep.subr.mxu0 0.0
    %372 = vmatpush1.msra.mxu0 0.0
    %373 = vmatprep.subr.mxu0 0.0
    %374 = vmatpush1.msra.mxu0 0.0
    %375 = vmatprep.subr.mxu0 0.0
    %376 = vmatpush1.msra.mxu0 0.0
    %377 = vmatprep.mubr.f32.mxu0 0.0
    %378 = vmatmul.mubr.f32.gmra.mrb[0].mxu0 %v289
    %v379 = vpop.f32.mrb[0].mxu0
    %v380 = vadd.f32 0.0, %v379
    %v381 = vpop.f32.mrb[0].mxu0
    %382 = vmatprep.mubr.f32.mxu0 0.0
    %383 = vmatmul.mubr.f32.gmra.mrb[0].mxu0 %v291
    %v384 = vpop.f32.mrb[0].mxu0
    %v385 = vadd.f32 0.0, %v384
    %v386 = vpop.f32.mrb[0].mxu0
    %387 = vmatprep.mubr.f32.mxu0 0.0
    %388 = vmatmul.mubr.f32.gmra.mrb[0].mxu0 %v293
    %v389 = vpop.f32.mrb[0].mxu0
    %v390 = vadd.f32 0.0, %v389
    %v391 = vpop.f32.mrb[0].mxu0
    %392 = vmatprep.mubr.f32.mxu0 0.0
    %393 = vmatmul.mubr.f32.gmra.mrb[0].mxu0 %v295
    %v394 = vpop.f32.mrb[0].mxu0
    %v395 = vadd.f32 0.0, %v394
    %v396 = vpop.f32.mrb[0].mxu0
    %397 = vmatprep.mubr.f32.mxu0 0.0
    %398 = vmatmul.mubr.f32.gmra.mrb[0].mxu0 %v297
    %v399 = vpop.f32.mrb[0].mxu0
    %v400 = vadd.f32 0.0, %v399
    %v401 = vpop.f32.mrb[0].mxu0
    %402 = vmatprep.mubr.f32.mxu0 0.0
    %403 = vmatmul.mubr.f32.gmra.mrb[0].mxu0 %v299
    %v404 = vpop.f32.mrb[0].mxu0
    %v405 = vadd.f32 0.0, %v404
    %v406 = vpop.f32.mrb[0].mxu0
    %407 = vmatprep.mubr.f32.mxu0 0.0
    %408 = vmatmul.mubr.f32.gmra.mrb[0].mxu0 %v301
    %v409 = vpop.f32.mrb[0].mxu0
    %v410 = vadd.f32 0.0, %v409
    %v411 = vpop.f32.mrb[0].mxu0
    %412 = vmatprep.mubr.f32.mxu0 0.0
    %413 = vmatmul.mubr.f32.gmra.mrb[0].mxu0 %v303
    %v414 = vpop.f32.mrb[0].mxu0
    %v415 = vadd.f32 0.0, %v414
    %v416 = vpop.f32.mrb[0].mxu0
    %417 = vmatprep.mubr.f32.mxu0 0.0
    %418 = vmatmul.mubr.f32.gmra.mrb[0].mxu0 %v305
    %v419 = vpop.f32.mrb[0].mxu0
    %v420 = vadd.f32 0.0, %v419
    %v421 = vpop.f32.mrb[0].mxu0
    %422 = vmatprep.mubr.f32.mxu0 0.0
    %423 = vmatmul.mubr.f32.gmra.mrb[0].mxu0 %v307
    %v424 = vpop.f32.mrb[0].mxu0
    %v425 = vadd.f32 0.0, %v424
    %v426 = vpop.f32.mrb[0].mxu0
    %427 = vmatprep.mubr.f32.mxu0 0.0
    %428 = vmatmul.mubr.f32.gmra.mrb[0].mxu0 %v309
    %v429 = vpop.f32.mrb[0].mxu0
    %v430 = vadd.f32 0.0, %v429
    %v431 = vpop.f32.mrb[0].mxu0
    %432 = vmatprep.mubr.f32.mxu0 0.0
    %433 = vmatmul.mubr.f32.gmra.mrb[0].mxu0 %v311
    %v434 = vpop.f32.mrb[0].mxu0
    %v435 = vadd.f32 0.0, %v434
    %v436 = vpop.f32.mrb[0].mxu0
    %437 = vdwg.mxu0
    %v438 = vsel %vm288, %v188, 0
    %v440 = vsel %vm288, %v191, 0
    %v442 = vsel %vm288, %v196, 0
    %v444 = vsel %vm288, %v199, 0
    %v446 = vsel %vm288, %v204, 0
    %v448 = vsel %vm288, %v207, 0
    %v450 = vsel %vm288, %v212, 0
    %v452 = vsel %vm288, %v215, 0
    %v454 = vsel %vm288, %v220, 0
    %v456 = vsel %vm288, %v223, 0
    %v458 = vsel %vm288, %v228, 0
    %v460 = vsel %vm288, %v231, 0
    %462 = vmatprep.subr.mxu0 0.0
    %463 = vmatpush1.msra.mxu0 %v250
    %464 = vmatprep.subr.mxu0 0.0
    %465 = vmatpush1.msra.mxu0 0.0
    %466 = vmatprep.subr.mxu0 0.0
    %467 = vmatpush1.msra.mxu0 0.0
    %468 = vmatprep.subr.mxu0 0.0
    %469 = vmatpush1.msra.mxu0 0.0
    %470 = vmatprep.subr.mxu0 0.0
    %471 = vmatpush1.msra.mxu0 0.0
    %472 = vmatprep.subr.mxu0 0.0
    %473 = vmatpush1.msra.mxu0 0.0
    %474 = vmatprep.subr.mxu0 0.0
    %475 = vmatpush1.msra.mxu0 0.0
    %476 = vmatprep.subr.mxu0 0.0
    %477 = vmatpush1.msra.mxu0 0.0
    %478 = vmatprep.subr.mxu0 0.0
    %479 = vmatpush1.msra.mxu0 0.0
    %480 = vmatprep.subr.mxu0 0.0
    %481 = vmatpush1.msra.mxu0 0.0
    %482 = vmatprep.subr.mxu0 0.0
    %483 = vmatpush1.msra.mxu0 0.0
    %484 = vmatprep.subr.mxu0 0.0
    %485 = vmatpush1.msra.mxu0 0.0
    %486 = vmatprep.subr.mxu0 0.0
    %487 = vmatpush1.msra.mxu0 0.0
    %488 = vmatprep.subr.mxu0 0.0
    %489 = vmatpush1.msra.mxu0 0.0
    %490 = vmatprep.subr.mxu0 0.0
    %491 = vmatpush1.msra.mxu0 0.0
    %492 = vmatprep.subr.mxu0 0.0
    %493 = vmatpush1.msra.mxu0 0.0
    %494 = vmatprep.subr.mxu0 0.0
    %495 = vmatpush1.msra.mxu0 0.0
    %496 = vmatprep.subr.mxu0 0.0
    %497 = vmatpush1.msra.mxu0 0.0
    %498 = vmatprep.subr.mxu0 0.0
    %499 = vmatpush1.msra.mxu0 0.0
    %500 = vmatprep.subr.mxu0 0.0
    %501 = vmatpush1.msra.mxu0 0.0
    %502 = vmatprep.subr.mxu0 0.0
    %503 = vmatpush1.msra.mxu0 0.0
    %504 = vmatprep.subr.mxu0 0.0
    %505 = vmatpush1.msra.mxu0 0.0
    %506 = vmatprep.subr.mxu0 0.0
    %507 = vmatpush1.msra.mxu0 0.0
    %508 = vmatprep.subr.mxu0 0.0
    %509 = vmatpush1.msra.mxu0 0.0
    %510 = vmatprep.subr.mxu0 0.0
    %511 = vmatpush1.msra.mxu0 0.0
    %512 = vmatprep.subr.mxu0 0.0
    %513 = vmatpush1.msra.mxu0 0.0
    %514 = vmatprep.subr.mxu0 0.0
    %515 = vmatpush1.msra.mxu0 0.0
    %516 = vmatprep.subr.mxu0 0.0
    %517 = vmatpush1.msra.mxu0 0.0
    %518 = vmatprep.subr.mxu0 0.0
    %519 = vmatpush1.msra.mxu0 0.0
    %520 = vmatprep.subr.mxu0 0.0
    %521 = vmatpush1.msra.mxu0 0.0
    %522 = vmatprep.subr.mxu0 0.0
    %523 = vmatpush1.msra.mxu0 0.0
    %524 = vmatprep.subr.mxu0 0.0
    %525 = vmatpush1.msra.mxu0 0.0
    %526 = vmatprep.mubr.f32.mxu0 0.0
    %527 = vmatmul.mubr.f32.gmra.mrb[0].mxu0 %v438
    %v528 = vpop.f32.mrb[0].mxu0
    %v529 = vadd.f32 %v380, %v528
    %v530 = vpop.f32.mrb[0].mxu0
    %531 = vmatprep.mubr.f32.mxu0 0.0
    %532 = vmatmul.mubr.f32.gmra.mrb[0].mxu0 %v440
    %v533 = vpop.f32.mrb[0].mxu0
    %v534 = vadd.f32 %v385, %v533
    %v535 = vpop.f32.mrb[0].mxu0
    %536 = vmatprep.mubr.f32.mxu0 0.0
    %537 = vmatmul.mubr.f32.gmra.mrb[0].mxu0 %v442
    %v538 = vpop.f32.mrb[0].mxu0
    %v539 = vadd.f32 %v390, %v538
    %v540 = vpop.f32.mrb[0].mxu0
    %541 = vmatprep.mubr.f32.mxu0 0.0
    %542 = vmatmul.mubr.f32.gmra.mrb[0].mxu0 %v444
    %v543 = vpop.f32.mrb[0].mxu0
    %v544 = vadd.f32 %v395, %v543
    %v545 = vpop.f32.mrb[0].mxu0
    %546 = vmatprep.mubr.f32.mxu0 0.0
    %547 = vmatmul.mubr.f32.gmra.mrb[0].mxu0 %v446
    %v548 = vpop.f32.mrb[0].mxu0
    %v549 = vadd.f32 %v400, %v548
    %v550 = vpop.f32.mrb[0].mxu0
    %551 = vmatprep.mubr.f32.mxu0 0.0
    %552 = vmatmul.mubr.f32.gmra.mrb[0].mxu0 %v448
    %v553 = vpop.f32.mrb[0].mxu0
    %v554 = vadd.f32 %v405, %v553
    %v555 = vpop.f32.mrb[0].mxu0
    %556 = vmatprep.mubr.f32.mxu0 0.0
    %557 = vmatmul.mubr.f32.gmra.mrb[0].mxu0 %v450
    %v558 = vpop.f32.mrb[0].mxu0
    %v559 = vadd.f32 %v410, %v558
    %v560 = vpop.f32.mrb[0].mxu0
    %561 = vmatprep.mubr.f32.mxu0 0.0
    %562 = vmatmul.mubr.f32.gmra.mrb[0].mxu0 %v452
    %v563 = vpop.f32.mrb[0].mxu0
    %v564 = vadd.f32 %v415, %v563
    %v565 = vpop.f32.mrb[0].mxu0
    %566 = vmatprep.mubr.f32.mxu0 0.0
    %567 = vmatmul.mubr.f32.gmra.mrb[0].mxu0 %v454
    %v568 = vpop.f32.mrb[0].mxu0
    %v569 = vadd.f32 %v420, %v568
    %v570 = vpop.f32.mrb[0].mxu0
    %571 = vmatprep.mubr.f32.mxu0 0.0
    %572 = vmatmul.mubr.f32.gmra.mrb[0].mxu0 %v456
    %v573 = vpop.f32.mrb[0].mxu0
    %v574 = vadd.f32 %v425, %v573
    %v575 = vpop.f32.mrb[0].mxu0
    %576 = vmatprep.mubr.f32.mxu0 0.0
    %577 = vmatmul.mubr.f32.gmra.mrb[0].mxu0 %v458
    %v578 = vpop.f32.mrb[0].mxu0
    %v579 = vadd.f32 %v430, %v578
    %v580 = vpop.f32.mrb[0].mxu0
    %581 = vmatprep.mubr.f32.mxu0 0.0
    %582 = vmatmul.mubr.f32.gmra.mrb[0].mxu0 %v460
    %v583 = vpop.f32.mrb[0].mxu0
    %v584 = vadd.f32 %v435, %v583
    %v585 = vpop.f32.mrb[0].mxu0
    %586 = vdwg.mxu0
    %v587 = vld [vmem:[%s3 + $0x10] sm:$0xff]
    %vm588 = vcmask 1045504
    %v589 = vrot.slane %v188, 2
    %v590 = vrot.slane %v191, 2
    %v591 = vsel %vm588, %v589, %v590
    %v592 = vrot.slane %v196, 2
    %v593 = vsel %vm588, %v590, %v592
    %v594 = vrot.slane %v199, 2
    %v595 = vsel %vm588, %v592, %v594
    %v596 = vrot.slane %v204, 2
    %v597 = vsel %vm588, %v594, %v596
    %v598 = vrot.slane %v207, 2
    %v599 = vsel %vm588, %v596, %v598
    %v600 = vrot.slane %v212, 2
    %v601 = vsel %vm588, %v598, %v600
    %v602 = vrot.slane %v215, 2
    %v603 = vsel %vm588, %v600, %v602
    %v604 = vrot.slane %v220, 2
    %v605 = vsel %vm588, %v602, %v604
    %v606 = vrot.slane %v223, 2
    %v607 = vsel %vm588, %v604, %v606
    %v608 = vrot.slane %v228, 2
    %v609 = vsel %vm588, %v606, %v608
    %v610 = vrot.slane %v231, 2
    %v611 = vsel %vm588, %v608, %v610
    %v612 = vsel %vm288, %v591, 0
    %v614 = vsel %vm288, %v593, 0
    %v616 = vsel %vm288, %v595, 0
    %v618 = vsel %vm288, %v597, 0
    %v620 = vsel %vm288, %v599, 0
    %v622 = vsel %vm288, %v601, 0
    %v624 = vsel %vm288, %v603, 0
    %v626 = vsel %vm288, %v605, 0
    %v628 = vsel %vm288, %v607, 0
    %v630 = vsel %vm288, %v609, 0
    %v632 = vsel %vm288, %v611, 0
    %v634 = vsel %vm288, %v610, 0
    %636 = vmatprep.subr.mxu0 0.0
    %637 = vmatpush1.msra.mxu0 %v587
    %638 = vmatprep.subr.mxu0 0.0
    %639 = vmatpush1.msra.mxu0 0.0
    %640 = vmatprep.subr.mxu0 0.0
    %641 = vmatpush1.msra.mxu0 0.0
    %642 = vmatprep.subr.mxu0 0.0
    %643 = vmatpush1.msra.mxu0 0.0
    %644 = vmatprep.subr.mxu0 0.0
    %645 = vmatpush1.msra.mxu0 0.0
    %646 = vmatprep.subr.mxu0 0.0
    %647 = vmatpush1.msra.mxu0 0.0
    %648 = vmatprep.subr.mxu0 0.0
    %649 = vmatpush1.msra.mxu0 0.0
    %650 = vmatprep.subr.mxu0 0.0
    %651 = vmatpush1.msra.mxu0 0.0
    %652 = vmatprep.subr.mxu0 0.0
    %653 = vmatpush1.msra.mxu0 0.0
    %654 = vmatprep.subr.mxu0 0.0
    %655 = vmatpush1.msra.mxu0 0.0
    %656 = vmatprep.subr.mxu0 0.0
    %657 = vmatpush1.msra.mxu0 0.0
    %658 = vmatprep.subr.mxu0 0.0
    %659 = vmatpush1.msra.mxu0 0.0
    %660 = vmatprep.subr.mxu0 0.0
    %661 = vmatpush1.msra.mxu0 0.0
    %662 = vmatprep.subr.mxu0 0.0
    %663 = vmatpush1.msra.mxu0 0.0
    %664 = vmatprep.subr.mxu0 0.0
    %665 = vmatpush1.msra.mxu0 0.0
    %666 = vmatprep.subr.mxu0 0.0
    %667 = vmatpush1.msra.mxu0 0.0
    %668 = vmatprep.subr.mxu0 0.0
    %669 = vmatpush1.msra.mxu0 0.0
    %670 = vmatprep.subr.mxu0 0.0
    %671 = vmatpush1.msra.mxu0 0.0
    %672 = vmatprep.subr.mxu0 0.0
    %673 = vmatpush1.msra.mxu0 0.0
    %674 = vmatprep.subr.mxu0 0.0
    %675 = vmatpush1.msra.mxu0 0.0
    %676 = vmatprep.subr.mxu0 0.0
    %677 = vmatpush1.msra.mxu0 0.0
    %678 = vmatprep.subr.mxu0 0.0
    %679 = vmatpush1.msra.mxu0 0.0
    %680 = vmatprep.subr.mxu0 0.0
    %681 = vmatpush1.msra.mxu0 0.0
    %682 = vmatprep.subr.mxu0 0.0
    %683 = vmatpush1.msra.mxu0 0.0
    %684 = vmatprep.subr.mxu0 0.0
    %685 = vmatpush1.msra.mxu0 0.0
    %686 = vmatprep.subr.mxu0 0.0
    %687 = vmatpush1.msra.mxu0 0.0
    %688 = vmatprep.subr.mxu0 0.0
    %689 = vmatpush1.msra.mxu0 0.0
    %690 = vmatprep.subr.mxu0 0.0
    %691 = vmatpush1.msra.mxu0 0.0
    %692 = vmatprep.subr.mxu0 0.0
    %693 = vmatpush1.msra.mxu0 0.0
    %694 = vmatprep.subr.mxu0 0.0
    %695 = vmatpush1.msra.mxu0 0.0
    %696 = vmatprep.subr.mxu0 0.0
    %697 = vmatpush1.msra.mxu0 0.0
    %698 = vmatprep.subr.mxu0 0.0
    %699 = vmatpush1.msra.mxu0 0.0
    %700 = vmatprep.mubr.f32.mxu0 0.0
    %701 = vmatmul.mubr.f32.gmra.mrb[0].mxu0 %v612
    %v702 = vpop.f32.mrb[0].mxu0
    %v703 = vadd.f32 0.0, %v702
    %v704 = vpop.f32.mrb[0].mxu0
    %705 = vmatprep.mubr.f32.mxu0 0.0
    %706 = vmatmul.mubr.f32.gmra.mrb[0].mxu0 %v614
    %v707 = vpop.f32.mrb[0].mxu0
    %v708 = vadd.f32 0.0, %v707
    %v709 = vpop.f32.mrb[0].mxu0
    %710 = vmatprep.mubr.f32.mxu0 0.0
    %711 = vmatmul.mubr.f32.gmra.mrb[0].mxu0 %v616
    %v712 = vpop.f32.mrb[0].mxu0
    %v713 = vadd.f32 0.0, %v712
    %v714 = vpop.f32.mrb[0].mxu0
    %715 = vmatprep.mubr.f32.mxu0 0.0
    %716 = vmatmul.mubr.f32.gmra.mrb[0].mxu0 %v618
    %v717 = vpop.f32.mrb[0].mxu0
    %v718 = vadd.f32 0.0, %v717
    %v719 = vpop.f32.mrb[0].mxu0
    %720 = vmatprep.mubr.f32.mxu0 0.0
    %721 = vmatmul.mubr.f32.gmra.mrb[0].mxu0 %v620
    %v722 = vpop.f32.mrb[0].mxu0
    %v723 = vadd.f32 0.0, %v722
    %v724 = vpop.f32.mrb[0].mxu0
    %725 = vmatprep.mubr.f32.mxu0 0.0
    %726 = vmatmul.mubr.f32.gmra.mrb[0].mxu0 %v622
    %v727 = vpop.f32.mrb[0].mxu0
    %v728 = vadd.f32 0.0, %v727
    %v729 = vpop.f32.mrb[0].mxu0
    %730 = vmatprep.mubr.f32.mxu0 0.0
    %731 = vmatmul.mubr.f32.gmra.mrb[0].mxu0 %v624
    %v732 = vpop.f32.mrb[0].mxu0
    %v733 = vadd.f32 0.0, %v732
    %v734 = vpop.f32.mrb[0].mxu0
    %735 = vmatprep.mubr.f32.mxu0 0.0
    %736 = vmatmul.mubr.f32.gmra.mrb[0].mxu0 %v626
    %v737 = vpop.f32.mrb[0].mxu0
    %v738 = vadd.f32 0.0, %v737
    %v739 = vpop.f32.mrb[0].mxu0
    %740 = vmatprep.mubr.f32.mxu0 0.0
    %741 = vmatmul.mubr.f32.gmra.mrb[0].mxu0 %v628
    %v742 = vpop.f32.mrb[0].mxu0
    %v743 = vadd.f32 0.0, %v742
    %v744 = vpop.f32.mrb[0].mxu0
    %745 = vmatprep.mubr.f32.mxu0 0.0
    %746 = vmatmul.mubr.f32.gmra.mrb[0].mxu0 %v630
    %v747 = vpop.f32.mrb[0].mxu0
    %v748 = vadd.f32 0.0, %v747
    %v749 = vpop.f32.mrb[0].mxu0
    %750 = vmatprep.mubr.f32.mxu0 0.0
    %751 = vmatmul.mubr.f32.gmra.mrb[0].mxu0 %v632
    %v752 = vpop.f32.mrb[0].mxu0
    %v753 = vadd.f32 0.0, %v752
    %v754 = vpop.f32.mrb[0].mxu0
    %755 = vmatprep.mubr.f32.mxu0 0.0
    %756 = vmatmul.mubr.f32.gmra.mrb[0].mxu0 %v634
    %v757 = vpop.f32.mrb[0].mxu0
    %v758 = vadd.f32 0.0, %v757
    %v759 = vpop.f32.mrb[0].mxu0
    %760 = vdwg.mxu0
    %v761 = vadd.f32 %v529, %v703
    %v762 = vadd.f32 %v534, %v708
    %v763 = vadd.f32 %v539, %v713
    %v764 = vadd.f32 %v544, %v718
    %v765 = vadd.f32 %v549, %v723
    %v766 = vadd.f32 %v554, %v728
    %v767 = vadd.f32 %v559, %v733
    %v768 = vadd.f32 %v564, %v738
    %v769 = vadd.f32 %v569, %v743
    %v770 = vadd.f32 %v574, %v748
    %v771 = vadd.f32 %v579, %v753
    %v772 = vadd.f32 %v584, %v758
    %v773 = vld [vmem:[%s3 + $0x18] sm:$0xff]
    %v774 = vrot.slane %v188, 3
    %v775 = vrot.slane %v191, 3
    %v776 = vsel %vm147, %v774, %v775
    %v777 = vrot.slane %v196, 3
    %v778 = vsel %vm147, %v775, %v777
    %v779 = vrot.slane %v199, 3
    %v780 = vsel %vm147, %v777, %v779
    %v781 = vrot.slane %v204, 3
    %v782 = vsel %vm147, %v779, %v781
    %v783 = vrot.slane %v207, 3
    %v784 = vsel %vm147, %v781, %v783
    %v785 = vrot.slane %v212, 3
    %v786 = vsel %vm147, %v783, %v785
    %v787 = vrot.slane %v215, 3
    %v788 = vsel %vm147, %v785, %v787
    %v789 = vrot.slane %v220, 3
    %v790 = vsel %vm147, %v787, %v789
    %v791 = vrot.slane %v223, 3
    %v792 = vsel %vm147, %v789, %v791
    %v793 = vrot.slane %v228, 3
    %v794 = vsel %vm147, %v791, %v793
    %v795 = vrot.slane %v231, 3
    %v796 = vsel %vm147, %v793, %v795
    %v797 = vsel %vm288, %v776, 0
    %v799 = vsel %vm288, %v778, 0
    %v801 = vsel %vm288, %v780, 0
    %v803 = vsel %vm288, %v782, 0
    %v805 = vsel %vm288, %v784, 0
    %v807 = vsel %vm288, %v786, 0
    %v809 = vsel %vm288, %v788, 0
    %v811 = vsel %vm288, %v790, 0
    %v813 = vsel %vm288, %v792, 0
    %v815 = vsel %vm288, %v794, 0
    %v817 = vsel %vm288, %v796, 0
    %v819 = vsel %vm288, %v795, 0
    %821 = vmatprep.subr.mxu0 0.0
    %822 = vmatpush1.msra.mxu0 %v773
    %823 = vmatprep.subr.mxu0 0.0
    %824 = vmatpush1.msra.mxu0 0.0
    %825 = vmatprep.subr.mxu0 0.0
    %826 = vmatpush1.msra.mxu0 0.0
    %827 = vmatprep.subr.mxu0 0.0
    %828 = vmatpush1.msra.mxu0 0.0
    %829 = vmatprep.subr.mxu0 0.0
    %830 = vmatpush1.msra.mxu0 0.0
    %831 = vmatprep.subr.mxu0 0.0
    %832 = vmatpush1.msra.mxu0 0.0
    %833 = vmatprep.subr.mxu0 0.0
    %834 = vmatpush1.msra.mxu0 0.0
    %835 = vmatprep.subr.mxu0 0.0
    %836 = vmatpush1.msra.mxu0 0.0
    %837 = vmatprep.subr.mxu0 0.0
    %838 = vmatpush1.msra.mxu0 0.0
    %839 = vmatprep.subr.mxu0 0.0
    %840 = vmatpush1.msra.mxu0 0.0
    %841 = vmatprep.subr.mxu0 0.0
    %842 = vmatpush1.msra.mxu0 0.0
    %843 = vmatprep.subr.mxu0 0.0
    %844 = vmatpush1.msra.mxu0 0.0
    %845 = vmatprep.subr.mxu0 0.0
    %846 = vmatpush1.msra.mxu0 0.0
    %847 = vmatprep.subr.mxu0 0.0
    %848 = vmatpush1.msra.mxu0 0.0
    %849 = vmatprep.subr.mxu0 0.0
    %850 = vmatpush1.msra.mxu0 0.0
    %851 = vmatprep.subr.mxu0 0.0
    %852 = vmatpush1.msra.mxu0 0.0
    %853 = vmatprep.subr.mxu0 0.0
    %854 = vmatpush1.msra.mxu0 0.0
    %855 = vmatprep.subr.mxu0 0.0
    %856 = vmatpush1.msra.mxu0 0.0
    %857 = vmatprep.subr.mxu0 0.0
    %858 = vmatpush1.msra.mxu0 0.0
    %859 = vmatprep.subr.mxu0 0.0
    %860 = vmatpush1.msra.mxu0 0.0
    %861 = vmatprep.subr.mxu0 0.0
    %862 = vmatpush1.msra.mxu0 0.0
    %863 = vmatprep.subr.mxu0 0.0
    %864 = vmatpush1.msra.mxu0 0.0
    %865 = vmatprep.subr.mxu0 0.0
    %866 = vmatpush1.msra.mxu0 0.0
    %867 = vmatprep.subr.mxu0 0.0
    %868 = vmatpush1.msra.mxu0 0.0
    %869 = vmatprep.subr.mxu0 0.0
    %870 = vmatpush1.msra.mxu0 0.0
    %871 = vmatprep.subr.mxu0 0.0
    %872 = vmatpush1.msra.mxu0 0.0
    %873 = vmatprep.subr.mxu0 0.0
    %874 = vmatpush1.msra.mxu0 0.0
    %875 = vmatprep.subr.mxu0 0.0
    %876 = vmatpush1.msra.mxu0 0.0
    %877 = vmatprep.subr.mxu0 0.0
    %878 = vmatpush1.msra.mxu0 0.0
    %879 = vmatprep.subr.mxu0 0.0
    %880 = vmatpush1.msra.mxu0 0.0
    %881 = vmatprep.subr.mxu0 0.0
    %882 = vmatpush1.msra.mxu0 0.0
    %883 = vmatprep.subr.mxu0 0.0
    %884 = vmatpush1.msra.mxu0 0.0
    %885 = vmatprep.mubr.f32.mxu0 0.0
    %886 = vmatmul.mubr.f32.gmra.mrb[0].mxu0 %v797
    %v887 = vpop.f32.mrb[0].mxu0
    %v888 = vadd.f32 0.0, %v887
    %v889 = vpop.f32.mrb[0].mxu0
    %890 = vmatprep.mubr.f32.mxu0 0.0
    %891 = vmatmul.mubr.f32.gmra.mrb[0].mxu0 %v799
    %v892 = vpop.f32.mrb[0].mxu0
    %v893 = vadd.f32 0.0, %v892
    %v894 = vpop.f32.mrb[0].mxu0
    %895 = vmatprep.mubr.f32.mxu0 0.0
    %896 = vmatmul.mubr.f32.gmra.mrb[0].mxu0 %v801
    %v897 = vpop.f32.mrb[0].mxu0
    %v898 = vadd.f32 0.0, %v897
    %v899 = vpop.f32.mrb[0].mxu0
    %900 = vmatprep.mubr.f32.mxu0 0.0
    %901 = vmatmul.mubr.f32.gmra.mrb[0].mxu0 %v803
    %v902 = vpop.f32.mrb[0].mxu0
    %v903 = vadd.f32 0.0, %v902
    %v904 = vpop.f32.mrb[0].mxu0
    %905 = vmatprep.mubr.f32.mxu0 0.0
    %906 = vmatmul.mubr.f32.gmra.mrb[0].mxu0 %v805
    %v907 = vpop.f32.mrb[0].mxu0
    %v908 = vadd.f32 0.0, %v907
    %v909 = vpop.f32.mrb[0].mxu0
    %910 = vmatprep.mubr.f32.mxu0 0.0
    %911 = vmatmul.mubr.f32.gmra.mrb[0].mxu0 %v807
    %v912 = vpop.f32.mrb[0].mxu0
    %v913 = vadd.f32 0.0, %v912
    %v914 = vpop.f32.mrb[0].mxu0
    %915 = vmatprep.mubr.f32.mxu0 0.0
    %916 = vmatmul.mubr.f32.gmra.mrb[0].mxu0 %v809
    %v917 = vpop.f32.mrb[0].mxu0
    %v918 = vadd.f32 0.0, %v917
    %v919 = vpop.f32.mrb[0].mxu0
    %920 = vmatprep.mubr.f32.mxu0 0.0
    %921 = vmatmul.mubr.f32.gmra.mrb[0].mxu0 %v811
    %v922 = vpop.f32.mrb[0].mxu0
    %v923 = vadd.f32 0.0, %v922
    %v924 = vpop.f32.mrb[0].mxu0
    %925 = vmatprep.mubr.f32.mxu0 0.0
    %926 = vmatmul.mubr.f32.gmra.mrb[0].mxu0 %v813
    %v927 = vpop.f32.mrb[0].mxu0
    %v928 = vadd.f32 0.0, %v927
    %v929 = vpop.f32.mrb[0].mxu0
    %930 = vmatprep.mubr.f32.mxu0 0.0
    %931 = vmatmul.mubr.f32.gmra.mrb[0].mxu0 %v815
    %v932 = vpop.f32.mrb[0].mxu0
    %v933 = vadd.f32 0.0, %v932
    %v934 = vpop.f32.mrb[0].mxu0
    %935 = vmatprep.mubr.f32.mxu0 0.0
    %936 = vmatmul.mubr.f32.gmra.mrb[0].mxu0 %v817
    %v937 = vpop.f32.mrb[0].mxu0
    %v938 = vadd.f32 0.0, %v937
    %v939 = vpop.f32.mrb[0].mxu0
    %940 = vmatprep.mubr.f32.mxu0 0.0
    %941 = vmatmul.mubr.f32.gmra.mrb[0].mxu0 %v819
    %v942 = vpop.f32.mrb[0].mxu0
    %v943 = vadd.f32 0.0, %v942
    %v944 = vpop.f32.mrb[0].mxu0
    %945 = vdwg.mxu0
    %v946 = vadd.f32 %v761, %v888
    %v947 = vadd.f32 %v762, %v893
    %v948 = vadd.f32 %v763, %v898
    %v949 = vadd.f32 %v764, %v903
    %v950 = vadd.f32 %v765, %v908
    %v951 = vadd.f32 %v766, %v913
    %v952 = vadd.f32 %v767, %v918
    %v953 = vadd.f32 %v768, %v923
    %v954 = vadd.f32 %v769, %v928
    %v955 = vadd.f32 %v770, %v933
    %v956 = vadd.f32 %v771, %v938
    %v957 = vadd.f32 %v772, %v943
    %v958 = vld [vmem:[%s3 + $0x20] sm:$0xff]
    %v959 = vrot.slane %v188, 4
    %v960 = vrot.slane %v191, 4
    %v961 = vsel %vm146, %v959, %v960
    %v962 = vrot.slane %v196, 4
    %v963 = vsel %vm146, %v960, %v962
    %v964 = vrot.slane %v199, 4
    %v965 = vsel %vm146, %v962, %v964
    %v966 = vrot.slane %v204, 4
    %v967 = vsel %vm146, %v964, %v966
    %v968 = vrot.slane %v207, 4
    %v969 = vsel %vm146, %v966, %v968
    %v970 = vrot.slane %v212, 4
    %v971 = vsel %vm146, %v968, %v970
    %v972 = vrot.slane %v215, 4
    %v973 = vsel %vm146, %v970, %v972
    %v974 = vrot.slane %v220, 4
    %v975 = vsel %vm146, %v972, %v974
    %v976 = vrot.slane %v223, 4
    %v977 = vsel %vm146, %v974, %v976
    %v978 = vrot.slane %v228, 4
    %v979 = vsel %vm146, %v976, %v978
    %v980 = vrot.slane %v231, 4
    %v981 = vsel %vm146, %v978, %v980
    %v982 = vsel %vm288, %v961, 0
    %v984 = vsel %vm288, %v963, 0
    %v986 = vsel %vm288, %v965, 0
    %v988 = vsel %vm288, %v967, 0
    %v990 = vsel %vm288, %v969, 0
    %v992 = vsel %vm288, %v971, 0
    %v994 = vsel %vm288, %v973, 0
    %v996 = vsel %vm288, %v975, 0
    %v998 = vsel %vm288, %v977, 0
    %v1000 = vsel %vm288, %v979, 0
    %v1002 = vsel %vm288, %v981, 0
    %v1004 = vsel %vm288, %v980, 0
    %1006 = vmatprep.subr.mxu0 0.0
    %1007 = vmatpush1.msra.mxu0 %v958
    %1008 = vmatprep.subr.mxu0 0.0
    %1009 = vmatpush1.msra.mxu0 0.0
    %1010 = vmatprep.subr.mxu0 0.0
    %1011 = vmatpush1.msra.mxu0 0.0
    %1012 = vmatprep.subr.mxu0 0.0
    %1013 = vmatpush1.msra.mxu0 0.0
    %1014 = vmatprep.subr.mxu0 0.0
    %1015 = vmatpush1.msra.mxu0 0.0
    %1016 = vmatprep.subr.mxu0 0.0
    %1017 = vmatpush1.msra.mxu0 0.0
    %1018 = vmatprep.subr.mxu0 0.0
    %1019 = vmatpush1.msra.mxu0 0.0
    %1020 = vmatprep.subr.mxu0 0.0
    %1021 = vmatpush1.msra.mxu0 0.0
    %1022 = vmatprep.subr.mxu0 0.0
    %1023 = vmatpush1.msra.mxu0 0.0
    %1024 = vmatprep.subr.mxu0 0.0
    %1025 = vmatpush1.msra.mxu0 0.0
    %1026 = vmatprep.subr.mxu0 0.0
    %1027 = vmatpush1.msra.mxu0 0.0
    %1028 = vmatprep.subr.mxu0 0.0
    %1029 = vmatpush1.msra.mxu0 0.0
    %1030 = vmatprep.subr.mxu0 0.0
    %1031 = vmatpush1.msra.mxu0 0.0
    %1032 = vmatprep.subr.mxu0 0.0
    %1033 = vmatpush1.msra.mxu0 0.0
    %1034 = vmatprep.subr.mxu0 0.0
    %1035 = vmatpush1.msra.mxu0 0.0
    %1036 = vmatprep.subr.mxu0 0.0
    %1037 = vmatpush1.msra.mxu0 0.0
    %1038 = vmatprep.subr.mxu0 0.0
    %1039 = vmatpush1.msra.mxu0 0.0
    %1040 = vmatprep.subr.mxu0 0.0
    %1041 = vmatpush1.msra.mxu0 0.0
    %1042 = vmatprep.subr.mxu0 0.0
    %1043 = vmatpush1.msra.mxu0 0.0
    %1044 = vmatprep.subr.mxu0 0.0
    %1045 = vmatpush1.msra.mxu0 0.0
    %1046 = vmatprep.subr.mxu0 0.0
    %1047 = vmatpush1.msra.mxu0 0.0
    %1048 = vmatprep.subr.mxu0 0.0
    %1049 = vmatpush1.msra.mxu0 0.0
    %1050 = vmatprep.subr.mxu0 0.0
    %1051 = vmatpush1.msra.mxu0 0.0
    %1052 = vmatprep.subr.mxu0 0.0
    %1053 = vmatpush1.msra.mxu0 0.0
    %1054 = vmatprep.subr.mxu0 0.0
    %1055 = vmatpush1.msra.mxu0 0.0
    %1056 = vmatprep.subr.mxu0 0.0
    %1057 = vmatpush1.msra.mxu0 0.0
    %1058 = vmatprep.subr.mxu0 0.0
    %1059 = vmatpush1.msra.mxu0 0.0
    %1060 = vmatprep.subr.mxu0 0.0
    %1061 = vmatpush1.msra.mxu0 0.0
    %1062 = vmatprep.subr.mxu0 0.0
    %1063 = vmatpush1.msra.mxu0 0.0
    %1064 = vmatprep.subr.mxu0 0.0
    %1065 = vmatpush1.msra.mxu0 0.0
    %1066 = vmatprep.subr.mxu0 0.0
    %1067 = vmatpush1.msra.mxu0 0.0
    %1068 = vmatprep.subr.mxu0 0.0
    %1069 = vmatpush1.msra.mxu0 0.0
    %1070 = vmatprep.mubr.f32.mxu0 0.0
    %1071 = vmatmul.mubr.f32.gmra.mrb[0].mxu0 %v982
    %v1072 = vpop.f32.mrb[0].mxu0
    %v1073 = vadd.f32 0.0, %v1072
    %v1074 = vpop.f32.mrb[0].mxu0
    %1075 = vmatprep.mubr.f32.mxu0 0.0
    %1076 = vmatmul.mubr.f32.gmra.mrb[0].mxu0 %v984
    %v1077 = vpop.f32.mrb[0].mxu0
    %v1078 = vadd.f32 0.0, %v1077
    %v1079 = vpop.f32.mrb[0].mxu0
    %1080 = vmatprep.mubr.f32.mxu0 0.0
    %1081 = vmatmul.mubr.f32.gmra.mrb[0].mxu0 %v986
    %v1082 = vpop.f32.mrb[0].mxu0
    %v1083 = vadd.f32 0.0, %v1082
    %v1084 = vpop.f32.mrb[0].mxu0
    %1085 = vmatprep.mubr.f32.mxu0 0.0
    %1086 = vmatmul.mubr.f32.gmra.mrb[0].mxu0 %v988
    %v1087 = vpop.f32.mrb[0].mxu0
    %v1088 = vadd.f32 0.0, %v1087
    %v1089 = vpop.f32.mrb[0].mxu0
    %1090 = vmatprep.mubr.f32.mxu0 0.0
    %1091 = vmatmul.mubr.f32.gmra.mrb[0].mxu0 %v990
    %v1092 = vpop.f32.mrb[0].mxu0
    %v1093 = vadd.f32 0.0, %v1092
    %v1094 = vpop.f32.mrb[0].mxu0
    %1095 = vmatprep.mubr.f32.mxu0 0.0
    %1096 = vmatmul.mubr.f32.gmra.mrb[0].mxu0 %v992
    %v1097 = vpop.f32.mrb[0].mxu0
    %v1098 = vadd.f32 0.0, %v1097
    %v1099 = vpop.f32.mrb[0].mxu0
    %1100 = vmatprep.mubr.f32.mxu0 0.0
    %1101 = vmatmul.mubr.f32.gmra.mrb[0].mxu0 %v994
    %v1102 = vpop.f32.mrb[0].mxu0
    %v1103 = vadd.f32 0.0, %v1102
    %v1104 = vpop.f32.mrb[0].mxu0
    %1105 = vmatprep.mubr.f32.mxu0 0.0
    %1106 = vmatmul.mubr.f32.gmra.mrb[0].mxu0 %v996
    %v1107 = vpop.f32.mrb[0].mxu0
    %v1108 = vadd.f32 0.0, %v1107
    %v1109 = vpop.f32.mrb[0].mxu0
    %1110 = vmatprep.mubr.f32.mxu0 0.0
    %1111 = vmatmul.mubr.f32.gmra.mrb[0].mxu0 %v998
    %v1112 = vpop.f32.mrb[0].mxu0
    %v1113 = vadd.f32 0.0, %v1112
    %v1114 = vpop.f32.mrb[0].mxu0
    %1115 = vmatprep.mubr.f32.mxu0 0.0
    %1116 = vmatmul.mubr.f32.gmra.mrb[0].mxu0 %v1000
    %v1117 = vpop.f32.mrb[0].mxu0
    %v1118 = vadd.f32 0.0, %v1117
    %v1119 = vpop.f32.mrb[0].mxu0
    %1120 = vmatprep.mubr.f32.mxu0 0.0
    %1121 = vmatmul.mubr.f32.gmra.mrb[0].mxu0 %v1002
    %v1122 = vpop.f32.mrb[0].mxu0
    %v1123 = vadd.f32 0.0, %v1122
    %v1124 = vpop.f32.mrb[0].mxu0
    %1125 = vmatprep.mubr.f32.mxu0 0.0
    %1126 = vmatmul.mubr.f32.gmra.mrb[0].mxu0 %v1004
    %v1127 = vpop.f32.mrb[0].mxu0
    %v1128 = vadd.f32 0.0, %v1127
    %v1129 = vpop.f32.mrb[0].mxu0
    %1130 = vdwg.mxu0
    %v1131 = vadd.f32 %v946, %v1073
    %v1132 = vadd.f32 %v947, %v1078
    %v1133 = vadd.f32 %v948, %v1083
    %v1134 = vadd.f32 %v949, %v1088
    %v1135 = vadd.f32 %v950, %v1093
    %v1136 = vadd.f32 %v951, %v1098
    %v1137 = vadd.f32 %v952, %v1103
    %v1138 = vadd.f32 %v953, %v1108
    %v1139 = vadd.f32 %v954, %v1113
    %v1140 = vadd.f32 %v955, %v1118
    %v1141 = vadd.f32 %v956, %v1123
    %v1142 = vadd.f32 %v957, %v1128
    %v1143 = vld [vmem:[%s3 + $0x28] sm:$0xff]
    %v1145 = vsel %vm288, %v236, 0
    %1147 = vmatprep.subr.mxu0 0.0
    %1148 = vmatpush1.msra.mxu0 %v1143
    %1149 = vmatprep.subr.mxu0 0.0
    %1150 = vmatpush1.msra.mxu0 0.0
    %1151 = vmatprep.subr.mxu0 0.0
    %1152 = vmatpush1.msra.mxu0 0.0
    %1153 = vmatprep.subr.mxu0 0.0
    %1154 = vmatpush1.msra.mxu0 0.0
    %1155 = vmatprep.subr.mxu0 0.0
    %1156 = vmatpush1.msra.mxu0 0.0
    %1157 = vmatprep.subr.mxu0 0.0
    %1158 = vmatpush1.msra.mxu0 0.0
    %1159 = vmatprep.subr.mxu0 0.0
    %1160 = vmatpush1.msra.mxu0 0.0
    %1161 = vmatprep.subr.mxu0 0.0
    %1162 = vmatpush1.msra.mxu0 0.0
    %1163 = vmatprep.subr.mxu0 0.0
    %1164 = vmatpush1.msra.mxu0 0.0
    %1165 = vmatprep.subr.mxu0 0.0
    %1166 = vmatpush1.msra.mxu0 0.0
    %1167 = vmatprep.subr.mxu0 0.0
    %1168 = vmatpush1.msra.mxu0 0.0
    %1169 = vmatprep.subr.mxu0 0.0
    %1170 = vmatpush1.msra.mxu0 0.0
    %1171 = vmatprep.subr.mxu0 0.0
    %1172 = vmatpush1.msra.mxu0 0.0
    %1173 = vmatprep.subr.mxu0 0.0
    %1174 = vmatpush1.msra.mxu0 0.0
    %1175 = vmatprep.subr.mxu0 0.0
    %1176 = vmatpush1.msra.mxu0 0.0
    %1177 = vmatprep.subr.mxu0 0.0
    %1178 = vmatpush1.msra.mxu0 0.0
    %1179 = vmatprep.subr.mxu0 0.0
    %1180 = vmatpush1.msra.mxu0 0.0
    %1181 = vmatprep.subr.mxu0 0.0
    %1182 = vmatpush1.msra.mxu0 0.0
    %1183 = vmatprep.subr.mxu0 0.0
    %1184 = vmatpush1.msra.mxu0 0.0
    %1185 = vmatprep.subr.mxu0 0.0
    %1186 = vmatpush1.msra.mxu0 0.0
    %1187 = vmatprep.subr.mxu0 0.0
    %1188 = vmatpush1.msra.mxu0 0.0
    %1189 = vmatprep.subr.mxu0 0.0
    %1190 = vmatpush1.msra.mxu0 0.0
    %1191 = vmatprep.subr.mxu0 0.0
    %1192 = vmatpush1.msra.mxu0 0.0
    %1193 = vmatprep.subr.mxu0 0.0
    %1194 = vmatpush1.msra.mxu0 0.0
    %1195 = vmatprep.subr.mxu0 0.0
    %1196 = vmatpush1.msra.mxu0 0.0
    %1197 = vmatprep.subr.mxu0 0.0
    %1198 = vmatpush1.msra.mxu0 0.0
    %1199 = vmatprep.subr.mxu0 0.0
    %1200 = vmatpush1.msra.mxu0 0.0
    %1201 = vmatprep.subr.mxu0 0.0
    %1202 = vmatpush1.msra.mxu0 0.0
    %1203 = vmatprep.subr.mxu0 0.0
    %1204 = vmatpush1.msra.mxu0 0.0
    %1205 = vmatprep.subr.mxu0 0.0
    %1206 = vmatpush1.msra.mxu0 0.0
    %1207 = vmatprep.subr.mxu0 0.0
    %1208 = vmatpush1.msra.mxu0 0.0
    %1209 = vmatprep.subr.mxu0 0.0
    %1210 = vmatpush1.msra.mxu0 0.0
    %1211 = vmatprep.mubr.f32.mxu0 0.0
    %1212 = vmatmul.mubr.f32.gmra.mrb[0].mxu0 %v440
    %v1213 = vpop.f32.mrb[0].mxu0
    %v1214 = vadd.f32 0.0, %v1213
    %v1215 = vpop.f32.mrb[0].mxu0
    %1216 = vmatprep.mubr.f32.mxu0 0.0
    %1217 = vmatmul.mubr.f32.gmra.mrb[0].mxu0 %v442
    %v1218 = vpop.f32.mrb[0].mxu0
    %v1219 = vadd.f32 0.0, %v1218
    %v1220 = vpop.f32.mrb[0].mxu0
    %1221 = vmatprep.mubr.f32.mxu0 0.0
    %1222 = vmatmul.mubr.f32.gmra.mrb[0].mxu0 %v444
    %v1223 = vpop.f32.mrb[0].mxu0
    %v1224 = vadd.f32 0.0, %v1223
    %v1225 = vpop.f32.mrb[0].mxu0
    %1226 = vmatprep.mubr.f32.mxu0 0.0
    %1227 = vmatmul.mubr.f32.gmra.mrb[0].mxu0 %v446
    %v1228 = vpop.f32.mrb[0].mxu0
    %v1229 = vadd.f32 0.0, %v1228
    %v1230 = vpop.f32.mrb[0].mxu0
    %1231 = vmatprep.mubr.f32.mxu0 0.0
    %1232 = vmatmul.mubr.f32.gmra.mrb[0].mxu0 %v448
    %v1233 = vpop.f32.mrb[0].mxu0
    %v1234 = vadd.f32 0.0, %v1233
    %v1235 = vpop.f32.mrb[0].mxu0
    %1236 = vmatprep.mubr.f32.mxu0 0.0
    %1237 = vmatmul.mubr.f32.gmra.mrb[0].mxu0 %v450
    %v1238 = vpop.f32.mrb[0].mxu0
    %v1239 = vadd.f32 0.0, %v1238
    %v1240 = vpop.f32.mrb[0].mxu0
    %1241 = vmatprep.mubr.f32.mxu0 0.0
    %1242 = vmatmul.mubr.f32.gmra.mrb[0].mxu0 %v452
    %v1243 = vpop.f32.mrb[0].mxu0
    %v1244 = vadd.f32 0.0, %v1243
    %v1245 = vpop.f32.mrb[0].mxu0
    %1246 = vmatprep.mubr.f32.mxu0 0.0
    %1247 = vmatmul.mubr.f32.gmra.mrb[0].mxu0 %v454
    %v1248 = vpop.f32.mrb[0].mxu0
    %v1249 = vadd.f32 0.0, %v1248
    %v1250 = vpop.f32.mrb[0].mxu0
    %1251 = vmatprep.mubr.f32.mxu0 0.0
    %1252 = vmatmul.mubr.f32.gmra.mrb[0].mxu0 %v456
    %v1253 = vpop.f32.mrb[0].mxu0
    %v1254 = vadd.f32 0.0, %v1253
    %v1255 = vpop.f32.mrb[0].mxu0
    %1256 = vmatprep.mubr.f32.mxu0 0.0
    %1257 = vmatmul.mubr.f32.gmra.mrb[0].mxu0 %v458
    %v1258 = vpop.f32.mrb[0].mxu0
    %v1259 = vadd.f32 0.0, %v1258
    %v1260 = vpop.f32.mrb[0].mxu0
    %1261 = vmatprep.mubr.f32.mxu0 0.0
    %1262 = vmatmul.mubr.f32.gmra.mrb[0].mxu0 %v460
    %v1263 = vpop.f32.mrb[0].mxu0
    %v1264 = vadd.f32 0.0, %v1263
    %v1265 = vpop.f32.mrb[0].mxu0
    %1266 = vmatprep.mubr.f32.mxu0 0.0
    %1267 = vmatmul.mubr.f32.gmra.mrb[0].mxu0 %v1145
    %v1268 = vpop.f32.mrb[0].mxu0
    %v1269 = vadd.f32 0.0, %v1268
    %v1270 = vpop.f32.mrb[0].mxu0
    %1271 = vdwg.mxu0
    %v1272 = vadd.f32 %v1131, %v1214
    %v1273 = vadd.f32 %v1132, %v1219
    %v1274 = vadd.f32 %v1133, %v1224
    %v1275 = vadd.f32 %v1134, %v1229
    %v1276 = vadd.f32 %v1135, %v1234
    %v1277 = vadd.f32 %v1136, %v1239
    %v1278 = vadd.f32 %v1137, %v1244
    %v1279 = vadd.f32 %v1138, %v1249
    %v1280 = vadd.f32 %v1139, %v1254
    %v1281 = vadd.f32 %v1140, %v1259
    %v1282 = vadd.f32 %v1141, %v1264
    %v1283 = vadd.f32 %v1142, %v1269
    %v1284 = vld [vmem:[%s3 + $0x30] sm:$0xff]
    %v1285 = vrot.slane %v236, 1
    %v1286 = vsel %vm264, %v286, %v1285
    %v1287 = vsel %vm288, %v1286, 0
    %v1289 = vsel %vm288, %v1285, 0
    %1291 = vmatprep.subr.mxu0 0.0
    %1292 = vmatpush1.msra.mxu0 %v1284
    %1293 = vmatprep.subr.mxu0 0.0
    %1294 = vmatpush1.msra.mxu0 0.0
    %1295 = vmatprep.subr.mxu0 0.0
    %1296 = vmatpush1.msra.mxu0 0.0
    %1297 = vmatprep.subr.mxu0 0.0
    %1298 = vmatpush1.msra.mxu0 0.0
    %1299 = vmatprep.subr.mxu0 0.0
    %1300 = vmatpush1.msra.mxu0 0.0
    %1301 = vmatprep.subr.mxu0 0.0
    %1302 = vmatpush1.msra.mxu0 0.0
    %1303 = vmatprep.subr.mxu0 0.0
    %1304 = vmatpush1.msra.mxu0 0.0
    %1305 = vmatprep.subr.mxu0 0.0
    %1306 = vmatpush1.msra.mxu0 0.0
    %1307 = vmatprep.subr.mxu0 0.0
    %1308 = vmatpush1.msra.mxu0 0.0
    %1309 = vmatprep.subr.mxu0 0.0
    %1310 = vmatpush1.msra.mxu0 0.0
    %1311 = vmatprep.subr.mxu0 0.0
    %1312 = vmatpush1.msra.mxu0 0.0
    %1313 = vmatprep.subr.mxu0 0.0
    %1314 = vmatpush1.msra.mxu0 0.0
    %1315 = vmatprep.subr.mxu0 0.0
    %1316 = vmatpush1.msra.mxu0 0.0
    %1317 = vmatprep.subr.mxu0 0.0
    %1318 = vmatpush1.msra.mxu0 0.0
    %1319 = vmatprep.subr.mxu0 0.0
    %1320 = vmatpush1.msra.mxu0 0.0
    %1321 = vmatprep.subr.mxu0 0.0
    %1322 = vmatpush1.msra.mxu0 0.0
    %1323 = vmatprep.subr.mxu0 0.0
    %1324 = vmatpush1.msra.mxu0 0.0
    %1325 = vmatprep.subr.mxu0 0.0
    %1326 = vmatpush1.msra.mxu0 0.0
    %1327 = vmatprep.subr.mxu0 0.0
    %1328 = vmatpush1.msra.mxu0 0.0
    %1329 = vmatprep.subr.mxu0 0.0
    %1330 = vmatpush1.msra.mxu0 0.0
    %1331 = vmatprep.subr.mxu0 0.0
    %1332 = vmatpush1.msra.mxu0 0.0
    %1333 = vmatprep.subr.mxu0 0.0
    %1334 = vmatpush1.msra.mxu0 0.0
    %1335 = vmatprep.subr.mxu0 0.0
    %1336 = vmatpush1.msra.mxu0 0.0
    %1337 = vmatprep.subr.mxu0 0.0
    %1338 = vmatpush1.msra.mxu0 0.0
    %1339 = vmatprep.subr.mxu0 0.0
    %1340 = vmatpush1.msra.mxu0 0.0
    %1341 = vmatprep.subr.mxu0 0.0
    %1342 = vmatpush1.msra.mxu0 0.0
    %1343 = vmatprep.subr.mxu0 0.0
    %1344 = vmatpush1.msra.mxu0 0.0
    %1345 = vmatprep.subr.mxu0 0.0
    %1346 = vmatpush1.msra.mxu0 0.0
    %1347 = vmatprep.subr.mxu0 0.0
    %1348 = vmatpush1.msra.mxu0 0.0
    %1349 = vmatprep.subr.mxu0 0.0
    %1350 = vmatpush1.msra.mxu0 0.0
    %1351 = vmatprep.subr.mxu0 0.0
    %1352 = vmatpush1.msra.mxu0 0.0
    %1353 = vmatprep.subr.mxu0 0.0
    %1354 = vmatpush1.msra.mxu0 0.0
    %1355 = vmatprep.mubr.f32.mxu0 0.0
    %1356 = vmatmul.mubr.f32.gmra.mrb[0].mxu0 %v291
    %v1357 = vpop.f32.mrb[0].mxu0
    %v1358 = vadd.f32 0.0, %v1357
    %v1359 = vpop.f32.mrb[0].mxu0
    %1360 = vmatprep.mubr.f32.mxu0 0.0
    %1361 = vmatmul.mubr.f32.gmra.mrb[0].mxu0 %v293
    %v1362 = vpop.f32.mrb[0].mxu0
    %v1363 = vadd.f32 0.0, %v1362
    %v1364 = vpop.f32.mrb[0].mxu0
    %1365 = vmatprep.mubr.f32.mxu0 0.0
    %1366 = vmatmul.mubr.f32.gmra.mrb[0].mxu0 %v295
    %v1367 = vpop.f32.mrb[0].mxu0
    %v1368 = vadd.f32 0.0, %v1367
    %v1369 = vpop.f32.mrb[0].mxu0
    %1370 = vmatprep.mubr.f32.mxu0 0.0
    %1371 = vmatmul.mubr.f32.gmra.mrb[0].mxu0 %v297
    %v1372 = vpop.f32.mrb[0].mxu0
    %v1373 = vadd.f32 0.0, %v1372
    %v1374 = vpop.f32.mrb[0].mxu0
    %1375 = vmatprep.mubr.f32.mxu0 0.0
    %1376 = vmatmul.mubr.f32.gmra.mrb[0].mxu0 %v299
    %v1377 = vpop.f32.mrb[0].mxu0
    %v1378 = vadd.f32 0.0, %v1377
    %v1379 = vpop.f32.mrb[0].mxu0
    %1380 = vmatprep.mubr.f32.mxu0 0.0
    %1381 = vmatmul.mubr.f32.gmra.mrb[0].mxu0 %v301
    %v1382 = vpop.f32.mrb[0].mxu0
    %v1383 = vadd.f32 0.0, %v1382
    %v1384 = vpop.f32.mrb[0].mxu0
    %1385 = vmatprep.mubr.f32.mxu0 0.0
    %1386 = vmatmul.mubr.f32.gmra.mrb[0].mxu0 %v303
    %v1387 = vpop.f32.mrb[0].mxu0
    %v1388 = vadd.f32 0.0, %v1387
    %v1389 = vpop.f32.mrb[0].mxu0
    %1390 = vmatprep.mubr.f32.mxu0 0.0
    %1391 = vmatmul.mubr.f32.gmra.mrb[0].mxu0 %v305
    %v1392 = vpop.f32.mrb[0].mxu0
    %v1393 = vadd.f32 0.0, %v1392
    %v1394 = vpop.f32.mrb[0].mxu0
    %1395 = vmatprep.mubr.f32.mxu0 0.0
    %1396 = vmatmul.mubr.f32.gmra.mrb[0].mxu0 %v307
    %v1397 = vpop.f32.mrb[0].mxu0
    %v1398 = vadd.f32 0.0, %v1397
    %v1399 = vpop.f32.mrb[0].mxu0
    %1400 = vmatprep.mubr.f32.mxu0 0.0
    %1401 = vmatmul.mubr.f32.gmra.mrb[0].mxu0 %v309
    %v1402 = vpop.f32.mrb[0].mxu0
    %v1403 = vadd.f32 0.0, %v1402
    %v1404 = vpop.f32.mrb[0].mxu0
    %1405 = vmatprep.mubr.f32.mxu0 0.0
    %1406 = vmatmul.mubr.f32.gmra.mrb[0].mxu0 %v1287
    %v1407 = vpop.f32.mrb[0].mxu0
    %v1408 = vadd.f32 0.0, %v1407
    %v1409 = vpop.f32.mrb[0].mxu0
    %1410 = vmatprep.mubr.f32.mxu0 0.0
    %1411 = vmatmul.mubr.f32.gmra.mrb[0].mxu0 %v1289
    %v1412 = vpop.f32.mrb[0].mxu0
    %v1413 = vadd.f32 0.0, %v1412
    %v1414 = vpop.f32.mrb[0].mxu0
    %1415 = vdwg.mxu0
    %v1416 = vadd.f32 %v1272, %v1358
    %v1417 = vadd.f32 %v1273, %v1363
    %v1418 = vadd.f32 %v1274, %v1368
    %v1419 = vadd.f32 %v1275, %v1373
    %v1420 = vadd.f32 %v1276, %v1378
    %v1421 = vadd.f32 %v1277, %v1383
    %v1422 = vadd.f32 %v1278, %v1388
    %v1423 = vadd.f32 %v1279, %v1393
    %v1424 = vadd.f32 %v1280, %v1398
    %v1425 = vadd.f32 %v1281, %v1403
    %v1426 = vadd.f32 %v1282, %v1408
    %v1427 = vadd.f32 %v1283, %v1413
    %v1428 = vld [vmem:[%s3 + $0x38] sm:$0xff]
    %v1429 = vrot.slane %v236, 2
    %v1430 = vsel %vm588, %v610, %v1429
    %v1431 = vsel %vm288, %v1430, 0
    %v1433 = vsel %vm288, %v1429, 0
    %1435 = vmatprep.subr.mxu0 0.0
    %1436 = vmatpush1.msra.mxu0 %v1428
    %1437 = vmatprep.subr.mxu0 0.0
    %1438 = vmatpush1.msra.mxu0 0.0
    %1439 = vmatprep.subr.mxu0 0.0
    %1440 = vmatpush1.msra.mxu0 0.0
    %1441 = vmatprep.subr.mxu0 0.0
    %1442 = vmatpush1.msra.mxu0 0.0
    %1443 = vmatprep.subr.mxu0 0.0
    %1444 = vmatpush1.msra.mxu0 0.0
    %1445 = vmatprep.subr.mxu0 0.0
    %1446 = vmatpush1.msra.mxu0 0.0
    %1447 = vmatprep.subr.mxu0 0.0
    %1448 = vmatpush1.msra.mxu0 0.0
    %1449 = vmatprep.subr.mxu0 0.0
    %1450 = vmatpush1.msra.mxu0 0.0
    %1451 = vmatprep.subr.mxu0 0.0
    %1452 = vmatpush1.msra.mxu0 0.0
    %1453 = vmatprep.subr.mxu0 0.0
    %1454 = vmatpush1.msra.mxu0 0.0
    %1455 = vmatprep.subr.mxu0 0.0
    %1456 = vmatpush1.msra.mxu0 0.0
    %1457 = vmatprep.subr.mxu0 0.0
    %1458 = vmatpush1.msra.mxu0 0.0
    %1459 = vmatprep.subr.mxu0 0.0
    %1460 = vmatpush1.msra.mxu0 0.0
    %1461 = vmatprep.subr.mxu0 0.0
    %1462 = vmatpush1.msra.mxu0 0.0
    %1463 = vmatprep.subr.mxu0 0.0
    %1464 = vmatpush1.msra.mxu0 0.0
    %1465 = vmatprep.subr.mxu0 0.0
    %1466 = vmatpush1.msra.mxu0 0.0
    %1467 = vmatprep.subr.mxu0 0.0
    %1468 = vmatpush1.msra.mxu0 0.0
    %1469 = vmatprep.subr.mxu0 0.0
    %1470 = vmatpush1.msra.mxu0 0.0
    %1471 = vmatprep.subr.mxu0 0.0
    %1472 = vmatpush1.msra.mxu0 0.0
    %1473 = vmatprep.subr.mxu0 0.0
    %1474 = vmatpush1.msra.mxu0 0.0
    %1475 = vmatprep.subr.mxu0 0.0
    %1476 = vmatpush1.msra.mxu0 0.0
    %1477 = vmatprep.subr.mxu0 0.0
    %1478 = vmatpush1.msra.mxu0 0.0
    %1479 = vmatprep.subr.mxu0 0.0
    %1480 = vmatpush1.msra.mxu0 0.0
    %1481 = vmatprep.subr.mxu0 0.0
    %1482 = vmatpush1.msra.mxu0 0.0
    %1483 = vmatprep.subr.mxu0 0.0
    %1484 = vmatpush1.msra.mxu0 0.0
    %1485 = vmatprep.subr.mxu0 0.0
    %1486 = vmatpush1.msra.mxu0 0.0
    %1487 = vmatprep.subr.mxu0 0.0
    %1488 = vmatpush1.msra.mxu0 0.0
    %1489 = vmatprep.subr.mxu0 0.0
    %1490 = vmatpush1.msra.mxu0 0.0
    %1491 = vmatprep.subr.mxu0 0.0
    %1492 = vmatpush1.msra.mxu0 0.0
    %1493 = vmatprep.subr.mxu0 0.0
    %1494 = vmatpush1.msra.mxu0 0.0
    %1495 = vmatprep.subr.mxu0 0.0
    %1496 = vmatpush1.msra.mxu0 0.0
    %1497 = vmatprep.subr.mxu0 0.0
    %1498 = vmatpush1.msra.mxu0 0.0
    %1499 = vmatprep.mubr.f32.mxu0 0.0
    %1500 = vmatmul.mubr.f32.gmra.mrb[0].mxu0 %v614
    %v1501 = vpop.f32.mrb[0].mxu0
    %v1502 = vadd.f32 0.0, %v1501
    %v1503 = vpop.f32.mrb[0].mxu0
    %1504 = vmatprep.mubr.f32.mxu0 0.0
    %1505 = vmatmul.mubr.f32.gmra.mrb[0].mxu0 %v616
    %v1506 = vpop.f32.mrb[0].mxu0
    %v1507 = vadd.f32 0.0, %v1506
    %v1508 = vpop.f32.mrb[0].mxu0
    %1509 = vmatprep.mubr.f32.mxu0 0.0
    %1510 = vmatmul.mubr.f32.gmra.mrb[0].mxu0 %v618
    %v1511 = vpop.f32.mrb[0].mxu0
    %v1512 = vadd.f32 0.0, %v1511
    %v1513 = vpop.f32.mrb[0].mxu0
    %1514 = vmatprep.mubr.f32.mxu0 0.0
    %1515 = vmatmul.mubr.f32.gmra.mrb[0].mxu0 %v620
    %v1516 = vpop.f32.mrb[0].mxu0
    %v1517 = vadd.f32 0.0, %v1516
    %v1518 = vpop.f32.mrb[0].mxu0
    %1519 = vmatprep.mubr.f32.mxu0 0.0
    %1520 = vmatmul.mubr.f32.gmra.mrb[0].mxu0 %v622
    %v1521 = vpop.f32.mrb[0].mxu0
    %v1522 = vadd.f32 0.0, %v1521
    %v1523 = vpop.f32.mrb[0].mxu0
    %1524 = vmatprep.mubr.f32.mxu0 0.0
    %1525 = vmatmul.mubr.f32.gmra.mrb[0].mxu0 %v624
    %v1526 = vpop.f32.mrb[0].mxu0
    %v1527 = vadd.f32 0.0, %v1526
    %v1528 = vpop.f32.mrb[0].mxu0
    %1529 = vmatprep.mubr.f32.mxu0 0.0
    %1530 = vmatmul.mubr.f32.gmra.mrb[0].mxu0 %v626
    %v1531 = vpop.f32.mrb[0].mxu0
    %v1532 = vadd.f32 0.0, %v1531
    %v1533 = vpop.f32.mrb[0].mxu0
    %1534 = vmatprep.mubr.f32.mxu0 0.0
    %1535 = vmatmul.mubr.f32.gmra.mrb[0].mxu0 %v628
    %v1536 = vpop.f32.mrb[0].mxu0
    %v1537 = vadd.f32 0.0, %v1536
    %v1538 = vpop.f32.mrb[0].mxu0
    %1539 = vmatprep.mubr.f32.mxu0 0.0
    %1540 = vmatmul.mubr.f32.gmra.mrb[0].mxu0 %v630
    %v1541 = vpop.f32.mrb[0].mxu0
    %v1542 = vadd.f32 0.0, %v1541
    %v1543 = vpop.f32.mrb[0].mxu0
    %1544 = vmatprep.mubr.f32.mxu0 0.0
    %1545 = vmatmul.mubr.f32.gmra.mrb[0].mxu0 %v632
    %v1546 = vpop.f32.mrb[0].mxu0
    %v1547 = vadd.f32 0.0, %v1546
    %v1548 = vpop.f32.mrb[0].mxu0
    %1549 = vmatprep.mubr.f32.mxu0 0.0
    %1550 = vmatmul.mubr.f32.gmra.mrb[0].mxu0 %v1431
    %v1551 = vpop.f32.mrb[0].mxu0
    %v1552 = vadd.f32 0.0, %v1551
    %v1553 = vpop.f32.mrb[0].mxu0
    %1554 = vmatprep.mubr.f32.mxu0 0.0
    %1555 = vmatmul.mubr.f32.gmra.mrb[0].mxu0 %v1433
    %v1556 = vpop.f32.mrb[0].mxu0
    %v1557 = vadd.f32 0.0, %v1556
    %v1558 = vpop.f32.mrb[0].mxu0
    %1559 = vdwg.mxu0
    %v1560 = vadd.f32 %v1416, %v1502
    %v1561 = vadd.f32 %v1417, %v1507
    %v1562 = vadd.f32 %v1418, %v1512
    %v1563 = vadd.f32 %v1419, %v1517
    %v1564 = vadd.f32 %v1420, %v1522
    %v1565 = vadd.f32 %v1421, %v1527
    %v1566 = vadd.f32 %v1422, %v1532
    %v1567 = vadd.f32 %v1423, %v1537
    %v1568 = vadd.f32 %v1424, %v1542
    %v1569 = vadd.f32 %v1425, %v1547
    %v1570 = vadd.f32 %v1426, %v1552
    %v1571 = vadd.f32 %v1427, %v1557
    %v1572 = vld [vmem:[%s3 + $0x40] sm:$0xff]
    %v1573 = vrot.slane %v236, 3
    %v1574 = vsel %vm147, %v795, %v1573
    %v1575 = vsel %vm288, %v1574, 0
    %v1577 = vsel %vm288, %v1573, 0
    %1579 = vmatprep.subr.mxu0 0.0
    %1580 = vmatpush1.msra.mxu0 %v1572
    %1581 = vmatprep.subr.mxu0 0.0
    %1582 = vmatpush1.msra.mxu0 0.0
    %1583 = vmatprep.subr.mxu0 0.0
    %1584 = vmatpush1.msra.mxu0 0.0
    %1585 = vmatprep.subr.mxu0 0.0
    %1586 = vmatpush1.msra.mxu0 0.0
    %1587 = vmatprep.subr.mxu0 0.0
    %1588 = vmatpush1.msra.mxu0 0.0
    %1589 = vmatprep.subr.mxu0 0.0
    %1590 = vmatpush1.msra.mxu0 0.0
    %1591 = vmatprep.subr.mxu0 0.0
    %1592 = vmatpush1.msra.mxu0 0.0
    %1593 = vmatprep.subr.mxu0 0.0
    %1594 = vmatpush1.msra.mxu0 0.0
    %1595 = vmatprep.subr.mxu0 0.0
    %1596 = vmatpush1.msra.mxu0 0.0
    %1597 = vmatprep.subr.mxu0 0.0
    %1598 = vmatpush1.msra.mxu0 0.0
    %1599 = vmatprep.subr.mxu0 0.0
    %1600 = vmatpush1.msra.mxu0 0.0
    %1601 = vmatprep.subr.mxu0 0.0
    %1602 = vmatpush1.msra.mxu0 0.0
    %1603 = vmatprep.subr.mxu0 0.0
    %1604 = vmatpush1.msra.mxu0 0.0
    %1605 = vmatprep.subr.mxu0 0.0
    %1606 = vmatpush1.msra.mxu0 0.0
    %1607 = vmatprep.subr.mxu0 0.0
    %1608 = vmatpush1.msra.mxu0 0.0
    %1609 = vmatprep.subr.mxu0 0.0
    %1610 = vmatpush1.msra.mxu0 0.0
    %1611 = vmatprep.subr.mxu0 0.0
    %1612 = vmatpush1.msra.mxu0 0.0
    %1613 = vmatprep.subr.mxu0 0.0
    %1614 = vmatpush1.msra.mxu0 0.0
    %1615 = vmatprep.subr.mxu0 0.0
    %1616 = vmatpush1.msra.mxu0 0.0
    %1617 = vmatprep.subr.mxu0 0.0
    %1618 = vmatpush1.msra.mxu0 0.0
    %1619 = vmatprep.subr.mxu0 0.0
    %1620 = vmatpush1.msra.mxu0 0.0
    %1621 = vmatprep.subr.mxu0 0.0
    %1622 = vmatpush1.msra.mxu0 0.0
    %1623 = vmatprep.subr.mxu0 0.0
    %1624 = vmatpush1.msra.mxu0 0.0
    %1625 = vmatprep.subr.mxu0 0.0
    %1626 = vmatpush1.msra.mxu0 0.0
    %1627 = vmatprep.subr.mxu0 0.0
    %1628 = vmatpush1.msra.mxu0 0.0
    %1629 = vmatprep.subr.mxu0 0.0
    %1630 = vmatpush1.msra.mxu0 0.0
    %1631 = vmatprep.subr.mxu0 0.0
    %1632 = vmatpush1.msra.mxu0 0.0
    %1633 = vmatprep.subr.mxu0 0.0
    %1634 = vmatpush1.msra.mxu0 0.0
    %1635 = vmatprep.subr.mxu0 0.0
    %1636 = vmatpush1.msra.mxu0 0.0
    %1637 = vmatprep.subr.mxu0 0.0
    %1638 = vmatpush1.msra.mxu0 0.0
    %1639 = vmatprep.subr.mxu0 0.0
    %1640 = vmatpush1.msra.mxu0 0.0
    %1641 = vmatprep.subr.mxu0 0.0
    %1642 = vmatpush1.msra.mxu0 0.0
    %1643 = vmatprep.mubr.f32.mxu0 0.0
    %1644 = vmatmul.mubr.f32.gmra.mrb[0].mxu0 %v799
    %v1645 = vpop.f32.mrb[0].mxu0
    %v1646 = vadd.f32 0.0, %v1645
    %v1647 = vpop.f32.mrb[0].mxu0
    %1648 = vmatprep.mubr.f32.mxu0 0.0
    %1649 = vmatmul.mubr.f32.gmra.mrb[0].mxu0 %v801
    %v1650 = vpop.f32.mrb[0].mxu0
    %v1651 = vadd.f32 0.0, %v1650
    %v1652 = vpop.f32.mrb[0].mxu0
    %1653 = vmatprep.mubr.f32.mxu0 0.0
    %1654 = vmatmul.mubr.f32.gmra.mrb[0].mxu0 %v803
    %v1655 = vpop.f32.mrb[0].mxu0
    %v1656 = vadd.f32 0.0, %v1655
    %v1657 = vpop.f32.mrb[0].mxu0
    %1658 = vmatprep.mubr.f32.mxu0 0.0
    %1659 = vmatmul.mubr.f32.gmra.mrb[0].mxu0 %v805
    %v1660 = vpop.f32.mrb[0].mxu0
    %v1661 = vadd.f32 0.0, %v1660
    %v1662 = vpop.f32.mrb[0].mxu0
    %1663 = vmatprep.mubr.f32.mxu0 0.0
    %1664 = vmatmul.mubr.f32.gmra.mrb[0].mxu0 %v807
    %v1665 = vpop.f32.mrb[0].mxu0
    %v1666 = vadd.f32 0.0, %v1665
    %v1667 = vpop.f32.mrb[0].mxu0
    %1668 = vmatprep.mubr.f32.mxu0 0.0
    %1669 = vmatmul.mubr.f32.gmra.mrb[0].mxu0 %v809
    %v1670 = vpop.f32.mrb[0].mxu0
    %v1671 = vadd.f32 0.0, %v1670
    %v1672 = vpop.f32.mrb[0].mxu0
    %1673 = vmatprep.mubr.f32.mxu0 0.0
    %1674 = vmatmul.mubr.f32.gmra.mrb[0].mxu0 %v811
    %v1675 = vpop.f32.mrb[0].mxu0
    %v1676 = vadd.f32 0.0, %v1675
    %v1677 = vpop.f32.mrb[0].mxu0
    %1678 = vmatprep.mubr.f32.mxu0 0.0
    %1679 = vmatmul.mubr.f32.gmra.mrb[0].mxu0 %v813
    %v1680 = vpop.f32.mrb[0].mxu0
    %v1681 = vadd.f32 0.0, %v1680
    %v1682 = vpop.f32.mrb[0].mxu0
    %1683 = vmatprep.mubr.f32.mxu0 0.0
    %1684 = vmatmul.mubr.f32.gmra.mrb[0].mxu0 %v815
    %v1685 = vpop.f32.mrb[0].mxu0
    %v1686 = vadd.f32 0.0, %v1685
    %v1687 = vpop.f32.mrb[0].mxu0
    %1688 = vmatprep.mubr.f32.mxu0 0.0
    %1689 = vmatmul.mubr.f32.gmra.mrb[0].mxu0 %v817
    %v1690 = vpop.f32.mrb[0].mxu0
    %v1691 = vadd.f32 0.0, %v1690
    %v1692 = vpop.f32.mrb[0].mxu0
    %1693 = vmatprep.mubr.f32.mxu0 0.0
    %1694 = vmatmul.mubr.f32.gmra.mrb[0].mxu0 %v1575
    %v1695 = vpop.f32.mrb[0].mxu0
    %v1696 = vadd.f32 0.0, %v1695
    %v1697 = vpop.f32.mrb[0].mxu0
    %1698 = vmatprep.mubr.f32.mxu0 0.0
    %1699 = vmatmul.mubr.f32.gmra.mrb[0].mxu0 %v1577
    %v1700 = vpop.f32.mrb[0].mxu0
    %v1701 = vadd.f32 0.0, %v1700
    %v1702 = vpop.f32.mrb[0].mxu0
    %1703 = vdwg.mxu0
    %v1704 = vadd.f32 %v1560, %v1646
    %v1705 = vadd.f32 %v1561, %v1651
    %v1706 = vadd.f32 %v1562, %v1656
    %v1707 = vadd.f32 %v1563, %v1661
    %v1708 = vadd.f32 %v1564, %v1666
    %v1709 = vadd.f32 %v1565, %v1671
    %v1710 = vadd.f32 %v1566, %v1676
    %v1711 = vadd.f32 %v1567, %v1681
    %v1712 = vadd.f32 %v1568, %v1686
    %v1713 = vadd.f32 %v1569, %v1691
    %v1714 = vadd.f32 %v1570, %v1696
    %v1715 = vadd.f32 %v1571, %v1701
    %v1716 = vld [vmem:[%s3 + $0x48] sm:$0xff]
    %v1717 = vrot.slane %v236, 4
    %v1718 = vsel %vm146, %v980, %v1717
    %v1719 = vsel %vm288, %v1718, 0
    %v1721 = vsel %vm288, %v1717, 0
    %1723 = vmatprep.subr.mxu0 0.0
    %1724 = vmatpush1.msra.mxu0 %v1716
    %1725 = vmatprep.subr.mxu0 0.0
    %1726 = vmatpush1.msra.mxu0 0.0
    %1727 = vmatprep.subr.mxu0 0.0
    %1728 = vmatpush1.msra.mxu0 0.0
    %1729 = vmatprep.subr.mxu0 0.0
    %1730 = vmatpush1.msra.mxu0 0.0
    %1731 = vmatprep.subr.mxu0 0.0
    %1732 = vmatpush1.msra.mxu0 0.0
    %1733 = vmatprep.subr.mxu0 0.0
    %1734 = vmatpush1.msra.mxu0 0.0
    %1735 = vmatprep.subr.mxu0 0.0
    %1736 = vmatpush1.msra.mxu0 0.0
    %1737 = vmatprep.subr.mxu0 0.0
    %1738 = vmatpush1.msra.mxu0 0.0
    %1739 = vmatprep.subr.mxu0 0.0
    %1740 = vmatpush1.msra.mxu0 0.0
    %1741 = vmatprep.subr.mxu0 0.0
    %1742 = vmatpush1.msra.mxu0 0.0
    %1743 = vmatprep.subr.mxu0 0.0
    %1744 = vmatpush1.msra.mxu0 0.0
    %1745 = vmatprep.subr.mxu0 0.0
    %1746 = vmatpush1.msra.mxu0 0.0
    %1747 = vmatprep.subr.mxu0 0.0
    %1748 = vmatpush1.msra.mxu0 0.0
    %1749 = vmatprep.subr.mxu0 0.0
    %1750 = vmatpush1.msra.mxu0 0.0
    %1751 = vmatprep.subr.mxu0 0.0
    %1752 = vmatpush1.msra.mxu0 0.0
    %1753 = vmatprep.subr.mxu0 0.0
    %1754 = vmatpush1.msra.mxu0 0.0
    %1755 = vmatprep.subr.mxu0 0.0
    %1756 = vmatpush1.msra.mxu0 0.0
    %1757 = vmatprep.subr.mxu0 0.0
    %1758 = vmatpush1.msra.mxu0 0.0
    %1759 = vmatprep.subr.mxu0 0.0
    %1760 = vmatpush1.msra.mxu0 0.0
    %1761 = vmatprep.subr.mxu0 0.0
    %1762 = vmatpush1.msra.mxu0 0.0
    %1763 = vmatprep.subr.mxu0 0.0
    %1764 = vmatpush1.msra.mxu0 0.0
    %1765 = vmatprep.subr.mxu0 0.0
    %1766 = vmatpush1.msra.mxu0 0.0
    %1767 = vmatprep.subr.mxu0 0.0
    %1768 = vmatpush1.msra.mxu0 0.0
    %1769 = vmatprep.subr.mxu0 0.0
    %1770 = vmatpush1.msra.mxu0 0.0
    %1771 = vmatprep.subr.mxu0 0.0
    %1772 = vmatpush1.msra.mxu0 0.0
    %1773 = vmatprep.subr.mxu0 0.0
    %1774 = vmatpush1.msra.mxu0 0.0
    %1775 = vmatprep.subr.mxu0 0.0
    %1776 = vmatpush1.msra.mxu0 0.0
    %1777 = vmatprep.subr.mxu0 0.0
    %1778 = vmatpush1.msra.mxu0 0.0
    %1779 = vmatprep.subr.mxu0 0.0
    %1780 = vmatpush1.msra.mxu0 0.0
    %1781 = vmatprep.subr.mxu0 0.0
    %1782 = vmatpush1.msra.mxu0 0.0
    %1783 = vmatprep.subr.mxu0 0.0
    %1784 = vmatpush1.msra.mxu0 0.0
    %1785 = vmatprep.subr.mxu0 0.0
    %1786 = vmatpush1.msra.mxu0 0.0
    %1787 = vmatprep.mubr.f32.mxu0 0.0
    %1788 = vmatmul.mubr.f32.gmra.mrb[0].mxu0 %v984
    %v1789 = vpop.f32.mrb[0].mxu0
    %v1790 = vadd.f32 0.0, %v1789
    %v1791 = vpop.f32.mrb[0].mxu0
    %1792 = vmatprep.mubr.f32.mxu0 0.0
    %1793 = vmatmul.mubr.f32.gmra.mrb[0].mxu0 %v986
    %v1794 = vpop.f32.mrb[0].mxu0
    %v1795 = vadd.f32 0.0, %v1794
    %v1796 = vpop.f32.mrb[0].mxu0
    %1797 = vmatprep.mubr.f32.mxu0 0.0
    %1798 = vmatmul.mubr.f32.gmra.mrb[0].mxu0 %v988
    %v1799 = vpop.f32.mrb[0].mxu0
    %v1800 = vadd.f32 0.0, %v1799
    %v1801 = vpop.f32.mrb[0].mxu0
    %1802 = vmatprep.mubr.f32.mxu0 0.0
    %1803 = vmatmul.mubr.f32.gmra.mrb[0].mxu0 %v990
    %v1804 = vpop.f32.mrb[0].mxu0
    %v1805 = vadd.f32 0.0, %v1804
    %v1806 = vpop.f32.mrb[0].mxu0
    %1807 = vmatprep.mubr.f32.mxu0 0.0
    %1808 = vmatmul.mubr.f32.gmra.mrb[0].mxu0 %v992
    %v1809 = vpop.f32.mrb[0].mxu0
    %v1810 = vadd.f32 0.0, %v1809
    %v1811 = vpop.f32.mrb[0].mxu0
    %1812 = vmatprep.mubr.f32.mxu0 0.0
    %1813 = vmatmul.mubr.f32.gmra.mrb[0].mxu0 %v994
    %v1814 = vpop.f32.mrb[0].mxu0
    %v1815 = vadd.f32 0.0, %v1814
    %v1816 = vpop.f32.mrb[0].mxu0
    %1817 = vmatprep.mubr.f32.mxu0 0.0
    %1818 = vmatmul.mubr.f32.gmra.mrb[0].mxu0 %v996
    %v1819 = vpop.f32.mrb[0].mxu0
    %v1820 = vadd.f32 0.0, %v1819
    %v1821 = vpop.f32.mrb[0].mxu0
    %1822 = vmatprep.mubr.f32.mxu0 0.0
    %1823 = vmatmul.mubr.f32.gmra.mrb[0].mxu0 %v998
    %v1824 = vpop.f32.mrb[0].mxu0
    %v1825 = vadd.f32 0.0, %v1824
    %v1826 = vpop.f32.mrb[0].mxu0
    %1827 = vmatprep.mubr.f32.mxu0 0.0
    %1828 = vmatmul.mubr.f32.gmra.mrb[0].mxu0 %v1000
    %v1829 = vpop.f32.mrb[0].mxu0
    %v1830 = vadd.f32 0.0, %v1829
    %v1831 = vpop.f32.mrb[0].mxu0
    %1832 = vmatprep.mubr.f32.mxu0 0.0
    %1833 = vmatmul.mubr.f32.gmra.mrb[0].mxu0 %v1002
    %v1834 = vpop.f32.mrb[0].mxu0
    %v1835 = vadd.f32 0.0, %v1834
    %v1836 = vpop.f32.mrb[0].mxu0
    %1837 = vmatprep.mubr.f32.mxu0 0.0
    %1838 = vmatmul.mubr.f32.gmra.mrb[0].mxu0 %v1719
    %v1839 = vpop.f32.mrb[0].mxu0
    %v1840 = vadd.f32 0.0, %v1839
    %v1841 = vpop.f32.mrb[0].mxu0
    %1842 = vmatprep.mubr.f32.mxu0 0.0
    %1843 = vmatmul.mubr.f32.gmra.mrb[0].mxu0 %v1721
    %v1844 = vpop.f32.mrb[0].mxu0
    %v1845 = vadd.f32 0.0, %v1844
    %v1846 = vpop.f32.mrb[0].mxu0
    %1847 = vdwg.mxu0
    %v1848 = vadd.f32 %v1704, %v1790
    %v1849 = vadd.f32 %v1705, %v1795
    %v1850 = vadd.f32 %v1706, %v1800
    %v1851 = vadd.f32 %v1707, %v1805
    %v1852 = vadd.f32 %v1708, %v1810
    %v1853 = vadd.f32 %v1709, %v1815
    %v1854 = vadd.f32 %v1710, %v1820
    %v1855 = vadd.f32 %v1711, %v1825
    %v1856 = vadd.f32 %v1712, %v1830
    %v1857 = vadd.f32 %v1713, %v1835
    %v1858 = vadd.f32 %v1714, %v1840
    %v1859 = vadd.f32 %v1715, %v1845
    %v1860 = vld [vmem:[%s3 + $0x50] sm:$0xff]
    %v1862 = vsel %vm288, %v239, 0
    %1864 = vmatprep.subr.mxu0 0.0
    %1865 = vmatpush1.msra.mxu0 %v1860
    %1866 = vmatprep.subr.mxu0 0.0
    %1867 = vmatpush1.msra.mxu0 0.0
    %1868 = vmatprep.subr.mxu0 0.0
    %1869 = vmatpush1.msra.mxu0 0.0
    %1870 = vmatprep.subr.mxu0 0.0
    %1871 = vmatpush1.msra.mxu0 0.0
    %1872 = vmatprep.subr.mxu0 0.0
    %1873 = vmatpush1.msra.mxu0 0.0
    %1874 = vmatprep.subr.mxu0 0.0
    %1875 = vmatpush1.msra.mxu0 0.0
    %1876 = vmatprep.subr.mxu0 0.0
    %1877 = vmatpush1.msra.mxu0 0.0
    %1878 = vmatprep.subr.mxu0 0.0
    %1879 = vmatpush1.msra.mxu0 0.0
    %1880 = vmatprep.subr.mxu0 0.0
    %1881 = vmatpush1.msra.mxu0 0.0
    %1882 = vmatprep.subr.mxu0 0.0
    %1883 = vmatpush1.msra.mxu0 0.0
    %1884 = vmatprep.subr.mxu0 0.0
    %1885 = vmatpush1.msra.mxu0 0.0
    %1886 = vmatprep.subr.mxu0 0.0
    %1887 = vmatpush1.msra.mxu0 0.0
    %1888 = vmatprep.subr.mxu0 0.0
    %1889 = vmatpush1.msra.mxu0 0.0
    %1890 = vmatprep.subr.mxu0 0.0
    %1891 = vmatpush1.msra.mxu0 0.0
    %1892 = vmatprep.subr.mxu0 0.0
    %1893 = vmatpush1.msra.mxu0 0.0
    %1894 = vmatprep.subr.mxu0 0.0
    %1895 = vmatpush1.msra.mxu0 0.0
    %1896 = vmatprep.subr.mxu0 0.0
    %1897 = vmatpush1.msra.mxu0 0.0
    %1898 = vmatprep.subr.mxu0 0.0
    %1899 = vmatpush1.msra.mxu0 0.0
    %1900 = vmatprep.subr.mxu0 0.0
    %1901 = vmatpush1.msra.mxu0 0.0
    %1902 = vmatprep.subr.mxu0 0.0
    %1903 = vmatpush1.msra.mxu0 0.0
    %1904 = vmatprep.subr.mxu0 0.0
    %1905 = vmatpush1.msra.mxu0 0.0
    %1906 = vmatprep.subr.mxu0 0.0
    %1907 = vmatpush1.msra.mxu0 0.0
    %1908 = vmatprep.subr.mxu0 0.0
    %1909 = vmatpush1.msra.mxu0 0.0
    %1910 = vmatprep.subr.mxu0 0.0
    %1911 = vmatpush1.msra.mxu0 0.0
    %1912 = vmatprep.subr.mxu0 0.0
    %1913 = vmatpush1.msra.mxu0 0.0
    %1914 = vmatprep.subr.mxu0 0.0
    %1915 = vmatpush1.msra.mxu0 0.0
    %1916 = vmatprep.subr.mxu0 0.0
    %1917 = vmatpush1.msra.mxu0 0.0
    %1918 = vmatprep.subr.mxu0 0.0
    %1919 = vmatpush1.msra.mxu0 0.0
    %1920 = vmatprep.subr.mxu0 0.0
    %1921 = vmatpush1.msra.mxu0 0.0
    %1922 = vmatprep.subr.mxu0 0.0
    %1923 = vmatpush1.msra.mxu0 0.0
    %1924 = vmatprep.subr.mxu0 0.0
    %1925 = vmatpush1.msra.mxu0 0.0
    %1926 = vmatprep.subr.mxu0 0.0
    %1927 = vmatpush1.msra.mxu0 0.0
    %1928 = vmatprep.mubr.f32.mxu0 0.0
    %1929 = vmatmul.mubr.f32.gmra.mrb[0].mxu0 %v442
    %v1930 = vpop.f32.mrb[0].mxu0
    %v1931 = vadd.f32 0.0, %v1930
    %v1932 = vpop.f32.mrb[0].mxu0
    %1933 = vmatprep.mubr.f32.mxu0 0.0
    %1934 = vmatmul.mubr.f32.gmra.mrb[0].mxu0 %v444
    %v1935 = vpop.f32.mrb[0].mxu0
    %v1936 = vadd.f32 0.0, %v1935
    %v1937 = vpop.f32.mrb[0].mxu0
    %1938 = vmatprep.mubr.f32.mxu0 0.0
    %1939 = vmatmul.mubr.f32.gmra.mrb[0].mxu0 %v446
    %v1940 = vpop.f32.mrb[0].mxu0
    %v1941 = vadd.f32 0.0, %v1940
    %v1942 = vpop.f32.mrb[0].mxu0
    %1943 = vmatprep.mubr.f32.mxu0 0.0
    %1944 = vmatmul.mubr.f32.gmra.mrb[0].mxu0 %v448
    %v1945 = vpop.f32.mrb[0].mxu0
    %v1946 = vadd.f32 0.0, %v1945
    %v1947 = vpop.f32.mrb[0].mxu0
    %1948 = vmatprep.mubr.f32.mxu0 0.0
    %1949 = vmatmul.mubr.f32.gmra.mrb[0].mxu0 %v450
    %v1950 = vpop.f32.mrb[0].mxu0
    %v1951 = vadd.f32 0.0, %v1950
    %v1952 = vpop.f32.mrb[0].mxu0
    %1953 = vmatprep.mubr.f32.mxu0 0.0
    %1954 = vmatmul.mubr.f32.gmra.mrb[0].mxu0 %v452
    %v1955 = vpop.f32.mrb[0].mxu0
    %v1956 = vadd.f32 0.0, %v1955
    %v1957 = vpop.f32.mrb[0].mxu0
    %1958 = vmatprep.mubr.f32.mxu0 0.0
    %1959 = vmatmul.mubr.f32.gmra.mrb[0].mxu0 %v454
    %v1960 = vpop.f32.mrb[0].mxu0
    %v1961 = vadd.f32 0.0, %v1960
    %v1962 = vpop.f32.mrb[0].mxu0
    %1963 = vmatprep.mubr.f32.mxu0 0.0
    %1964 = vmatmul.mubr.f32.gmra.mrb[0].mxu0 %v456
    %v1965 = vpop.f32.mrb[0].mxu0
    %v1966 = vadd.f32 0.0, %v1965
    %v1967 = vpop.f32.mrb[0].mxu0
    %1968 = vmatprep.mubr.f32.mxu0 0.0
    %1969 = vmatmul.mubr.f32.gmra.mrb[0].mxu0 %v458
    %v1970 = vpop.f32.mrb[0].mxu0
    %v1971 = vadd.f32 0.0, %v1970
    %v1972 = vpop.f32.mrb[0].mxu0
    %1973 = vmatprep.mubr.f32.mxu0 0.0
    %1974 = vmatmul.mubr.f32.gmra.mrb[0].mxu0 %v460
    %v1975 = vpop.f32.mrb[0].mxu0
    %v1976 = vadd.f32 0.0, %v1975
    %v1977 = vpop.f32.mrb[0].mxu0
    %1978 = vmatprep.mubr.f32.mxu0 0.0
    %1979 = vmatmul.mubr.f32.gmra.mrb[0].mxu0 %v1145
    %v1980 = vpop.f32.mrb[0].mxu0
    %v1981 = vadd.f32 0.0, %v1980
    %v1982 = vpop.f32.mrb[0].mxu0
    %1983 = vmatprep.mubr.f32.mxu0 0.0
    %1984 = vmatmul.mubr.f32.gmra.mrb[0].mxu0 %v1862
    %v1985 = vpop.f32.mrb[0].mxu0
    %v1986 = vadd.f32 0.0, %v1985
    %v1987 = vpop.f32.mrb[0].mxu0
    %1988 = vdwg.mxu0
    %v1989 = vadd.f32 %v1848, %v1931
    %v1990 = vadd.f32 %v1849, %v1936
    %v1991 = vadd.f32 %v1850, %v1941
    %v1992 = vadd.f32 %v1851, %v1946
    %v1993 = vadd.f32 %v1852, %v1951
    %v1994 = vadd.f32 %v1853, %v1956
    %v1995 = vadd.f32 %v1854, %v1961
    %v1996 = vadd.f32 %v1855, %v1966
    %v1997 = vadd.f32 %v1856, %v1971
    %v1998 = vadd.f32 %v1857, %v1976
    %v1999 = vadd.f32 %v1858, %v1981
    %v2000 = vadd.f32 %v1859, %v1986
    %v2001 = vld [vmem:[%s3 + $0x58] sm:$0xff]
    %v2002 = vrot.slane %v239, 1
    %v2003 = vsel %vm264, %v1285, %v2002
    %v2004 = vsel %vm288, %v2003, 0
    %v2006 = vsel %vm288, %v2002, 0
    %2008 = vmatprep.subr.mxu0 0.0
    %2009 = vmatpush1.msra.mxu0 %v2001
    %2010 = vmatprep.subr.mxu0 0.0
    %2011 = vmatpush1.msra.mxu0 0.0
    %2012 = vmatprep.subr.mxu0 0.0
    %2013 = vmatpush1.msra.mxu0 0.0
    %2014 = vmatprep.subr.mxu0 0.0
    %2015 = vmatpush1.msra.mxu0 0.0
    %2016 = vmatprep.subr.mxu0 0.0
    %2017 = vmatpush1.msra.mxu0 0.0
    %2018 = vmatprep.subr.mxu0 0.0
    %2019 = vmatpush1.msra.mxu0 0.0
    %2020 = vmatprep.subr.mxu0 0.0
    %2021 = vmatpush1.msra.mxu0 0.0
    %2022 = vmatprep.subr.mxu0 0.0
    %2023 = vmatpush1.msra.mxu0 0.0
    %2024 = vmatprep.subr.mxu0 0.0
    %2025 = vmatpush1.msra.mxu0 0.0
    %2026 = vmatprep.subr.mxu0 0.0
    %2027 = vmatpush1.msra.mxu0 0.0
    %2028 = vmatprep.subr.mxu0 0.0
    %2029 = vmatpush1.msra.mxu0 0.0
    %2030 = vmatprep.subr.mxu0 0.0
    %2031 = vmatpush1.msra.mxu0 0.0
    %2032 = vmatprep.subr.mxu0 0.0
    %2033 = vmatpush1.msra.mxu0 0.0
    %2034 = vmatprep.subr.mxu0 0.0
    %2035 = vmatpush1.msra.mxu0 0.0
    %2036 = vmatprep.subr.mxu0 0.0
    %2037 = vmatpush1.msra.mxu0 0.0
    %2038 = vmatprep.subr.mxu0 0.0
    %2039 = vmatpush1.msra.mxu0 0.0
    %2040 = vmatprep.subr.mxu0 0.0
    %2041 = vmatpush1.msra.mxu0 0.0
    %2042 = vmatprep.subr.mxu0 0.0
    %2043 = vmatpush1.msra.mxu0 0.0
    %2044 = vmatprep.subr.mxu0 0.0
    %2045 = vmatpush1.msra.mxu0 0.0
    %2046 = vmatprep.subr.mxu0 0.0
    %2047 = vmatpush1.msra.mxu0 0.0
    %2048 = vmatprep.subr.mxu0 0.0
    %2049 = vmatpush1.msra.mxu0 0.0
    %2050 = vmatprep.subr.mxu0 0.0
    %2051 = vmatpush1.msra.mxu0 0.0
    %2052 = vmatprep.subr.mxu0 0.0
    %2053 = vmatpush1.msra.mxu0 0.0
    %2054 = vmatprep.subr.mxu0 0.0
    %2055 = vmatpush1.msra.mxu0 0.0
    %2056 = vmatprep.subr.mxu0 0.0
    %2057 = vmatpush1.msra.mxu0 0.0
    %2058 = vmatprep.subr.mxu0 0.0
    %2059 = vmatpush1.msra.mxu0 0.0
    %2060 = vmatprep.subr.mxu0 0.0
    %2061 = vmatpush1.msra.mxu0 0.0
    %2062 = vmatprep.subr.mxu0 0.0
    %2063 = vmatpush1.msra.mxu0 0.0
    %2064 = vmatprep.subr.mxu0 0.0
    %2065 = vmatpush1.msra.mxu0 0.0
    %2066 = vmatprep.subr.mxu0 0.0
    %2067 = vmatpush1.msra.mxu0 0.0
    %2068 = vmatprep.subr.mxu0 0.0
    %2069 = vmatpush1.msra.mxu0 0.0
    %2070 = vmatprep.subr.mxu0 0.0
    %2071 = vmatpush1.msra.mxu0 0.0
    %2072 = vmatprep.mubr.f32.mxu0 0.0
    %2073 = vmatmul.mubr.f32.gmra.mrb[0].mxu0 %v293
    %v2074 = vpop.f32.mrb[0].mxu0
    %v2075 = vadd.f32 0.0, %v2074
    %v2076 = vpop.f32.mrb[0].mxu0
    %2077 = vmatprep.mubr.f32.mxu0 0.0
    %2078 = vmatmul.mubr.f32.gmra.mrb[0].mxu0 %v295
    %v2079 = vpop.f32.mrb[0].mxu0
    %v2080 = vadd.f32 0.0, %v2079
    %v2081 = vpop.f32.mrb[0].mxu0
    %2082 = vmatprep.mubr.f32.mxu0 0.0
    %2083 = vmatmul.mubr.f32.gmra.mrb[0].mxu0 %v297
    %v2084 = vpop.f32.mrb[0].mxu0
    %v2085 = vadd.f32 0.0, %v2084
    %v2086 = vpop.f32.mrb[0].mxu0
    %2087 = vmatprep.mubr.f32.mxu0 0.0
    %2088 = vmatmul.mubr.f32.gmra.mrb[0].mxu0 %v299
    %v2089 = vpop.f32.mrb[0].mxu0
    %v2090 = vadd.f32 0.0, %v2089
    %v2091 = vpop.f32.mrb[0].mxu0
    %2092 = vmatprep.mubr.f32.mxu0 0.0
    %2093 = vmatmul.mubr.f32.gmra.mrb[0].mxu0 %v301
    %v2094 = vpop.f32.mrb[0].mxu0
    %v2095 = vadd.f32 0.0, %v2094
    %v2096 = vpop.f32.mrb[0].mxu0
    %2097 = vmatprep.mubr.f32.mxu0 0.0
    %2098 = vmatmul.mubr.f32.gmra.mrb[0].mxu0 %v303
    %v2099 = vpop.f32.mrb[0].mxu0
    %v2100 = vadd.f32 0.0, %v2099
    %v2101 = vpop.f32.mrb[0].mxu0
    %2102 = vmatprep.mubr.f32.mxu0 0.0
    %2103 = vmatmul.mubr.f32.gmra.mrb[0].mxu0 %v305
    %v2104 = vpop.f32.mrb[0].mxu0
    %v2105 = vadd.f32 0.0, %v2104
    %v2106 = vpop.f32.mrb[0].mxu0
    %2107 = vmatprep.mubr.f32.mxu0 0.0
    %2108 = vmatmul.mubr.f32.gmra.mrb[0].mxu0 %v307
    %v2109 = vpop.f32.mrb[0].mxu0
    %v2110 = vadd.f32 0.0, %v2109
    %v2111 = vpop.f32.mrb[0].mxu0
    %2112 = vmatprep.mubr.f32.mxu0 0.0
    %2113 = vmatmul.mubr.f32.gmra.mrb[0].mxu0 %v309
    %v2114 = vpop.f32.mrb[0].mxu0
    %v2115 = vadd.f32 0.0, %v2114
    %v2116 = vpop.f32.mrb[0].mxu0
    %2117 = vmatprep.mubr.f32.mxu0 0.0
    %2118 = vmatmul.mubr.f32.gmra.mrb[0].mxu0 %v1287
    %v2119 = vpop.f32.mrb[0].mxu0
    %v2120 = vadd.f32 0.0, %v2119
    %v2121 = vpop.f32.mrb[0].mxu0
    %2122 = vmatprep.mubr.f32.mxu0 0.0
    %2123 = vmatmul.mubr.f32.gmra.mrb[0].mxu0 %v2004
    %v2124 = vpop.f32.mrb[0].mxu0
    %v2125 = vadd.f32 0.0, %v2124
    %v2126 = vpop.f32.mrb[0].mxu0
    %2127 = vmatprep.mubr.f32.mxu0 0.0
    %2128 = vmatmul.mubr.f32.gmra.mrb[0].mxu0 %v2006
    %v2129 = vpop.f32.mrb[0].mxu0
    %v2130 = vadd.f32 0.0, %v2129
    %v2131 = vpop.f32.mrb[0].mxu0
    %2132 = vdwg.mxu0
    %v2133 = vadd.f32 %v1989, %v2075
    %v2134 = vadd.f32 %v1990, %v2080
    %v2135 = vadd.f32 %v1991, %v2085
    %v2136 = vadd.f32 %v1992, %v2090
    %v2137 = vadd.f32 %v1993, %v2095
    %v2138 = vadd.f32 %v1994, %v2100
    %v2139 = vadd.f32 %v1995, %v2105
    %v2140 = vadd.f32 %v1996, %v2110
    %v2141 = vadd.f32 %v1997, %v2115
    %v2142 = vadd.f32 %v1998, %v2120
    %v2143 = vadd.f32 %v1999, %v2125
    %v2144 = vadd.f32 %v2000, %v2130
    %v2145 = vld [vmem:[%s3 + $0x60] sm:$0xff]
    %v2146 = vrot.slane %v239, 2
    %v2147 = vsel %vm588, %v1429, %v2146
    %v2148 = vsel %vm288, %v2147, 0
    %v2150 = vsel %vm288, %v2146, 0
    %2152 = vmatprep.subr.mxu0 0.0
    %2153 = vmatpush1.msra.mxu0 %v2145
    %2154 = vmatprep.subr.mxu0 0.0
    %2155 = vmatpush1.msra.mxu0 0.0
    %2156 = vmatprep.subr.mxu0 0.0
    %2157 = vmatpush1.msra.mxu0 0.0
    %2158 = vmatprep.subr.mxu0 0.0
    %2159 = vmatpush1.msra.mxu0 0.0
    %2160 = vmatprep.subr.mxu0 0.0
    %2161 = vmatpush1.msra.mxu0 0.0
    %2162 = vmatprep.subr.mxu0 0.0
    %2163 = vmatpush1.msra.mxu0 0.0
    %2164 = vmatprep.subr.mxu0 0.0
    %2165 = vmatpush1.msra.mxu0 0.0
    %2166 = vmatprep.subr.mxu0 0.0
    %2167 = vmatpush1.msra.mxu0 0.0
    %2168 = vmatprep.subr.mxu0 0.0
    %2169 = vmatpush1.msra.mxu0 0.0
    %2170 = vmatprep.subr.mxu0 0.0
    %2171 = vmatpush1.msra.mxu0 0.0
    %2172 = vmatprep.subr.mxu0 0.0
    %2173 = vmatpush1.msra.mxu0 0.0
    %2174 = vmatprep.subr.mxu0 0.0
    %2175 = vmatpush1.msra.mxu0 0.0
    %2176 = vmatprep.subr.mxu0 0.0
    %2177 = vmatpush1.msra.mxu0 0.0
    %2178 = vmatprep.subr.mxu0 0.0
    %2179 = vmatpush1.msra.mxu0 0.0
    %2180 = vmatprep.subr.mxu0 0.0
    %2181 = vmatpush1.msra.mxu0 0.0
    %2182 = vmatprep.subr.mxu0 0.0
    %2183 = vmatpush1.msra.mxu0 0.0
    %2184 = vmatprep.subr.mxu0 0.0
    %2185 = vmatpush1.msra.mxu0 0.0
    %2186 = vmatprep.subr.mxu0 0.0
    %2187 = vmatpush1.msra.mxu0 0.0
    %2188 = vmatprep.subr.mxu0 0.0
    %2189 = vmatpush1.msra.mxu0 0.0
    %2190 = vmatprep.subr.mxu0 0.0
    %2191 = vmatpush1.msra.mxu0 0.0
    %2192 = vmatprep.subr.mxu0 0.0
    %2193 = vmatpush1.msra.mxu0 0.0
    %2194 = vmatprep.subr.mxu0 0.0
    %2195 = vmatpush1.msra.mxu0 0.0
    %2196 = vmatprep.subr.mxu0 0.0
    %2197 = vmatpush1.msra.mxu0 0.0
    %2198 = vmatprep.subr.mxu0 0.0
    %2199 = vmatpush1.msra.mxu0 0.0
    %2200 = vmatprep.subr.mxu0 0.0
    %2201 = vmatpush1.msra.mxu0 0.0
    %2202 = vmatprep.subr.mxu0 0.0
    %2203 = vmatpush1.msra.mxu0 0.0
    %2204 = vmatprep.subr.mxu0 0.0
    %2205 = vmatpush1.msra.mxu0 0.0
    %2206 = vmatprep.subr.mxu0 0.0
    %2207 = vmatpush1.msra.mxu0 0.0
    %2208 = vmatprep.subr.mxu0 0.0
    %2209 = vmatpush1.msra.mxu0 0.0
    %2210 = vmatprep.subr.mxu0 0.0
    %2211 = vmatpush1.msra.mxu0 0.0
    %2212 = vmatprep.subr.mxu0 0.0
    %2213 = vmatpush1.msra.mxu0 0.0
    %2214 = vmatprep.subr.mxu0 0.0
    %2215 = vmatpush1.msra.mxu0 0.0
    %2216 = vmatprep.mubr.f32.mxu0 0.0
    %2217 = vmatmul.mubr.f32.gmra.mrb[0].mxu0 %v616
    %v2218 = vpop.f32.mrb[0].mxu0
    %v2219 = vadd.f32 0.0, %v2218
    %v2220 = vpop.f32.mrb[0].mxu0
    %2221 = vmatprep.mubr.f32.mxu0 0.0
    %2222 = vmatmul.mubr.f32.gmra.mrb[0].mxu0 %v618
    %v2223 = vpop.f32.mrb[0].mxu0
    %v2224 = vadd.f32 0.0, %v2223
    %v2225 = vpop.f32.mrb[0].mxu0
    %2226 = vmatprep.mubr.f32.mxu0 0.0
    %2227 = vmatmul.mubr.f32.gmra.mrb[0].mxu0 %v620
    %v2228 = vpop.f32.mrb[0].mxu0
    %v2229 = vadd.f32 0.0, %v2228
    %v2230 = vpop.f32.mrb[0].mxu0
    %2231 = vmatprep.mubr.f32.mxu0 0.0
    %2232 = vmatmul.mubr.f32.gmra.mrb[0].mxu0 %v622
    %v2233 = vpop.f32.mrb[0].mxu0
    %v2234 = vadd.f32 0.0, %v2233
    %v2235 = vpop.f32.mrb[0].mxu0
    %2236 = vmatprep.mubr.f32.mxu0 0.0
    %2237 = vmatmul.mubr.f32.gmra.mrb[0].mxu0 %v624
    %v2238 = vpop.f32.mrb[0].mxu0
    %v2239 = vadd.f32 0.0, %v2238
    %v2240 = vpop.f32.mrb[0].mxu0
    %2241 = vmatprep.mubr.f32.mxu0 0.0
    %2242 = vmatmul.mubr.f32.gmra.mrb[0].mxu0 %v626
    %v2243 = vpop.f32.mrb[0].mxu0
    %v2244 = vadd.f32 0.0, %v2243
    %v2245 = vpop.f32.mrb[0].mxu0
    %2246 = vmatprep.mubr.f32.mxu0 0.0
    %2247 = vmatmul.mubr.f32.gmra.mrb[0].mxu0 %v628
    %v2248 = vpop.f32.mrb[0].mxu0
    %v2249 = vadd.f32 0.0, %v2248
    %v2250 = vpop.f32.mrb[0].mxu0
    %2251 = vmatprep.mubr.f32.mxu0 0.0
    %2252 = vmatmul.mubr.f32.gmra.mrb[0].mxu0 %v630
    %v2253 = vpop.f32.mrb[0].mxu0
    %v2254 = vadd.f32 0.0, %v2253
    %v2255 = vpop.f32.mrb[0].mxu0
    %2256 = vmatprep.mubr.f32.mxu0 0.0
    %2257 = vmatmul.mubr.f32.gmra.mrb[0].mxu0 %v632
    %v2258 = vpop.f32.mrb[0].mxu0
    %v2259 = vadd.f32 0.0, %v2258
    %v2260 = vpop.f32.mrb[0].mxu0
    %2261 = vmatprep.mubr.f32.mxu0 0.0
    %2262 = vmatmul.mubr.f32.gmra.mrb[0].mxu0 %v1431
    %v2263 = vpop.f32.mrb[0].mxu0
    %v2264 = vadd.f32 0.0, %v2263
    %v2265 = vpop.f32.mrb[0].mxu0
    %2266 = vmatprep.mubr.f32.mxu0 0.0
    %2267 = vmatmul.mubr.f32.gmra.mrb[0].mxu0 %v2148
    %v2268 = vpop.f32.mrb[0].mxu0
    %v2269 = vadd.f32 0.0, %v2268
    %v2270 = vpop.f32.mrb[0].mxu0
    %2271 = vmatprep.mubr.f32.mxu0 0.0
    %2272 = vmatmul.mubr.f32.gmra.mrb[0].mxu0 %v2150
    %v2273 = vpop.f32.mrb[0].mxu0
    %v2274 = vadd.f32 0.0, %v2273
    %v2275 = vpop.f32.mrb[0].mxu0
    %2276 = vdwg.mxu0
    %v2277 = vadd.f32 %v2133, %v2219
    %v2278 = vadd.f32 %v2134, %v2224
    %v2279 = vadd.f32 %v2135, %v2229
    %v2280 = vadd.f32 %v2136, %v2234
    %v2281 = vadd.f32 %v2137, %v2239
    %v2282 = vadd.f32 %v2138, %v2244
    %v2283 = vadd.f32 %v2139, %v2249
    %v2284 = vadd.f32 %v2140, %v2254
    %v2285 = vadd.f32 %v2141, %v2259
    %v2286 = vadd.f32 %v2142, %v2264
    %v2287 = vadd.f32 %v2143, %v2269
    %v2288 = vadd.f32 %v2144, %v2274
    %v2289 = vld [vmem:[%s3 + $0x68] sm:$0xff]
    %v2290 = vrot.slane %v239, 3
    %v2291 = vsel %vm147, %v1573, %v2290
    %v2292 = vsel %vm288, %v2291, 0
    %v2294 = vsel %vm288, %v2290, 0
    %2296 = vmatprep.subr.mxu0 0.0
    %2297 = vmatpush1.msra.mxu0 %v2289
    %2298 = vmatprep.subr.mxu0 0.0
    %2299 = vmatpush1.msra.mxu0 0.0
    %2300 = vmatprep.subr.mxu0 0.0
    %2301 = vmatpush1.msra.mxu0 0.0
    %2302 = vmatprep.subr.mxu0 0.0
    %2303 = vmatpush1.msra.mxu0 0.0
    %2304 = vmatprep.subr.mxu0 0.0
    %2305 = vmatpush1.msra.mxu0 0.0
    %2306 = vmatprep.subr.mxu0 0.0
    %2307 = vmatpush1.msra.mxu0 0.0
    %2308 = vmatprep.subr.mxu0 0.0
    %2309 = vmatpush1.msra.mxu0 0.0
    %2310 = vmatprep.subr.mxu0 0.0
    %2311 = vmatpush1.msra.mxu0 0.0
    %2312 = vmatprep.subr.mxu0 0.0
    %2313 = vmatpush1.msra.mxu0 0.0
    %2314 = vmatprep.subr.mxu0 0.0
    %2315 = vmatpush1.msra.mxu0 0.0
    %2316 = vmatprep.subr.mxu0 0.0
    %2317 = vmatpush1.msra.mxu0 0.0
    %2318 = vmatprep.subr.mxu0 0.0
    %2319 = vmatpush1.msra.mxu0 0.0
    %2320 = vmatprep.subr.mxu0 0.0
    %2321 = vmatpush1.msra.mxu0 0.0
    %2322 = vmatprep.subr.mxu0 0.0
    %2323 = vmatpush1.msra.mxu0 0.0
    %2324 = vmatprep.subr.mxu0 0.0
    %2325 = vmatpush1.msra.mxu0 0.0
    %2326 = vmatprep.subr.mxu0 0.0
    %2327 = vmatpush1.msra.mxu0 0.0
    %2328 = vmatprep.subr.mxu0 0.0
    %2329 = vmatpush1.msra.mxu0 0.0
    %2330 = vmatprep.subr.mxu0 0.0
    %2331 = vmatpush1.msra.mxu0 0.0
    %2332 = vmatprep.subr.mxu0 0.0
    %2333 = vmatpush1.msra.mxu0 0.0
    %2334 = vmatprep.subr.mxu0 0.0
    %2335 = vmatpush1.msra.mxu0 0.0
    %2336 = vmatprep.subr.mxu0 0.0
    %2337 = vmatpush1.msra.mxu0 0.0
    %2338 = vmatprep.subr.mxu0 0.0
    %2339 = vmatpush1.msra.mxu0 0.0
    %2340 = vmatprep.subr.mxu0 0.0
    %2341 = vmatpush1.msra.mxu0 0.0
    %2342 = vmatprep.subr.mxu0 0.0
    %2343 = vmatpush1.msra.mxu0 0.0
    %2344 = vmatprep.subr.mxu0 0.0
    %2345 = vmatpush1.msra.mxu0 0.0
    %2346 = vmatprep.subr.mxu0 0.0
    %2347 = vmatpush1.msra.mxu0 0.0
    %2348 = vmatprep.subr.mxu0 0.0
    %2349 = vmatpush1.msra.mxu0 0.0
    %2350 = vmatprep.subr.mxu0 0.0
    %2351 = vmatpush1.msra.mxu0 0.0
    %2352 = vmatprep.subr.mxu0 0.0
    %2353 = vmatpush1.msra.mxu0 0.0
    %2354 = vmatprep.subr.mxu0 0.0
    %2355 = vmatpush1.msra.mxu0 0.0
    %2356 = vmatprep.subr.mxu0 0.0
    %2357 = vmatpush1.msra.mxu0 0.0
    %2358 = vmatprep.subr.mxu0 0.0
    %2359 = vmatpush1.msra.mxu0 0.0
    %2360 = vmatprep.mubr.f32.mxu0 0.0
    %2361 = vmatmul.mubr.f32.gmra.mrb[0].mxu0 %v801
    %v2362 = vpop.f32.mrb[0].mxu0
    %v2363 = vadd.f32 0.0, %v2362
    %v2364 = vpop.f32.mrb[0].mxu0
    %2365 = vmatprep.mubr.f32.mxu0 0.0
    %2366 = vmatmul.mubr.f32.gmra.mrb[0].mxu0 %v803
    %v2367 = vpop.f32.mrb[0].mxu0
    %v2368 = vadd.f32 0.0, %v2367
    %v2369 = vpop.f32.mrb[0].mxu0
    %2370 = vmatprep.mubr.f32.mxu0 0.0
    %2371 = vmatmul.mubr.f32.gmra.mrb[0].mxu0 %v805
    %v2372 = vpop.f32.mrb[0].mxu0
    %v2373 = vadd.f32 0.0, %v2372
    %v2374 = vpop.f32.mrb[0].mxu0
    %2375 = vmatprep.mubr.f32.mxu0 0.0
    %2376 = vmatmul.mubr.f32.gmra.mrb[0].mxu0 %v807
    %v2377 = vpop.f32.mrb[0].mxu0
    %v2378 = vadd.f32 0.0, %v2377
    %v2379 = vpop.f32.mrb[0].mxu0
    %2380 = vmatprep.mubr.f32.mxu0 0.0
    %2381 = vmatmul.mubr.f32.gmra.mrb[0].mxu0 %v809
    %v2382 = vpop.f32.mrb[0].mxu0
    %v2383 = vadd.f32 0.0, %v2382
    %v2384 = vpop.f32.mrb[0].mxu0
    %2385 = vmatprep.mubr.f32.mxu0 0.0
    %2386 = vmatmul.mubr.f32.gmra.mrb[0].mxu0 %v811
    %v2387 = vpop.f32.mrb[0].mxu0
    %v2388 = vadd.f32 0.0, %v2387
    %v2389 = vpop.f32.mrb[0].mxu0
    %2390 = vmatprep.mubr.f32.mxu0 0.0
    %2391 = vmatmul.mubr.f32.gmra.mrb[0].mxu0 %v813
    %v2392 = vpop.f32.mrb[0].mxu0
    %v2393 = vadd.f32 0.0, %v2392
    %v2394 = vpop.f32.mrb[0].mxu0
    %2395 = vmatprep.mubr.f32.mxu0 0.0
    %2396 = vmatmul.mubr.f32.gmra.mrb[0].mxu0 %v815
    %v2397 = vpop.f32.mrb[0].mxu0
    %v2398 = vadd.f32 0.0, %v2397
    %v2399 = vpop.f32.mrb[0].mxu0
    %2400 = vmatprep.mubr.f32.mxu0 0.0
    %2401 = vmatmul.mubr.f32.gmra.mrb[0].mxu0 %v817
    %v2402 = vpop.f32.mrb[0].mxu0
    %v2403 = vadd.f32 0.0, %v2402
    %v2404 = vpop.f32.mrb[0].mxu0
    %2405 = vmatprep.mubr.f32.mxu0 0.0
    %2406 = vmatmul.mubr.f32.gmra.mrb[0].mxu0 %v1575
    %v2407 = vpop.f32.mrb[0].mxu0
    %v2408 = vadd.f32 0.0, %v2407
    %v2409 = vpop.f32.mrb[0].mxu0
    %2410 = vmatprep.mubr.f32.mxu0 0.0
    %2411 = vmatmul.mubr.f32.gmra.mrb[0].mxu0 %v2292
    %v2412 = vpop.f32.mrb[0].mxu0
    %v2413 = vadd.f32 0.0, %v2412
    %v2414 = vpop.f32.mrb[0].mxu0
    %2415 = vmatprep.mubr.f32.mxu0 0.0
    %2416 = vmatmul.mubr.f32.gmra.mrb[0].mxu0 %v2294
    %v2417 = vpop.f32.mrb[0].mxu0
    %v2418 = vadd.f32 0.0, %v2417
    %v2419 = vpop.f32.mrb[0].mxu0
    %2420 = vdwg.mxu0
    %v2421 = vadd.f32 %v2277, %v2363
    %v2422 = vadd.f32 %v2278, %v2368
    %v2423 = vadd.f32 %v2279, %v2373
    %v2424 = vadd.f32 %v2280, %v2378
    %v2425 = vadd.f32 %v2281, %v2383
    %v2426 = vadd.f32 %v2282, %v2388
    %v2427 = vadd.f32 %v2283, %v2393
    %v2428 = vadd.f32 %v2284, %v2398
    %v2429 = vadd.f32 %v2285, %v2403
    %v2430 = vadd.f32 %v2286, %v2408
    %v2431 = vadd.f32 %v2287, %v2413
    %v2432 = vadd.f32 %v2288, %v2418
    %v2433 = vld [vmem:[%s3 + $0x70] sm:$0xff]
    %v2434 = vrot.slane %v239, 4
    %v2435 = vsel %vm146, %v1717, %v2434
    %v2436 = vsel %vm288, %v2435, 0
    %v2438 = vsel %vm288, %v2434, 0
    %2440 = vmatprep.subr.mxu0 0.0
    %2441 = vmatpush1.msra.mxu0 %v2433
    %2442 = vmatprep.subr.mxu0 0.0
    %2443 = vmatpush1.msra.mxu0 0.0
    %2444 = vmatprep.subr.mxu0 0.0
    %2445 = vmatpush1.msra.mxu0 0.0
    %2446 = vmatprep.subr.mxu0 0.0
    %2447 = vmatpush1.msra.mxu0 0.0
    %2448 = vmatprep.subr.mxu0 0.0
    %2449 = vmatpush1.msra.mxu0 0.0
    %2450 = vmatprep.subr.mxu0 0.0
    %2451 = vmatpush1.msra.mxu0 0.0
    %2452 = vmatprep.subr.mxu0 0.0
    %2453 = vmatpush1.msra.mxu0 0.0
    %2454 = vmatprep.subr.mxu0 0.0
    %2455 = vmatpush1.msra.mxu0 0.0
    %2456 = vmatprep.subr.mxu0 0.0
    %2457 = vmatpush1.msra.mxu0 0.0
    %2458 = vmatprep.subr.mxu0 0.0
    %2459 = vmatpush1.msra.mxu0 0.0
    %2460 = vmatprep.subr.mxu0 0.0
    %2461 = vmatpush1.msra.mxu0 0.0
    %2462 = vmatprep.subr.mxu0 0.0
    %2463 = vmatpush1.msra.mxu0 0.0
    %2464 = vmatprep.subr.mxu0 0.0
    %2465 = vmatpush1.msra.mxu0 0.0
    %2466 = vmatprep.subr.mxu0 0.0
    %2467 = vmatpush1.msra.mxu0 0.0
    %2468 = vmatprep.subr.mxu0 0.0
    %2469 = vmatpush1.msra.mxu0 0.0
    %2470 = vmatprep.subr.mxu0 0.0
    %2471 = vmatpush1.msra.mxu0 0.0
    %2472 = vmatprep.subr.mxu0 0.0
    %2473 = vmatpush1.msra.mxu0 0.0
    %2474 = vmatprep.subr.mxu0 0.0
    %2475 = vmatpush1.msra.mxu0 0.0
    %2476 = vmatprep.subr.mxu0 0.0
    %2477 = vmatpush1.msra.mxu0 0.0
    %2478 = vmatprep.subr.mxu0 0.0
    %2479 = vmatpush1.msra.mxu0 0.0
    %2480 = vmatprep.subr.mxu0 0.0
    %2481 = vmatpush1.msra.mxu0 0.0
    %2482 = vmatprep.subr.mxu0 0.0
    %2483 = vmatpush1.msra.mxu0 0.0
    %2484 = vmatprep.subr.mxu0 0.0
    %2485 = vmatpush1.msra.mxu0 0.0
    %2486 = vmatprep.subr.mxu0 0.0
    %2487 = vmatpush1.msra.mxu0 0.0
    %2488 = vmatprep.subr.mxu0 0.0
    %2489 = vmatpush1.msra.mxu0 0.0
    %2490 = vmatprep.subr.mxu0 0.0
    %2491 = vmatpush1.msra.mxu0 0.0
    %2492 = vmatprep.subr.mxu0 0.0
    %2493 = vmatpush1.msra.mxu0 0.0
    %2494 = vmatprep.subr.mxu0 0.0
    %2495 = vmatpush1.msra.mxu0 0.0
    %2496 = vmatprep.subr.mxu0 0.0
    %2497 = vmatpush1.msra.mxu0 0.0
    %2498 = vmatprep.subr.mxu0 0.0
    %2499 = vmatpush1.msra.mxu0 0.0
    %2500 = vmatprep.subr.mxu0 0.0
    %2501 = vmatpush1.msra.mxu0 0.0
    %2502 = vmatprep.subr.mxu0 0.0
    %2503 = vmatpush1.msra.mxu0 0.0
    %2504 = vmatprep.mubr.f32.mxu0 0.0
    %2505 = vmatmul.mubr.f32.gmra.mrb[0].mxu0 %v986
    %v2506 = vpop.f32.mrb[0].mxu0
    %v2507 = vadd.f32 0.0, %v2506
    %v2508 = vpop.f32.mrb[0].mxu0
    %2509 = vmatprep.mubr.f32.mxu0 0.0
    %2510 = vmatmul.mubr.f32.gmra.mrb[0].mxu0 %v988
    %v2511 = vpop.f32.mrb[0].mxu0
    %v2512 = vadd.f32 0.0, %v2511
    %v2513 = vpop.f32.mrb[0].mxu0
    %2514 = vmatprep.mubr.f32.mxu0 0.0
    %2515 = vmatmul.mubr.f32.gmra.mrb[0].mxu0 %v990
    %v2516 = vpop.f32.mrb[0].mxu0
    %v2517 = vadd.f32 0.0, %v2516
    %v2518 = vpop.f32.mrb[0].mxu0
    %2519 = vmatprep.mubr.f32.mxu0 0.0
    %2520 = vmatmul.mubr.f32.gmra.mrb[0].mxu0 %v992
    %v2521 = vpop.f32.mrb[0].mxu0
    %v2522 = vadd.f32 0.0, %v2521
    %v2523 = vpop.f32.mrb[0].mxu0
    %2524 = vmatprep.mubr.f32.mxu0 0.0
    %2525 = vmatmul.mubr.f32.gmra.mrb[0].mxu0 %v994
    %v2526 = vpop.f32.mrb[0].mxu0
    %v2527 = vadd.f32 0.0, %v2526
    %v2528 = vpop.f32.mrb[0].mxu0
    %2529 = vmatprep.mubr.f32.mxu0 0.0
    %2530 = vmatmul.mubr.f32.gmra.mrb[0].mxu0 %v996
    %v2531 = vpop.f32.mrb[0].mxu0
    %v2532 = vadd.f32 0.0, %v2531
    %v2533 = vpop.f32.mrb[0].mxu0
    %2534 = vmatprep.mubr.f32.mxu0 0.0
    %2535 = vmatmul.mubr.f32.gmra.mrb[0].mxu0 %v998
    %v2536 = vpop.f32.mrb[0].mxu0
    %v2537 = vadd.f32 0.0, %v2536
    %v2538 = vpop.f32.mrb[0].mxu0
    %2539 = vmatprep.mubr.f32.mxu0 0.0
    %2540 = vmatmul.mubr.f32.gmra.mrb[0].mxu0 %v1000
    %v2541 = vpop.f32.mrb[0].mxu0
    %v2542 = vadd.f32 0.0, %v2541
    %v2543 = vpop.f32.mrb[0].mxu0
    %2544 = vmatprep.mubr.f32.mxu0 0.0
    %2545 = vmatmul.mubr.f32.gmra.mrb[0].mxu0 %v1002
    %v2546 = vpop.f32.mrb[0].mxu0
    %v2547 = vadd.f32 0.0, %v2546
    %v2548 = vpop.f32.mrb[0].mxu0
    %2549 = vmatprep.mubr.f32.mxu0 0.0
    %2550 = vmatmul.mubr.f32.gmra.mrb[0].mxu0 %v1719
    %v2551 = vpop.f32.mrb[0].mxu0
    %v2552 = vadd.f32 0.0, %v2551
    %v2553 = vpop.f32.mrb[0].mxu0
    %2554 = vmatprep.mubr.f32.mxu0 0.0
    %2555 = vmatmul.mubr.f32.gmra.mrb[0].mxu0 %v2436
    %v2556 = vpop.f32.mrb[0].mxu0
    %v2557 = vadd.f32 0.0, %v2556
    %v2558 = vpop.f32.mrb[0].mxu0
    %2559 = vmatprep.mubr.f32.mxu0 0.0
    %2560 = vmatmul.mubr.f32.gmra.mrb[0].mxu0 %v2438
    %v2561 = vpop.f32.mrb[0].mxu0
    %v2562 = vadd.f32 0.0, %v2561
    %v2563 = vpop.f32.mrb[0].mxu0
    %2564 = vdwg.mxu0
    %v2565 = vadd.f32 %v2421, %v2507
    %v2566 = vadd.f32 %v2422, %v2512
    %v2567 = vadd.f32 %v2423, %v2517
    %v2568 = vadd.f32 %v2424, %v2522
    %v2569 = vadd.f32 %v2425, %v2527
    %v2570 = vadd.f32 %v2426, %v2532
    %v2571 = vadd.f32 %v2427, %v2537
    %v2572 = vadd.f32 %v2428, %v2542
    %v2573 = vadd.f32 %v2429, %v2547
    %v2574 = vadd.f32 %v2430, %v2552
    %v2575 = vadd.f32 %v2431, %v2557
    %v2576 = vadd.f32 %v2432, %v2562
    %v2577 = vld [vmem:[%s3 + $0x78] sm:$0xff]
    %v2579 = vsel %vm288, %v244, 0
    %2581 = vmatprep.subr.mxu0 0.0
    %2582 = vmatpush1.msra.mxu0 %v2577
    %2583 = vmatprep.subr.mxu0 0.0
    %2584 = vmatpush1.msra.mxu0 0.0
    %2585 = vmatprep.subr.mxu0 0.0
    %2586 = vmatpush1.msra.mxu0 0.0
    %2587 = vmatprep.subr.mxu0 0.0
    %2588 = vmatpush1.msra.mxu0 0.0
    %2589 = vmatprep.subr.mxu0 0.0
    %2590 = vmatpush1.msra.mxu0 0.0
    %2591 = vmatprep.subr.mxu0 0.0
    %2592 = vmatpush1.msra.mxu0 0.0
    %2593 = vmatprep.subr.mxu0 0.0
    %2594 = vmatpush1.msra.mxu0 0.0
    %2595 = vmatprep.subr.mxu0 0.0
    %2596 = vmatpush1.msra.mxu0 0.0
    %2597 = vmatprep.subr.mxu0 0.0
    %2598 = vmatpush1.msra.mxu0 0.0
    %2599 = vmatprep.subr.mxu0 0.0
    %2600 = vmatpush1.msra.mxu0 0.0
    %2601 = vmatprep.subr.mxu0 0.0
    %2602 = vmatpush1.msra.mxu0 0.0
    %2603 = vmatprep.subr.mxu0 0.0
    %2604 = vmatpush1.msra.mxu0 0.0
    %2605 = vmatprep.subr.mxu0 0.0
    %2606 = vmatpush1.msra.mxu0 0.0
    %2607 = vmatprep.subr.mxu0 0.0
    %2608 = vmatpush1.msra.mxu0 0.0
    %2609 = vmatprep.subr.mxu0 0.0
    %2610 = vmatpush1.msra.mxu0 0.0
    %2611 = vmatprep.subr.mxu0 0.0
    %2612 = vmatpush1.msra.mxu0 0.0
    %2613 = vmatprep.subr.mxu0 0.0
    %2614 = vmatpush1.msra.mxu0 0.0
    %2615 = vmatprep.subr.mxu0 0.0
    %2616 = vmatpush1.msra.mxu0 0.0
    %2617 = vmatprep.subr.mxu0 0.0
    %2618 = vmatpush1.msra.mxu0 0.0
    %2619 = vmatprep.subr.mxu0 0.0
    %2620 = vmatpush1.msra.mxu0 0.0
    %2621 = vmatprep.subr.mxu0 0.0
    %2622 = vmatpush1.msra.mxu0 0.0
    %2623 = vmatprep.subr.mxu0 0.0
    %2624 = vmatpush1.msra.mxu0 0.0
    %2625 = vmatprep.subr.mxu0 0.0
    %2626 = vmatpush1.msra.mxu0 0.0
    %2627 = vmatprep.subr.mxu0 0.0
    %2628 = vmatpush1.msra.mxu0 0.0
    %2629 = vmatprep.subr.mxu0 0.0
    %2630 = vmatpush1.msra.mxu0 0.0
    %2631 = vmatprep.subr.mxu0 0.0
    %2632 = vmatpush1.msra.mxu0 0.0
    %2633 = vmatprep.subr.mxu0 0.0
    %2634 = vmatpush1.msra.mxu0 0.0
    %2635 = vmatprep.subr.mxu0 0.0
    %2636 = vmatpush1.msra.mxu0 0.0
    %2637 = vmatprep.subr.mxu0 0.0
    %2638 = vmatpush1.msra.mxu0 0.0
    %2639 = vmatprep.subr.mxu0 0.0
    %2640 = vmatpush1.msra.mxu0 0.0
    %2641 = vmatprep.subr.mxu0 0.0
    %2642 = vmatpush1.msra.mxu0 0.0
    %2643 = vmatprep.subr.mxu0 0.0
    %2644 = vmatpush1.msra.mxu0 0.0
    %2645 = vmatprep.mubr.f32.mxu0 0.0
    %2646 = vmatmul.mubr.f32.gmra.mrb[0].mxu0 %v444
    %v2647 = vpop.f32.mrb[0].mxu0
    %v2648 = vadd.f32 0.0, %v2647
    %v2649 = vpop.f32.mrb[0].mxu0
    %2650 = vmatprep.mubr.f32.mxu0 0.0
    %2651 = vmatmul.mubr.f32.gmra.mrb[0].mxu0 %v446
    %v2652 = vpop.f32.mrb[0].mxu0
    %v2653 = vadd.f32 0.0, %v2652
    %v2654 = vpop.f32.mrb[0].mxu0
    %2655 = vmatprep.mubr.f32.mxu0 0.0
    %2656 = vmatmul.mubr.f32.gmra.mrb[0].mxu0 %v448
    %v2657 = vpop.f32.mrb[0].mxu0
    %v2658 = vadd.f32 0.0, %v2657
    %v2659 = vpop.f32.mrb[0].mxu0
    %2660 = vmatprep.mubr.f32.mxu0 0.0
    %2661 = vmatmul.mubr.f32.gmra.mrb[0].mxu0 %v450
    %v2662 = vpop.f32.mrb[0].mxu0
    %v2663 = vadd.f32 0.0, %v2662
    %v2664 = vpop.f32.mrb[0].mxu0
    %2665 = vmatprep.mubr.f32.mxu0 0.0
    %2666 = vmatmul.mubr.f32.gmra.mrb[0].mxu0 %v452
    %v2667 = vpop.f32.mrb[0].mxu0
    %v2668 = vadd.f32 0.0, %v2667
    %v2669 = vpop.f32.mrb[0].mxu0
    %2670 = vmatprep.mubr.f32.mxu0 0.0
    %2671 = vmatmul.mubr.f32.gmra.mrb[0].mxu0 %v454
    %v2672 = vpop.f32.mrb[0].mxu0
    %v2673 = vadd.f32 0.0, %v2672
    %v2674 = vpop.f32.mrb[0].mxu0
    %2675 = vmatprep.mubr.f32.mxu0 0.0
    %2676 = vmatmul.mubr.f32.gmra.mrb[0].mxu0 %v456
    %v2677 = vpop.f32.mrb[0].mxu0
    %v2678 = vadd.f32 0.0, %v2677
    %v2679 = vpop.f32.mrb[0].mxu0
    %2680 = vmatprep.mubr.f32.mxu0 0.0
    %2681 = vmatmul.mubr.f32.gmra.mrb[0].mxu0 %v458
    %v2682 = vpop.f32.mrb[0].mxu0
    %v2683 = vadd.f32 0.0, %v2682
    %v2684 = vpop.f32.mrb[0].mxu0
    %2685 = vmatprep.mubr.f32.mxu0 0.0
    %2686 = vmatmul.mubr.f32.gmra.mrb[0].mxu0 %v460
    %v2687 = vpop.f32.mrb[0].mxu0
    %v2688 = vadd.f32 0.0, %v2687
    %v2689 = vpop.f32.mrb[0].mxu0
    %2690 = vmatprep.mubr.f32.mxu0 0.0
    %2691 = vmatmul.mubr.f32.gmra.mrb[0].mxu0 %v1145
    %v2692 = vpop.f32.mrb[0].mxu0
    %v2693 = vadd.f32 0.0, %v2692
    %v2694 = vpop.f32.mrb[0].mxu0
    %2695 = vmatprep.mubr.f32.mxu0 0.0
    %2696 = vmatmul.mubr.f32.gmra.mrb[0].mxu0 %v1862
    %v2697 = vpop.f32.mrb[0].mxu0
    %v2698 = vadd.f32 0.0, %v2697
    %v2699 = vpop.f32.mrb[0].mxu0
    %2700 = vmatprep.mubr.f32.mxu0 0.0
    %2701 = vmatmul.mubr.f32.gmra.mrb[0].mxu0 %v2579
    %v2702 = vpop.f32.mrb[0].mxu0
    %v2703 = vadd.f32 0.0, %v2702
    %v2704 = vpop.f32.mrb[0].mxu0
    %2705 = vdwg.mxu0
    %v2706 = vadd.f32 %v2565, %v2648
    %v2707 = vadd.f32 %v2566, %v2653
    %v2708 = vadd.f32 %v2567, %v2658
    %v2709 = vadd.f32 %v2568, %v2663
    %v2710 = vadd.f32 %v2569, %v2668
    %v2711 = vadd.f32 %v2570, %v2673
    %v2712 = vadd.f32 %v2571, %v2678
    %v2713 = vadd.f32 %v2572, %v2683
    %v2714 = vadd.f32 %v2573, %v2688
    %v2715 = vadd.f32 %v2574, %v2693
    %v2716 = vadd.f32 %v2575, %v2698
    %v2717 = vadd.f32 %v2576, %v2703
    %v2718 = vld [vmem:[%s3 + $0x80] sm:$0xff]
    %v2719 = vrot.slane %v244, 1
    %v2720 = vsel %vm264, %v2002, %v2719
    %v2721 = vsel %vm288, %v2720, 0
    %v2723 = vsel %vm288, %v2719, 0
    %2725 = vmatprep.subr.mxu0 0.0
    %2726 = vmatpush1.msra.mxu0 %v2718
    %2727 = vmatprep.subr.mxu0 0.0
    %2728 = vmatpush1.msra.mxu0 0.0
    %2729 = vmatprep.subr.mxu0 0.0
    %2730 = vmatpush1.msra.mxu0 0.0
    %2731 = vmatprep.subr.mxu0 0.0
    %2732 = vmatpush1.msra.mxu0 0.0
    %2733 = vmatprep.subr.mxu0 0.0
    %2734 = vmatpush1.msra.mxu0 0.0
    %2735 = vmatprep.subr.mxu0 0.0
    %2736 = vmatpush1.msra.mxu0 0.0
    %2737 = vmatprep.subr.mxu0 0.0
    %2738 = vmatpush1.msra.mxu0 0.0
    %2739 = vmatprep.subr.mxu0 0.0
    %2740 = vmatpush1.msra.mxu0 0.0
    %2741 = vmatprep.subr.mxu0 0.0
    %2742 = vmatpush1.msra.mxu0 0.0
    %2743 = vmatprep.subr.mxu0 0.0
    %2744 = vmatpush1.msra.mxu0 0.0
    %2745 = vmatprep.subr.mxu0 0.0
    %2746 = vmatpush1.msra.mxu0 0.0
    %2747 = vmatprep.subr.mxu0 0.0
    %2748 = vmatpush1.msra.mxu0 0.0
    %2749 = vmatprep.subr.mxu0 0.0
    %2750 = vmatpush1.msra.mxu0 0.0
    %2751 = vmatprep.subr.mxu0 0.0
    %2752 = vmatpush1.msra.mxu0 0.0
    %2753 = vmatprep.subr.mxu0 0.0
    %2754 = vmatpush1.msra.mxu0 0.0
    %2755 = vmatprep.subr.mxu0 0.0
    %2756 = vmatpush1.msra.mxu0 0.0
    %2757 = vmatprep.subr.mxu0 0.0
    %2758 = vmatpush1.msra.mxu0 0.0
    %2759 = vmatprep.subr.mxu0 0.0
    %2760 = vmatpush1.msra.mxu0 0.0
    %2761 = vmatprep.subr.mxu0 0.0
    %2762 = vmatpush1.msra.mxu0 0.0
    %2763 = vmatprep.subr.mxu0 0.0
    %2764 = vmatpush1.msra.mxu0 0.0
    %2765 = vmatprep.subr.mxu0 0.0
    %2766 = vmatpush1.msra.mxu0 0.0
    %2767 = vmatprep.subr.mxu0 0.0
    %2768 = vmatpush1.msra.mxu0 0.0
    %2769 = vmatprep.subr.mxu0 0.0
    %2770 = vmatpush1.msra.mxu0 0.0
    %2771 = vmatprep.subr.mxu0 0.0
    %2772 = vmatpush1.msra.mxu0 0.0
    %2773 = vmatprep.subr.mxu0 0.0
    %2774 = vmatpush1.msra.mxu0 0.0
    %2775 = vmatprep.subr.mxu0 0.0
    %2776 = vmatpush1.msra.mxu0 0.0
    %2777 = vmatprep.subr.mxu0 0.0
    %2778 = vmatpush1.msra.mxu0 0.0
    %2779 = vmatprep.subr.mxu0 0.0
    %2780 = vmatpush1.msra.mxu0 0.0
    %2781 = vmatprep.subr.mxu0 0.0
    %2782 = vmatpush1.msra.mxu0 0.0
    %2783 = vmatprep.subr.mxu0 0.0
    %2784 = vmatpush1.msra.mxu0 0.0
    %2785 = vmatprep.subr.mxu0 0.0
    %2786 = vmatpush1.msra.mxu0 0.0
    %2787 = vmatprep.subr.mxu0 0.0
    %2788 = vmatpush1.msra.mxu0 0.0
    %2789 = vmatprep.mubr.f32.mxu0 0.0
    %2790 = vmatmul.mubr.f32.gmra.mrb[0].mxu0 %v295
    %v2791 = vpop.f32.mrb[0].mxu0
    %v2792 = vadd.f32 0.0, %v2791
    %v2793 = vpop.f32.mrb[0].mxu0
    %2794 = vmatprep.mubr.f32.mxu0 0.0
    %2795 = vmatmul.mubr.f32.gmra.mrb[0].mxu0 %v297
    %v2796 = vpop.f32.mrb[0].mxu0
    %v2797 = vadd.f32 0.0, %v2796
    %v2798 = vpop.f32.mrb[0].mxu0
    %2799 = vmatprep.mubr.f32.mxu0 0.0
    %2800 = vmatmul.mubr.f32.gmra.mrb[0].mxu0 %v299
    %v2801 = vpop.f32.mrb[0].mxu0
    %v2802 = vadd.f32 0.0, %v2801
    %v2803 = vpop.f32.mrb[0].mxu0
    %2804 = vmatprep.mubr.f32.mxu0 0.0
    %2805 = vmatmul.mubr.f32.gmra.mrb[0].mxu0 %v301
    %v2806 = vpop.f32.mrb[0].mxu0
    %v2807 = vadd.f32 0.0, %v2806
    %v2808 = vpop.f32.mrb[0].mxu0
    %2809 = vmatprep.mubr.f32.mxu0 0.0
    %2810 = vmatmul.mubr.f32.gmra.mrb[0].mxu0 %v303
    %v2811 = vpop.f32.mrb[0].mxu0
    %v2812 = vadd.f32 0.0, %v2811
    %v2813 = vpop.f32.mrb[0].mxu0
    %2814 = vmatprep.mubr.f32.mxu0 0.0
    %2815 = vmatmul.mubr.f32.gmra.mrb[0].mxu0 %v305
    %v2816 = vpop.f32.mrb[0].mxu0
    %v2817 = vadd.f32 0.0, %v2816
    %v2818 = vpop.f32.mrb[0].mxu0
    %2819 = vmatprep.mubr.f32.mxu0 0.0
    %2820 = vmatmul.mubr.f32.gmra.mrb[0].mxu0 %v307
    %v2821 = vpop.f32.mrb[0].mxu0
    %v2822 = vadd.f32 0.0, %v2821
    %v2823 = vpop.f32.mrb[0].mxu0
    %2824 = vmatprep.mubr.f32.mxu0 0.0
    %2825 = vmatmul.mubr.f32.gmra.mrb[0].mxu0 %v309
    %v2826 = vpop.f32.mrb[0].mxu0
    %v2827 = vadd.f32 0.0, %v2826
    %v2828 = vpop.f32.mrb[0].mxu0
    %2829 = vmatprep.mubr.f32.mxu0 0.0
    %2830 = vmatmul.mubr.f32.gmra.mrb[0].mxu0 %v1287
    %v2831 = vpop.f32.mrb[0].mxu0
    %v2832 = vadd.f32 0.0, %v2831
    %v2833 = vpop.f32.mrb[0].mxu0
    %2834 = vmatprep.mubr.f32.mxu0 0.0
    %2835 = vmatmul.mubr.f32.gmra.mrb[0].mxu0 %v2004
    %v2836 = vpop.f32.mrb[0].mxu0
    %v2837 = vadd.f32 0.0, %v2836
    %v2838 = vpop.f32.mrb[0].mxu0
    %2839 = vmatprep.mubr.f32.mxu0 0.0
    %2840 = vmatmul.mubr.f32.gmra.mrb[0].mxu0 %v2721
    %v2841 = vpop.f32.mrb[0].mxu0
    %v2842 = vadd.f32 0.0, %v2841
    %v2843 = vpop.f32.mrb[0].mxu0
    %2844 = vmatprep.mubr.f32.mxu0 0.0
    %2845 = vmatmul.mubr.f32.gmra.mrb[0].mxu0 %v2723
    %v2846 = vpop.f32.mrb[0].mxu0
    %v2847 = vadd.f32 0.0, %v2846
    %v2848 = vpop.f32.mrb[0].mxu0
    %2849 = vdwg.mxu0
    %v2850 = vadd.f32 %v2706, %v2792
    %v2851 = vadd.f32 %v2707, %v2797
    %v2852 = vadd.f32 %v2708, %v2802
    %v2853 = vadd.f32 %v2709, %v2807
    %v2854 = vadd.f32 %v2710, %v2812
    %v2855 = vadd.f32 %v2711, %v2817
    %v2856 = vadd.f32 %v2712, %v2822
    %v2857 = vadd.f32 %v2713, %v2827
    %v2858 = vadd.f32 %v2714, %v2832
    %v2859 = vadd.f32 %v2715, %v2837
    %v2860 = vadd.f32 %v2716, %v2842
    %v2861 = vadd.f32 %v2717, %v2847
    %v2862 = vld [vmem:[%s3 + $0x88] sm:$0xff]
    %v2863 = vrot.slane %v244, 2
    %v2864 = vsel %vm588, %v2146, %v2863
    %v2865 = vsel %vm288, %v2864, 0
    %v2867 = vsel %vm288, %v2863, 0
    %2869 = vmatprep.subr.mxu0 0.0
    %2870 = vmatpush1.msra.mxu0 %v2862
    %2871 = vmatprep.subr.mxu0 0.0
    %2872 = vmatpush1.msra.mxu0 0.0
    %2873 = vmatprep.subr.mxu0 0.0
    %2874 = vmatpush1.msra.mxu0 0.0
    %2875 = vmatprep.subr.mxu0 0.0
    %2876 = vmatpush1.msra.mxu0 0.0
    %2877 = vmatprep.subr.mxu0 0.0
    %2878 = vmatpush1.msra.mxu0 0.0
    %2879 = vmatprep.subr.mxu0 0.0
    %2880 = vmatpush1.msra.mxu0 0.0
    %2881 = vmatprep.subr.mxu0 0.0
    %2882 = vmatpush1.msra.mxu0 0.0
    %2883 = vmatprep.subr.mxu0 0.0
    %2884 = vmatpush1.msra.mxu0 0.0
    %2885 = vmatprep.subr.mxu0 0.0
    %2886 = vmatpush1.msra.mxu0 0.0
    %2887 = vmatprep.subr.mxu0 0.0
    %2888 = vmatpush1.msra.mxu0 0.0
    %2889 = vmatprep.subr.mxu0 0.0
    %2890 = vmatpush1.msra.mxu0 0.0
    %2891 = vmatprep.subr.mxu0 0.0
    %2892 = vmatpush1.msra.mxu0 0.0
    %2893 = vmatprep.subr.mxu0 0.0
    %2894 = vmatpush1.msra.mxu0 0.0
    %2895 = vmatprep.subr.mxu0 0.0
    %2896 = vmatpush1.msra.mxu0 0.0
    %2897 = vmatprep.subr.mxu0 0.0
    %2898 = vmatpush1.msra.mxu0 0.0
    %2899 = vmatprep.subr.mxu0 0.0
    %2900 = vmatpush1.msra.mxu0 0.0
    %2901 = vmatprep.subr.mxu0 0.0
    %2902 = vmatpush1.msra.mxu0 0.0
    %2903 = vmatprep.subr.mxu0 0.0
    %2904 = vmatpush1.msra.mxu0 0.0
    %2905 = vmatprep.subr.mxu0 0.0
    %2906 = vmatpush1.msra.mxu0 0.0
    %2907 = vmatprep.subr.mxu0 0.0
    %2908 = vmatpush1.msra.mxu0 0.0
    %2909 = vmatprep.subr.mxu0 0.0
    %2910 = vmatpush1.msra.mxu0 0.0
    %2911 = vmatprep.subr.mxu0 0.0
    %2912 = vmatpush1.msra.mxu0 0.0
    %2913 = vmatprep.subr.mxu0 0.0
    %2914 = vmatpush1.msra.mxu0 0.0
    %2915 = vmatprep.subr.mxu0 0.0
    %2916 = vmatpush1.msra.mxu0 0.0
    %2917 = vmatprep.subr.mxu0 0.0
    %2918 = vmatpush1.msra.mxu0 0.0
    %2919 = vmatprep.subr.mxu0 0.0
    %2920 = vmatpush1.msra.mxu0 0.0
    %2921 = vmatprep.subr.mxu0 0.0
    %2922 = vmatpush1.msra.mxu0 0.0
    %2923 = vmatprep.subr.mxu0 0.0
    %2924 = vmatpush1.msra.mxu0 0.0
    %2925 = vmatprep.subr.mxu0 0.0
    %2926 = vmatpush1.msra.mxu0 0.0
    %2927 = vmatprep.subr.mxu0 0.0
    %2928 = vmatpush1.msra.mxu0 0.0
    %2929 = vmatprep.subr.mxu0 0.0
    %2930 = vmatpush1.msra.mxu0 0.0
    %2931 = vmatprep.subr.mxu0 0.0
    %2932 = vmatpush1.msra.mxu0 0.0
    %2933 = vmatprep.mubr.f32.mxu0 0.0
    %2934 = vmatmul.mubr.f32.gmra.mrb[0].mxu0 %v618
    %v2935 = vpop.f32.mrb[0].mxu0
    %v2936 = vadd.f32 0.0, %v2935
    %v2937 = vpop.f32.mrb[0].mxu0
    %2938 = vmatprep.mubr.f32.mxu0 0.0
    %2939 = vmatmul.mubr.f32.gmra.mrb[0].mxu0 %v620
    %v2940 = vpop.f32.mrb[0].mxu0
    %v2941 = vadd.f32 0.0, %v2940
    %v2942 = vpop.f32.mrb[0].mxu0
    %2943 = vmatprep.mubr.f32.mxu0 0.0
    %2944 = vmatmul.mubr.f32.gmra.mrb[0].mxu0 %v622
    %v2945 = vpop.f32.mrb[0].mxu0
    %v2946 = vadd.f32 0.0, %v2945
    %v2947 = vpop.f32.mrb[0].mxu0
    %2948 = vmatprep.mubr.f32.mxu0 0.0
    %2949 = vmatmul.mubr.f32.gmra.mrb[0].mxu0 %v624
    %v2950 = vpop.f32.mrb[0].mxu0
    %v2951 = vadd.f32 0.0, %v2950
    %v2952 = vpop.f32.mrb[0].mxu0
    %2953 = vmatprep.mubr.f32.mxu0 0.0
    %2954 = vmatmul.mubr.f32.gmra.mrb[0].mxu0 %v626
    %v2955 = vpop.f32.mrb[0].mxu0
    %v2956 = vadd.f32 0.0, %v2955
    %v2957 = vpop.f32.mrb[0].mxu0
    %2958 = vmatprep.mubr.f32.mxu0 0.0
    %2959 = vmatmul.mubr.f32.gmra.mrb[0].mxu0 %v628
    %v2960 = vpop.f32.mrb[0].mxu0
    %v2961 = vadd.f32 0.0, %v2960
    %v2962 = vpop.f32.mrb[0].mxu0
    %2963 = vmatprep.mubr.f32.mxu0 0.0
    %2964 = vmatmul.mubr.f32.gmra.mrb[0].mxu0 %v630
    %v2965 = vpop.f32.mrb[0].mxu0
    %v2966 = vadd.f32 0.0, %v2965
    %v2967 = vpop.f32.mrb[0].mxu0
    %2968 = vmatprep.mubr.f32.mxu0 0.0
    %2969 = vmatmul.mubr.f32.gmra.mrb[0].mxu0 %v632
    %v2970 = vpop.f32.mrb[0].mxu0
    %v2971 = vadd.f32 0.0, %v2970
    %v2972 = vpop.f32.mrb[0].mxu0
    %2973 = vmatprep.mubr.f32.mxu0 0.0
    %2974 = vmatmul.mubr.f32.gmra.mrb[0].mxu0 %v1431
    %v2975 = vpop.f32.mrb[0].mxu0
    %v2976 = vadd.f32 0.0, %v2975
    %v2977 = vpop.f32.mrb[0].mxu0
    %2978 = vmatprep.mubr.f32.mxu0 0.0
    %2979 = vmatmul.mubr.f32.gmra.mrb[0].mxu0 %v2148
    %v2980 = vpop.f32.mrb[0].mxu0
    %v2981 = vadd.f32 0.0, %v2980
    %v2982 = vpop.f32.mrb[0].mxu0
    %2983 = vmatprep.mubr.f32.mxu0 0.0
    %2984 = vmatmul.mubr.f32.gmra.mrb[0].mxu0 %v2865
    %v2985 = vpop.f32.mrb[0].mxu0
    %v2986 = vadd.f32 0.0, %v2985
    %v2987 = vpop.f32.mrb[0].mxu0
    %2988 = vmatprep.mubr.f32.mxu0 0.0
    %2989 = vmatmul.mubr.f32.gmra.mrb[0].mxu0 %v2867
    %v2990 = vpop.f32.mrb[0].mxu0
    %v2991 = vadd.f32 0.0, %v2990
    %v2992 = vpop.f32.mrb[0].mxu0
    %2993 = vdwg.mxu0
    %v2994 = vadd.f32 %v2850, %v2936
    %v2995 = vadd.f32 %v2851, %v2941
    %v2996 = vadd.f32 %v2852, %v2946
    %v2997 = vadd.f32 %v2853, %v2951
    %v2998 = vadd.f32 %v2854, %v2956
    %v2999 = vadd.f32 %v2855, %v2961
    %v3000 = vadd.f32 %v2856, %v2966
    %v3001 = vadd.f32 %v2857, %v2971
    %v3002 = vadd.f32 %v2858, %v2976
    %v3003 = vadd.f32 %v2859, %v2981
    %v3004 = vadd.f32 %v2860, %v2986
    %v3005 = vadd.f32 %v2861, %v2991
    %v3006 = vld [vmem:[%s3 + $0x90] sm:$0xff]
    %v3007 = vrot.slane %v244, 3
    %v3008 = vsel %vm147, %v2290, %v3007
    %v3009 = vsel %vm288, %v3008, 0
    %v3011 = vsel %vm288, %v3007, 0
    %3013 = vmatprep.subr.mxu0 0.0
    %3014 = vmatpush1.msra.mxu0 %v3006
    %3015 = vmatprep.subr.mxu0 0.0
    %3016 = vmatpush1.msra.mxu0 0.0
    %3017 = vmatprep.subr.mxu0 0.0
    %3018 = vmatpush1.msra.mxu0 0.0
    %3019 = vmatprep.subr.mxu0 0.0
    %3020 = vmatpush1.msra.mxu0 0.0
    %3021 = vmatprep.subr.mxu0 0.0
    %3022 = vmatpush1.msra.mxu0 0.0
    %3023 = vmatprep.subr.mxu0 0.0
    %3024 = vmatpush1.msra.mxu0 0.0
    %3025 = vmatprep.subr.mxu0 0.0
    %3026 = vmatpush1.msra.mxu0 0.0
    %3027 = vmatprep.subr.mxu0 0.0
    %3028 = vmatpush1.msra.mxu0 0.0
    %3029 = vmatprep.subr.mxu0 0.0
    %3030 = vmatpush1.msra.mxu0 0.0
    %3031 = vmatprep.subr.mxu0 0.0
    %3032 = vmatpush1.msra.mxu0 0.0
    %3033 = vmatprep.subr.mxu0 0.0
    %3034 = vmatpush1.msra.mxu0 0.0
    %3035 = vmatprep.subr.mxu0 0.0
    %3036 = vmatpush1.msra.mxu0 0.0
    %3037 = vmatprep.subr.mxu0 0.0
    %3038 = vmatpush1.msra.mxu0 0.0
    %3039 = vmatprep.subr.mxu0 0.0
    %3040 = vmatpush1.msra.mxu0 0.0
    %3041 = vmatprep.subr.mxu0 0.0
    %3042 = vmatpush1.msra.mxu0 0.0
    %3043 = vmatprep.subr.mxu0 0.0
    %3044 = vmatpush1.msra.mxu0 0.0
    %3045 = vmatprep.subr.mxu0 0.0
    %3046 = vmatpush1.msra.mxu0 0.0
    %3047 = vmatprep.subr.mxu0 0.0
    %3048 = vmatpush1.msra.mxu0 0.0
    %3049 = vmatprep.subr.mxu0 0.0
    %3050 = vmatpush1.msra.mxu0 0.0
    %3051 = vmatprep.subr.mxu0 0.0
    %3052 = vmatpush1.msra.mxu0 0.0
    %3053 = vmatprep.subr.mxu0 0.0
    %3054 = vmatpush1.msra.mxu0 0.0
    %3055 = vmatprep.subr.mxu0 0.0
    %3056 = vmatpush1.msra.mxu0 0.0
    %3057 = vmatprep.subr.mxu0 0.0
    %3058 = vmatpush1.msra.mxu0 0.0
    %3059 = vmatprep.subr.mxu0 0.0
    %3060 = vmatpush1.msra.mxu0 0.0
    %3061 = vmatprep.subr.mxu0 0.0
    %3062 = vmatpush1.msra.mxu0 0.0
    %3063 = vmatprep.subr.mxu0 0.0
    %3064 = vmatpush1.msra.mxu0 0.0
    %3065 = vmatprep.subr.mxu0 0.0
    %3066 = vmatpush1.msra.mxu0 0.0
    %3067 = vmatprep.subr.mxu0 0.0
    %3068 = vmatpush1.msra.mxu0 0.0
    %3069 = vmatprep.subr.mxu0 0.0
    %3070 = vmatpush1.msra.mxu0 0.0
    %3071 = vmatprep.subr.mxu0 0.0
    %3072 = vmatpush1.msra.mxu0 0.0
    %3073 = vmatprep.subr.mxu0 0.0
    %3074 = vmatpush1.msra.mxu0 0.0
    %3075 = vmatprep.subr.mxu0 0.0
    %3076 = vmatpush1.msra.mxu0 0.0
    %3077 = vmatprep.mubr.f32.mxu0 0.0
    %3078 = vmatmul.mubr.f32.gmra.mrb[0].mxu0 %v803
    %v3079 = vpop.f32.mrb[0].mxu0
    %v3080 = vadd.f32 0.0, %v3079
    %v3081 = vpop.f32.mrb[0].mxu0
    %3082 = vmatprep.mubr.f32.mxu0 0.0
    %3083 = vmatmul.mubr.f32.gmra.mrb[0].mxu0 %v805
    %v3084 = vpop.f32.mrb[0].mxu0
    %v3085 = vadd.f32 0.0, %v3084
    %v3086 = vpop.f32.mrb[0].mxu0
    %3087 = vmatprep.mubr.f32.mxu0 0.0
    %3088 = vmatmul.mubr.f32.gmra.mrb[0].mxu0 %v807
    %v3089 = vpop.f32.mrb[0].mxu0
    %v3090 = vadd.f32 0.0, %v3089
    %v3091 = vpop.f32.mrb[0].mxu0
    %3092 = vmatprep.mubr.f32.mxu0 0.0
    %3093 = vmatmul.mubr.f32.gmra.mrb[0].mxu0 %v809
    %v3094 = vpop.f32.mrb[0].mxu0
    %v3095 = vadd.f32 0.0, %v3094
    %v3096 = vpop.f32.mrb[0].mxu0
    %3097 = vmatprep.mubr.f32.mxu0 0.0
    %3098 = vmatmul.mubr.f32.gmra.mrb[0].mxu0 %v811
    %v3099 = vpop.f32.mrb[0].mxu0
    %v3100 = vadd.f32 0.0, %v3099
    %v3101 = vpop.f32.mrb[0].mxu0
    %3102 = vmatprep.mubr.f32.mxu0 0.0
    %3103 = vmatmul.mubr.f32.gmra.mrb[0].mxu0 %v813
    %v3104 = vpop.f32.mrb[0].mxu0
    %v3105 = vadd.f32 0.0, %v3104
    %v3106 = vpop.f32.mrb[0].mxu0
    %3107 = vmatprep.mubr.f32.mxu0 0.0
    %3108 = vmatmul.mubr.f32.gmra.mrb[0].mxu0 %v815
    %v3109 = vpop.f32.mrb[0].mxu0
    %v3110 = vadd.f32 0.0, %v3109
    %v3111 = vpop.f32.mrb[0].mxu0
    %3112 = vmatprep.mubr.f32.mxu0 0.0
    %3113 = vmatmul.mubr.f32.gmra.mrb[0].mxu0 %v817
    %v3114 = vpop.f32.mrb[0].mxu0
    %v3115 = vadd.f32 0.0, %v3114
    %v3116 = vpop.f32.mrb[0].mxu0
    %3117 = vmatprep.mubr.f32.mxu0 0.0
    %3118 = vmatmul.mubr.f32.gmra.mrb[0].mxu0 %v1575
    %v3119 = vpop.f32.mrb[0].mxu0
    %v3120 = vadd.f32 0.0, %v3119
    %v3121 = vpop.f32.mrb[0].mxu0
    %3122 = vmatprep.mubr.f32.mxu0 0.0
    %3123 = vmatmul.mubr.f32.gmra.mrb[0].mxu0 %v2292
    %v3124 = vpop.f32.mrb[0].mxu0
    %v3125 = vadd.f32 0.0, %v3124
    %v3126 = vpop.f32.mrb[0].mxu0
    %3127 = vmatprep.mubr.f32.mxu0 0.0
    %3128 = vmatmul.mubr.f32.gmra.mrb[0].mxu0 %v3009
    %v3129 = vpop.f32.mrb[0].mxu0
    %v3130 = vadd.f32 0.0, %v3129
    %v3131 = vpop.f32.mrb[0].mxu0
    %3132 = vmatprep.mubr.f32.mxu0 0.0
    %3133 = vmatmul.mubr.f32.gmra.mrb[0].mxu0 %v3011
    %v3134 = vpop.f32.mrb[0].mxu0
    %v3135 = vadd.f32 0.0, %v3134
    %v3136 = vpop.f32.mrb[0].mxu0
    %3137 = vdwg.mxu0
    %v3138 = vadd.f32 %v2994, %v3080
    %v3139 = vadd.f32 %v2995, %v3085
    %v3140 = vadd.f32 %v2996, %v3090
    %v3141 = vadd.f32 %v2997, %v3095
    %v3142 = vadd.f32 %v2998, %v3100
    %v3143 = vadd.f32 %v2999, %v3105
    %v3144 = vadd.f32 %v3000, %v3110
    %v3145 = vadd.f32 %v3001, %v3115
    %v3146 = vadd.f32 %v3002, %v3120
    %v3147 = vadd.f32 %v3003, %v3125
    %v3148 = vadd.f32 %v3004, %v3130
    %v3149 = vadd.f32 %v3005, %v3135
    %v3150 = vld [vmem:[%s3 + $0x98] sm:$0xff]
    %v3151 = vrot.slane %v244, 4
    %v3152 = vsel %vm146, %v2434, %v3151
    %v3153 = vsel %vm288, %v3152, 0
    %v3155 = vsel %vm288, %v3151, 0
    %3157 = vmatprep.subr.mxu0 0.0
    %3158 = vmatpush1.msra.mxu0 %v3150
    %3159 = vmatprep.subr.mxu0 0.0
    %3160 = vmatpush1.msra.mxu0 0.0
    %3161 = vmatprep.subr.mxu0 0.0
    %3162 = vmatpush1.msra.mxu0 0.0
    %3163 = vmatprep.subr.mxu0 0.0
    %3164 = vmatpush1.msra.mxu0 0.0
    %3165 = vmatprep.subr.mxu0 0.0
    %3166 = vmatpush1.msra.mxu0 0.0
    %3167 = vmatprep.subr.mxu0 0.0
    %3168 = vmatpush1.msra.mxu0 0.0
    %3169 = vmatprep.subr.mxu0 0.0
    %3170 = vmatpush1.msra.mxu0 0.0
    %3171 = vmatprep.subr.mxu0 0.0
    %3172 = vmatpush1.msra.mxu0 0.0
    %3173 = vmatprep.subr.mxu0 0.0
    %3174 = vmatpush1.msra.mxu0 0.0
    %3175 = vmatprep.subr.mxu0 0.0
    %3176 = vmatpush1.msra.mxu0 0.0
    %3177 = vmatprep.subr.mxu0 0.0
    %3178 = vmatpush1.msra.mxu0 0.0
    %3179 = vmatprep.subr.mxu0 0.0
    %3180 = vmatpush1.msra.mxu0 0.0
    %3181 = vmatprep.subr.mxu0 0.0
    %3182 = vmatpush1.msra.mxu0 0.0
    %3183 = vmatprep.subr.mxu0 0.0
    %3184 = vmatpush1.msra.mxu0 0.0
    %3185 = vmatprep.subr.mxu0 0.0
    %3186 = vmatpush1.msra.mxu0 0.0
    %3187 = vmatprep.subr.mxu0 0.0
    %3188 = vmatpush1.msra.mxu0 0.0
    %3189 = vmatprep.subr.mxu0 0.0
    %3190 = vmatpush1.msra.mxu0 0.0
    %3191 = vmatprep.subr.mxu0 0.0
    %3192 = vmatpush1.msra.mxu0 0.0
    %3193 = vmatprep.subr.mxu0 0.0
    %3194 = vmatpush1.msra.mxu0 0.0
    %3195 = vmatprep.subr.mxu0 0.0
    %3196 = vmatpush1.msra.mxu0 0.0
    %3197 = vmatprep.subr.mxu0 0.0
    %3198 = vmatpush1.msra.mxu0 0.0
    %3199 = vmatprep.subr.mxu0 0.0
    %3200 = vmatpush1.msra.mxu0 0.0
    %3201 = vmatprep.subr.mxu0 0.0
    %3202 = vmatpush1.msra.mxu0 0.0
    %3203 = vmatprep.subr.mxu0 0.0
    %3204 = vmatpush1.msra.mxu0 0.0
    %3205 = vmatprep.subr.mxu0 0.0
    %3206 = vmatpush1.msra.mxu0 0.0
    %3207 = vmatprep.subr.mxu0 0.0
    %3208 = vmatpush1.msra.mxu0 0.0
    %3209 = vmatprep.subr.mxu0 0.0
    %3210 = vmatpush1.msra.mxu0 0.0
    %3211 = vmatprep.subr.mxu0 0.0
    %3212 = vmatpush1.msra.mxu0 0.0
    %3213 = vmatprep.subr.mxu0 0.0
    %3214 = vmatpush1.msra.mxu0 0.0
    %3215 = vmatprep.subr.mxu0 0.0
    %3216 = vmatpush1.msra.mxu0 0.0
    %3217 = vmatprep.subr.mxu0 0.0
    %3218 = vmatpush1.msra.mxu0 0.0
    %3219 = vmatprep.subr.mxu0 0.0
    %3220 = vmatpush1.msra.mxu0 0.0
    %3221 = vmatprep.mubr.f32.mxu0 0.0
    %3222 = vmatmul.mubr.f32.gmra.mrb[0].mxu0 %v988
    %v3223 = vpop.f32.mrb[0].mxu0
    %v3224 = vadd.f32 0.0, %v3223
    %v3225 = vpop.f32.mrb[0].mxu0
    %3226 = vmatprep.mubr.f32.mxu0 0.0
    %3227 = vmatmul.mubr.f32.gmra.mrb[0].mxu0 %v990
    %v3228 = vpop.f32.mrb[0].mxu0
    %v3229 = vadd.f32 0.0, %v3228
    %v3230 = vpop.f32.mrb[0].mxu0
    %3231 = vmatprep.mubr.f32.mxu0 0.0
    %3232 = vmatmul.mubr.f32.gmra.mrb[0].mxu0 %v992
    %v3233 = vpop.f32.mrb[0].mxu0
    %v3234 = vadd.f32 0.0, %v3233
    %v3235 = vpop.f32.mrb[0].mxu0
    %3236 = vmatprep.mubr.f32.mxu0 0.0
    %3237 = vmatmul.mubr.f32.gmra.mrb[0].mxu0 %v994
    %v3238 = vpop.f32.mrb[0].mxu0
    %v3239 = vadd.f32 0.0, %v3238
    %v3240 = vpop.f32.mrb[0].mxu0
    %3241 = vmatprep.mubr.f32.mxu0 0.0
    %3242 = vmatmul.mubr.f32.gmra.mrb[0].mxu0 %v996
    %v3243 = vpop.f32.mrb[0].mxu0
    %v3244 = vadd.f32 0.0, %v3243
    %v3245 = vpop.f32.mrb[0].mxu0
    %3246 = vmatprep.mubr.f32.mxu0 0.0
    %3247 = vmatmul.mubr.f32.gmra.mrb[0].mxu0 %v998
    %v3248 = vpop.f32.mrb[0].mxu0
    %v3249 = vadd.f32 0.0, %v3248
    %v3250 = vpop.f32.mrb[0].mxu0
    %3251 = vmatprep.mubr.f32.mxu0 0.0
    %3252 = vmatmul.mubr.f32.gmra.mrb[0].mxu0 %v1000
    %v3253 = vpop.f32.mrb[0].mxu0
    %v3254 = vadd.f32 0.0, %v3253
    %v3255 = vpop.f32.mrb[0].mxu0
    %3256 = vmatprep.mubr.f32.mxu0 0.0
    %3257 = vmatmul.mubr.f32.gmra.mrb[0].mxu0 %v1002
    %v3258 = vpop.f32.mrb[0].mxu0
    %v3259 = vadd.f32 0.0, %v3258
    %v3260 = vpop.f32.mrb[0].mxu0
    %3261 = vmatprep.mubr.f32.mxu0 0.0
    %3262 = vmatmul.mubr.f32.gmra.mrb[0].mxu0 %v1719
    %v3263 = vpop.f32.mrb[0].mxu0
    %v3264 = vadd.f32 0.0, %v3263
    %v3265 = vpop.f32.mrb[0].mxu0
    %3266 = vmatprep.mubr.f32.mxu0 0.0
    %3267 = vmatmul.mubr.f32.gmra.mrb[0].mxu0 %v2436
    %v3268 = vpop.f32.mrb[0].mxu0
    %v3269 = vadd.f32 0.0, %v3268
    %v3270 = vpop.f32.mrb[0].mxu0
    %3271 = vmatprep.mubr.f32.mxu0 0.0
    %3272 = vmatmul.mubr.f32.gmra.mrb[0].mxu0 %v3153
    %v3273 = vpop.f32.mrb[0].mxu0
    %v3274 = vadd.f32 0.0, %v3273
    %v3275 = vpop.f32.mrb[0].mxu0
    %3276 = vmatprep.mubr.f32.mxu0 0.0
    %3277 = vmatmul.mubr.f32.gmra.mrb[0].mxu0 %v3155
    %v3278 = vpop.f32.mrb[0].mxu0
    %v3279 = vadd.f32 0.0, %v3278
    %v3280 = vpop.f32.mrb[0].mxu0
    %3281 = vdwg.mxu0
    %v3282 = vadd.f32 %v3138, %v3224
    %v3283 = vadd.f32 %v3139, %v3229
    %v3284 = vadd.f32 %v3140, %v3234
    %v3285 = vadd.f32 %v3141, %v3239
    %v3286 = vadd.f32 %v3142, %v3244
    %v3287 = vadd.f32 %v3143, %v3249
    %v3288 = vadd.f32 %v3144, %v3254
    %v3289 = vadd.f32 %v3145, %v3259
    %v3290 = vadd.f32 %v3146, %v3264
    %v3291 = vadd.f32 %v3147, %v3269
    %v3292 = vadd.f32 %v3148, %v3274
    %v3293 = vadd.f32 %v3149, %v3279
    %v3294 = vld [vmem:[%s3 + $0xa0] sm:$0xff]
    %v3296 = vsel %vm288, %v247, 0
    %3298 = vmatprep.subr.mxu0 0.0
    %3299 = vmatpush1.msra.mxu0 %v3294
    %3300 = vmatprep.subr.mxu0 0.0
    %3301 = vmatpush1.msra.mxu0 0.0
    %3302 = vmatprep.subr.mxu0 0.0
    %3303 = vmatpush1.msra.mxu0 0.0
    %3304 = vmatprep.subr.mxu0 0.0
    %3305 = vmatpush1.msra.mxu0 0.0
    %3306 = vmatprep.subr.mxu0 0.0
    %3307 = vmatpush1.msra.mxu0 0.0
    %3308 = vmatprep.subr.mxu0 0.0
    %3309 = vmatpush1.msra.mxu0 0.0
    %3310 = vmatprep.subr.mxu0 0.0
    %3311 = vmatpush1.msra.mxu0 0.0
    %3312 = vmatprep.subr.mxu0 0.0
    %3313 = vmatpush1.msra.mxu0 0.0
    %3314 = vmatprep.subr.mxu0 0.0
    %3315 = vmatpush1.msra.mxu0 0.0
    %3316 = vmatprep.subr.mxu0 0.0
    %3317 = vmatpush1.msra.mxu0 0.0
    %3318 = vmatprep.subr.mxu0 0.0
    %3319 = vmatpush1.msra.mxu0 0.0
    %3320 = vmatprep.subr.mxu0 0.0
    %3321 = vmatpush1.msra.mxu0 0.0
    %3322 = vmatprep.subr.mxu0 0.0
    %3323 = vmatpush1.msra.mxu0 0.0
    %3324 = vmatprep.subr.mxu0 0.0
    %3325 = vmatpush1.msra.mxu0 0.0
    %3326 = vmatprep.subr.mxu0 0.0
    %3327 = vmatpush1.msra.mxu0 0.0
    %3328 = vmatprep.subr.mxu0 0.0
    %3329 = vmatpush1.msra.mxu0 0.0
    %3330 = vmatprep.subr.mxu0 0.0
    %3331 = vmatpush1.msra.mxu0 0.0
    %3332 = vmatprep.subr.mxu0 0.0
    %3333 = vmatpush1.msra.mxu0 0.0
    %3334 = vmatprep.subr.mxu0 0.0
    %3335 = vmatpush1.msra.mxu0 0.0
    %3336 = vmatprep.subr.mxu0 0.0
    %3337 = vmatpush1.msra.mxu0 0.0
    %3338 = vmatprep.subr.mxu0 0.0
    %3339 = vmatpush1.msra.mxu0 0.0
    %3340 = vmatprep.subr.mxu0 0.0
    %3341 = vmatpush1.msra.mxu0 0.0
    %3342 = vmatprep.subr.mxu0 0.0
    %3343 = vmatpush1.msra.mxu0 0.0
    %3344 = vmatprep.subr.mxu0 0.0
    %3345 = vmatpush1.msra.mxu0 0.0
    %3346 = vmatprep.subr.mxu0 0.0
    %3347 = vmatpush1.msra.mxu0 0.0
    %3348 = vmatprep.subr.mxu0 0.0
    %3349 = vmatpush1.msra.mxu0 0.0
    %3350 = vmatprep.subr.mxu0 0.0
    %3351 = vmatpush1.msra.mxu0 0.0
    %3352 = vmatprep.subr.mxu0 0.0
    %3353 = vmatpush1.msra.mxu0 0.0
    %3354 = vmatprep.subr.mxu0 0.0
    %3355 = vmatpush1.msra.mxu0 0.0
    %3356 = vmatprep.subr.mxu0 0.0
    %3357 = vmatpush1.msra.mxu0 0.0
    %3358 = vmatprep.subr.mxu0 0.0
    %3359 = vmatpush1.msra.mxu0 0.0
    %3360 = vmatprep.subr.mxu0 0.0
    %3361 = vmatpush1.msra.mxu0 0.0
    %3362 = vmatprep.mubr.f32.mxu0 0.0
    %3363 = vmatmul.mubr.f32.gmra.mrb[0].mxu0 %v446
    %v3364 = vpop.f32.mrb[0].mxu0
    %v3365 = vadd.f32 0.0, %v3364
    %v3366 = vpop.f32.mrb[0].mxu0
    %3367 = vmatprep.mubr.f32.mxu0 0.0
    %3368 = vmatmul.mubr.f32.gmra.mrb[0].mxu0 %v448
    %v3369 = vpop.f32.mrb[0].mxu0
    %v3370 = vadd.f32 0.0, %v3369
    %v3371 = vpop.f32.mrb[0].mxu0
    %3372 = vmatprep.mubr.f32.mxu0 0.0
    %3373 = vmatmul.mubr.f32.gmra.mrb[0].mxu0 %v450
    %v3374 = vpop.f32.mrb[0].mxu0
    %v3375 = vadd.f32 0.0, %v3374
    %v3376 = vpop.f32.mrb[0].mxu0
    %3377 = vmatprep.mubr.f32.mxu0 0.0
    %3378 = vmatmul.mubr.f32.gmra.mrb[0].mxu0 %v452
    %v3379 = vpop.f32.mrb[0].mxu0
    %v3380 = vadd.f32 0.0, %v3379
    %v3381 = vpop.f32.mrb[0].mxu0
    %3382 = vmatprep.mubr.f32.mxu0 0.0
    %3383 = vmatmul.mubr.f32.gmra.mrb[0].mxu0 %v454
    %v3384 = vpop.f32.mrb[0].mxu0
    %v3385 = vadd.f32 0.0, %v3384
    %v3386 = vpop.f32.mrb[0].mxu0
    %3387 = vmatprep.mubr.f32.mxu0 0.0
    %3388 = vmatmul.mubr.f32.gmra.mrb[0].mxu0 %v456
    %v3389 = vpop.f32.mrb[0].mxu0
    %v3390 = vadd.f32 0.0, %v3389
    %v3391 = vpop.f32.mrb[0].mxu0
    %3392 = vmatprep.mubr.f32.mxu0 0.0
    %3393 = vmatmul.mubr.f32.gmra.mrb[0].mxu0 %v458
    %v3394 = vpop.f32.mrb[0].mxu0
    %v3395 = vadd.f32 0.0, %v3394
    %v3396 = vpop.f32.mrb[0].mxu0
    %3397 = vmatprep.mubr.f32.mxu0 0.0
    %3398 = vmatmul.mubr.f32.gmra.mrb[0].mxu0 %v460
    %v3399 = vpop.f32.mrb[0].mxu0
    %v3400 = vadd.f32 0.0, %v3399
    %v3401 = vpop.f32.mrb[0].mxu0
    %3402 = vmatprep.mubr.f32.mxu0 0.0
    %3403 = vmatmul.mubr.f32.gmra.mrb[0].mxu0 %v1145
    %v3404 = vpop.f32.mrb[0].mxu0
    %v3405 = vadd.f32 0.0, %v3404
    %v3406 = vpop.f32.mrb[0].mxu0
    %3407 = vmatprep.mubr.f32.mxu0 0.0
    %3408 = vmatmul.mubr.f32.gmra.mrb[0].mxu0 %v1862
    %v3409 = vpop.f32.mrb[0].mxu0
    %v3410 = vadd.f32 0.0, %v3409
    %v3411 = vpop.f32.mrb[0].mxu0
    %3412 = vmatprep.mubr.f32.mxu0 0.0
    %3413 = vmatmul.mubr.f32.gmra.mrb[0].mxu0 %v2579
    %v3414 = vpop.f32.mrb[0].mxu0
    %v3415 = vadd.f32 0.0, %v3414
    %v3416 = vpop.f32.mrb[0].mxu0
    %3417 = vmatprep.mubr.f32.mxu0 0.0
    %3418 = vmatmul.mubr.f32.gmra.mrb[0].mxu0 %v3296
    %v3419 = vpop.f32.mrb[0].mxu0
    %v3420 = vadd.f32 0.0, %v3419
    %v3421 = vpop.f32.mrb[0].mxu0
    %3422 = vdwg.mxu0
    %v3423 = vadd.f32 %v3282, %v3365
    %v3424 = vadd.f32 %v3283, %v3370
    %v3425 = vadd.f32 %v3284, %v3375
    %v3426 = vadd.f32 %v3285, %v3380
    %v3427 = vadd.f32 %v3286, %v3385
    %v3428 = vadd.f32 %v3287, %v3390
    %v3429 = vadd.f32 %v3288, %v3395
    %v3430 = vadd.f32 %v3289, %v3400
    %v3431 = vadd.f32 %v3290, %v3405
    %v3432 = vadd.f32 %v3291, %v3410
    %v3433 = vadd.f32 %v3292, %v3415
    %v3434 = vadd.f32 %v3293, %v3420
    %v3435 = vld [vmem:[%s3 + $0xa8] sm:$0xff]
    %v3436 = vrot.slane %v247, 1
    %v3437 = vsel %vm264, %v2719, %v3436
    %v3438 = vsel %vm288, %v3437, 0
    %v3440 = vsel %vm288, %v3436, 0
    %3442 = vmatprep.subr.mxu0 0.0
    %3443 = vmatpush1.msra.mxu0 %v3435
    %3444 = vmatprep.subr.mxu0 0.0
    %3445 = vmatpush1.msra.mxu0 0.0
    %3446 = vmatprep.subr.mxu0 0.0
    %3447 = vmatpush1.msra.mxu0 0.0
    %3448 = vmatprep.subr.mxu0 0.0
    %3449 = vmatpush1.msra.mxu0 0.0
    %3450 = vmatprep.subr.mxu0 0.0
    %3451 = vmatpush1.msra.mxu0 0.0
    %3452 = vmatprep.subr.mxu0 0.0
    %3453 = vmatpush1.msra.mxu0 0.0
    %3454 = vmatprep.subr.mxu0 0.0
    %3455 = vmatpush1.msra.mxu0 0.0
    %3456 = vmatprep.subr.mxu0 0.0
    %3457 = vmatpush1.msra.mxu0 0.0
    %3458 = vmatprep.subr.mxu0 0.0
    %3459 = vmatpush1.msra.mxu0 0.0
    %3460 = vmatprep.subr.mxu0 0.0
    %3461 = vmatpush1.msra.mxu0 0.0
    %3462 = vmatprep.subr.mxu0 0.0
    %3463 = vmatpush1.msra.mxu0 0.0
    %3464 = vmatprep.subr.mxu0 0.0
    %3465 = vmatpush1.msra.mxu0 0.0
    %3466 = vmatprep.subr.mxu0 0.0
    %3467 = vmatpush1.msra.mxu0 0.0
    %3468 = vmatprep.subr.mxu0 0.0
    %3469 = vmatpush1.msra.mxu0 0.0
    %3470 = vmatprep.subr.mxu0 0.0
    %3471 = vmatpush1.msra.mxu0 0.0
    %3472 = vmatprep.subr.mxu0 0.0
    %3473 = vmatpush1.msra.mxu0 0.0
    %3474 = vmatprep.subr.mxu0 0.0
    %3475 = vmatpush1.msra.mxu0 0.0
    %3476 = vmatprep.subr.mxu0 0.0
    %3477 = vmatpush1.msra.mxu0 0.0
    %3478 = vmatprep.subr.mxu0 0.0
    %3479 = vmatpush1.msra.mxu0 0.0
    %3480 = vmatprep.subr.mxu0 0.0
    %3481 = vmatpush1.msra.mxu0 0.0
    %3482 = vmatprep.subr.mxu0 0.0
    %3483 = vmatpush1.msra.mxu0 0.0
    %3484 = vmatprep.subr.mxu0 0.0
    %3485 = vmatpush1.msra.mxu0 0.0
    %3486 = vmatprep.subr.mxu0 0.0
    %3487 = vmatpush1.msra.mxu0 0.0
    %3488 = vmatprep.subr.mxu0 0.0
    %3489 = vmatpush1.msra.mxu0 0.0
    %3490 = vmatprep.subr.mxu0 0.0
    %3491 = vmatpush1.msra.mxu0 0.0
    %3492 = vmatprep.subr.mxu0 0.0
    %3493 = vmatpush1.msra.mxu0 0.0
    %3494 = vmatprep.subr.mxu0 0.0
    %3495 = vmatpush1.msra.mxu0 0.0
    %3496 = vmatprep.subr.mxu0 0.0
    %3497 = vmatpush1.msra.mxu0 0.0
    %3498 = vmatprep.subr.mxu0 0.0
    %3499 = vmatpush1.msra.mxu0 0.0
    %3500 = vmatprep.subr.mxu0 0.0
    %3501 = vmatpush1.msra.mxu0 0.0
    %3502 = vmatprep.subr.mxu0 0.0
    %3503 = vmatpush1.msra.mxu0 0.0
    %3504 = vmatprep.subr.mxu0 0.0
    %3505 = vmatpush1.msra.mxu0 0.0
    %3506 = vmatprep.mubr.f32.mxu0 0.0
    %3507 = vmatmul.mubr.f32.gmra.mrb[0].mxu0 %v297
    %v3508 = vpop.f32.mrb[0].mxu0
    %v3509 = vadd.f32 0.0, %v3508
    %v3510 = vpop.f32.mrb[0].mxu0
    %3511 = vmatprep.mubr.f32.mxu0 0.0
    %3512 = vmatmul.mubr.f32.gmra.mrb[0].mxu0 %v299
    %v3513 = vpop.f32.mrb[0].mxu0
    %v3514 = vadd.f32 0.0, %v3513
    %v3515 = vpop.f32.mrb[0].mxu0
    %3516 = vmatprep.mubr.f32.mxu0 0.0
    %3517 = vmatmul.mubr.f32.gmra.mrb[0].mxu0 %v301
    %v3518 = vpop.f32.mrb[0].mxu0
    %v3519 = vadd.f32 0.0, %v3518
    %v3520 = vpop.f32.mrb[0].mxu0
    %3521 = vmatprep.mubr.f32.mxu0 0.0
    %3522 = vmatmul.mubr.f32.gmra.mrb[0].mxu0 %v303
    %v3523 = vpop.f32.mrb[0].mxu0
    %v3524 = vadd.f32 0.0, %v3523
    %v3525 = vpop.f32.mrb[0].mxu0
    %3526 = vmatprep.mubr.f32.mxu0 0.0
    %3527 = vmatmul.mubr.f32.gmra.mrb[0].mxu0 %v305
    %v3528 = vpop.f32.mrb[0].mxu0
    %v3529 = vadd.f32 0.0, %v3528
    %v3530 = vpop.f32.mrb[0].mxu0
    %3531 = vmatprep.mubr.f32.mxu0 0.0
    %3532 = vmatmul.mubr.f32.gmra.mrb[0].mxu0 %v307
    %v3533 = vpop.f32.mrb[0].mxu0
    %v3534 = vadd.f32 0.0, %v3533
    %v3535 = vpop.f32.mrb[0].mxu0
    %3536 = vmatprep.mubr.f32.mxu0 0.0
    %3537 = vmatmul.mubr.f32.gmra.mrb[0].mxu0 %v309
    %v3538 = vpop.f32.mrb[0].mxu0
    %v3539 = vadd.f32 0.0, %v3538
    %v3540 = vpop.f32.mrb[0].mxu0
    %3541 = vmatprep.mubr.f32.mxu0 0.0
    %3542 = vmatmul.mubr.f32.gmra.mrb[0].mxu0 %v1287
    %v3543 = vpop.f32.mrb[0].mxu0
    %v3544 = vadd.f32 0.0, %v3543
    %v3545 = vpop.f32.mrb[0].mxu0
    %3546 = vmatprep.mubr.f32.mxu0 0.0
    %3547 = vmatmul.mubr.f32.gmra.mrb[0].mxu0 %v2004
    %v3548 = vpop.f32.mrb[0].mxu0
    %v3549 = vadd.f32 0.0, %v3548
    %v3550 = vpop.f32.mrb[0].mxu0
    %3551 = vmatprep.mubr.f32.mxu0 0.0
    %3552 = vmatmul.mubr.f32.gmra.mrb[0].mxu0 %v2721
    %v3553 = vpop.f32.mrb[0].mxu0
    %v3554 = vadd.f32 0.0, %v3553
    %v3555 = vpop.f32.mrb[0].mxu0
    %3556 = vmatprep.mubr.f32.mxu0 0.0
    %3557 = vmatmul.mubr.f32.gmra.mrb[0].mxu0 %v3438
    %v3558 = vpop.f32.mrb[0].mxu0
    %v3559 = vadd.f32 0.0, %v3558
    %v3560 = vpop.f32.mrb[0].mxu0
    %3561 = vmatprep.mubr.f32.mxu0 0.0
    %3562 = vmatmul.mubr.f32.gmra.mrb[0].mxu0 %v3440
    %v3563 = vpop.f32.mrb[0].mxu0
    %v3564 = vadd.f32 0.0, %v3563
    %v3565 = vpop.f32.mrb[0].mxu0
    %3566 = vdwg.mxu0
    %v3567 = vadd.f32 %v3423, %v3509
    %v3568 = vadd.f32 %v3424, %v3514
    %v3569 = vadd.f32 %v3425, %v3519
    %v3570 = vadd.f32 %v3426, %v3524
    %v3571 = vadd.f32 %v3427, %v3529
    %v3572 = vadd.f32 %v3428, %v3534
    %v3573 = vadd.f32 %v3429, %v3539
    %v3574 = vadd.f32 %v3430, %v3544
    %v3575 = vadd.f32 %v3431, %v3549
    %v3576 = vadd.f32 %v3432, %v3554
    %v3577 = vadd.f32 %v3433, %v3559
    %v3578 = vadd.f32 %v3434, %v3564
    %v3579 = vld [vmem:[%s3 + $0xb0] sm:$0xff]
    %v3580 = vrot.slane %v247, 2
    %v3581 = vsel %vm588, %v2863, %v3580
    %v3582 = vsel %vm288, %v3581, 0
    %v3584 = vsel %vm288, %v3580, 0
    %3586 = vmatprep.subr.mxu0 0.0
    %3587 = vmatpush1.msra.mxu0 %v3579
    %3588 = vmatprep.subr.mxu0 0.0
    %3589 = vmatpush1.msra.mxu0 0.0
    %3590 = vmatprep.subr.mxu0 0.0
    %3591 = vmatpush1.msra.mxu0 0.0
    %3592 = vmatprep.subr.mxu0 0.0
    %3593 = vmatpush1.msra.mxu0 0.0
    %3594 = vmatprep.subr.mxu0 0.0
    %3595 = vmatpush1.msra.mxu0 0.0
    %3596 = vmatprep.subr.mxu0 0.0
    %3597 = vmatpush1.msra.mxu0 0.0
    %3598 = vmatprep.subr.mxu0 0.0
    %3599 = vmatpush1.msra.mxu0 0.0
    %3600 = vmatprep.subr.mxu0 0.0
    %3601 = vmatpush1.msra.mxu0 0.0
    %3602 = vmatprep.subr.mxu0 0.0
    %3603 = vmatpush1.msra.mxu0 0.0
    %3604 = vmatprep.subr.mxu0 0.0
    %3605 = vmatpush1.msra.mxu0 0.0
    %3606 = vmatprep.subr.mxu0 0.0
    %3607 = vmatpush1.msra.mxu0 0.0
    %3608 = vmatprep.subr.mxu0 0.0
    %3609 = vmatpush1.msra.mxu0 0.0
    %3610 = vmatprep.subr.mxu0 0.0
    %3611 = vmatpush1.msra.mxu0 0.0
    %3612 = vmatprep.subr.mxu0 0.0
    %3613 = vmatpush1.msra.mxu0 0.0
    %3614 = vmatprep.subr.mxu0 0.0
    %3615 = vmatpush1.msra.mxu0 0.0
    %3616 = vmatprep.subr.mxu0 0.0
    %3617 = vmatpush1.msra.mxu0 0.0
    %3618 = vmatprep.subr.mxu0 0.0
    %3619 = vmatpush1.msra.mxu0 0.0
    %3620 = vmatprep.subr.mxu0 0.0
    %3621 = vmatpush1.msra.mxu0 0.0
    %3622 = vmatprep.subr.mxu0 0.0
    %3623 = vmatpush1.msra.mxu0 0.0
    %3624 = vmatprep.subr.mxu0 0.0
    %3625 = vmatpush1.msra.mxu0 0.0
    %3626 = vmatprep.subr.mxu0 0.0
    %3627 = vmatpush1.msra.mxu0 0.0
    %3628 = vmatprep.subr.mxu0 0.0
    %3629 = vmatpush1.msra.mxu0 0.0
    %3630 = vmatprep.subr.mxu0 0.0
    %3631 = vmatpush1.msra.mxu0 0.0
    %3632 = vmatprep.subr.mxu0 0.0
    %3633 = vmatpush1.msra.mxu0 0.0
    %3634 = vmatprep.subr.mxu0 0.0
    %3635 = vmatpush1.msra.mxu0 0.0
    %3636 = vmatprep.subr.mxu0 0.0
    %3637 = vmatpush1.msra.mxu0 0.0
    %3638 = vmatprep.subr.mxu0 0.0
    %3639 = vmatpush1.msra.mxu0 0.0
    %3640 = vmatprep.subr.mxu0 0.0
    %3641 = vmatpush1.msra.mxu0 0.0
    %3642 = vmatprep.subr.mxu0 0.0
    %3643 = vmatpush1.msra.mxu0 0.0
    %3644 = vmatprep.subr.mxu0 0.0
    %3645 = vmatpush1.msra.mxu0 0.0
    %3646 = vmatprep.subr.mxu0 0.0
    %3647 = vmatpush1.msra.mxu0 0.0
    %3648 = vmatprep.subr.mxu0 0.0
    %3649 = vmatpush1.msra.mxu0 0.0
    %3650 = vmatprep.mubr.f32.mxu0 0.0
    %3651 = vmatmul.mubr.f32.gmra.mrb[0].mxu0 %v620
    %v3652 = vpop.f32.mrb[0].mxu0
    %v3653 = vadd.f32 0.0, %v3652
    %v3654 = vpop.f32.mrb[0].mxu0
    %3655 = vmatprep.mubr.f32.mxu0 0.0
    %3656 = vmatmul.mubr.f32.gmra.mrb[0].mxu0 %v622
    %v3657 = vpop.f32.mrb[0].mxu0
    %v3658 = vadd.f32 0.0, %v3657
    %v3659 = vpop.f32.mrb[0].mxu0
    %3660 = vmatprep.mubr.f32.mxu0 0.0
    %3661 = vmatmul.mubr.f32.gmra.mrb[0].mxu0 %v624
    %v3662 = vpop.f32.mrb[0].mxu0
    %v3663 = vadd.f32 0.0, %v3662
    %v3664 = vpop.f32.mrb[0].mxu0
    %3665 = vmatprep.mubr.f32.mxu0 0.0
    %3666 = vmatmul.mubr.f32.gmra.mrb[0].mxu0 %v626
    %v3667 = vpop.f32.mrb[0].mxu0
    %v3668 = vadd.f32 0.0, %v3667
    %v3669 = vpop.f32.mrb[0].mxu0
    %3670 = vmatprep.mubr.f32.mxu0 0.0
    %3671 = vmatmul.mubr.f32.gmra.mrb[0].mxu0 %v628
    %v3672 = vpop.f32.mrb[0].mxu0
    %v3673 = vadd.f32 0.0, %v3672
    %v3674 = vpop.f32.mrb[0].mxu0
    %3675 = vmatprep.mubr.f32.mxu0 0.0
    %3676 = vmatmul.mubr.f32.gmra.mrb[0].mxu0 %v630
    %v3677 = vpop.f32.mrb[0].mxu0
    %v3678 = vadd.f32 0.0, %v3677
    %v3679 = vpop.f32.mrb[0].mxu0
    %3680 = vmatprep.mubr.f32.mxu0 0.0
    %3681 = vmatmul.mubr.f32.gmra.mrb[0].mxu0 %v632
    %v3682 = vpop.f32.mrb[0].mxu0
    %v3683 = vadd.f32 0.0, %v3682
    %v3684 = vpop.f32.mrb[0].mxu0
    %3685 = vmatprep.mubr.f32.mxu0 0.0
    %3686 = vmatmul.mubr.f32.gmra.mrb[0].mxu0 %v1431
    %v3687 = vpop.f32.mrb[0].mxu0
    %v3688 = vadd.f32 0.0, %v3687
    %v3689 = vpop.f32.mrb[0].mxu0
    %3690 = vmatprep.mubr.f32.mxu0 0.0
    %3691 = vmatmul.mubr.f32.gmra.mrb[0].mxu0 %v2148
    %v3692 = vpop.f32.mrb[0].mxu0
    %v3693 = vadd.f32 0.0, %v3692
    %v3694 = vpop.f32.mrb[0].mxu0
    %3695 = vmatprep.mubr.f32.mxu0 0.0
    %3696 = vmatmul.mubr.f32.gmra.mrb[0].mxu0 %v2865
    %v3697 = vpop.f32.mrb[0].mxu0
    %v3698 = vadd.f32 0.0, %v3697
    %v3699 = vpop.f32.mrb[0].mxu0
    %3700 = vmatprep.mubr.f32.mxu0 0.0
    %3701 = vmatmul.mubr.f32.gmra.mrb[0].mxu0 %v3582
    %v3702 = vpop.f32.mrb[0].mxu0
    %v3703 = vadd.f32 0.0, %v3702
    %v3704 = vpop.f32.mrb[0].mxu0
    %3705 = vmatprep.mubr.f32.mxu0 0.0
    %3706 = vmatmul.mubr.f32.gmra.mrb[0].mxu0 %v3584
    %v3707 = vpop.f32.mrb[0].mxu0
    %v3708 = vadd.f32 0.0, %v3707
    %v3709 = vpop.f32.mrb[0].mxu0
    %3710 = vdwg.mxu0
    %v3711 = vadd.f32 %v3567, %v3653
    %v3712 = vadd.f32 %v3568, %v3658
    %v3713 = vadd.f32 %v3569, %v3663
    %v3714 = vadd.f32 %v3570, %v3668
    %v3715 = vadd.f32 %v3571, %v3673
    %v3716 = vadd.f32 %v3572, %v3678
    %v3717 = vadd.f32 %v3573, %v3683
    %v3718 = vadd.f32 %v3574, %v3688
    %v3719 = vadd.f32 %v3575, %v3693
    %v3720 = vadd.f32 %v3576, %v3698
    %v3721 = vadd.f32 %v3577, %v3703
    %v3722 = vadd.f32 %v3578, %v3708
    %v3723 = vld [vmem:[%s3 + $0xb8] sm:$0xff]
    %v3724 = vrot.slane %v247, 3
    %v3725 = vsel %vm147, %v3007, %v3724
    %v3726 = vsel %vm288, %v3725, 0
    %v3728 = vsel %vm288, %v3724, 0
    %3730 = vmatprep.subr.mxu0 0.0
    %3731 = vmatpush1.msra.mxu0 %v3723
    %3732 = vmatprep.subr.mxu0 0.0
    %3733 = vmatpush1.msra.mxu0 0.0
    %3734 = vmatprep.subr.mxu0 0.0
    %3735 = vmatpush1.msra.mxu0 0.0
    %3736 = vmatprep.subr.mxu0 0.0
    %3737 = vmatpush1.msra.mxu0 0.0
    %3738 = vmatprep.subr.mxu0 0.0
    %3739 = vmatpush1.msra.mxu0 0.0
    %3740 = vmatprep.subr.mxu0 0.0
    %3741 = vmatpush1.msra.mxu0 0.0
    %3742 = vmatprep.subr.mxu0 0.0
    %3743 = vmatpush1.msra.mxu0 0.0
    %3744 = vmatprep.subr.mxu0 0.0
    %3745 = vmatpush1.msra.mxu0 0.0
    %3746 = vmatprep.subr.mxu0 0.0
    %3747 = vmatpush1.msra.mxu0 0.0
    %3748 = vmatprep.subr.mxu0 0.0
    %3749 = vmatpush1.msra.mxu0 0.0
    %3750 = vmatprep.subr.mxu0 0.0
    %3751 = vmatpush1.msra.mxu0 0.0
    %3752 = vmatprep.subr.mxu0 0.0
    %3753 = vmatpush1.msra.mxu0 0.0
    %3754 = vmatprep.subr.mxu0 0.0
    %3755 = vmatpush1.msra.mxu0 0.0
    %3756 = vmatprep.subr.mxu0 0.0
    %3757 = vmatpush1.msra.mxu0 0.0
    %3758 = vmatprep.subr.mxu0 0.0
    %3759 = vmatpush1.msra.mxu0 0.0
    %3760 = vmatprep.subr.mxu0 0.0
    %3761 = vmatpush1.msra.mxu0 0.0
    %3762 = vmatprep.subr.mxu0 0.0
    %3763 = vmatpush1.msra.mxu0 0.0
    %3764 = vmatprep.subr.mxu0 0.0
    %3765 = vmatpush1.msra.mxu0 0.0
    %3766 = vmatprep.subr.mxu0 0.0
    %3767 = vmatpush1.msra.mxu0 0.0
    %3768 = vmatprep.subr.mxu0 0.0
    %3769 = vmatpush1.msra.mxu0 0.0
    %3770 = vmatprep.subr.mxu0 0.0
    %3771 = vmatpush1.msra.mxu0 0.0
    %3772 = vmatprep.subr.mxu0 0.0
    %3773 = vmatpush1.msra.mxu0 0.0
    %3774 = vmatprep.subr.mxu0 0.0
    %3775 = vmatpush1.msra.mxu0 0.0
    %3776 = vmatprep.subr.mxu0 0.0
    %3777 = vmatpush1.msra.mxu0 0.0
    %3778 = vmatprep.subr.mxu0 0.0
    %3779 = vmatpush1.msra.mxu0 0.0
    %3780 = vmatprep.subr.mxu0 0.0
    %3781 = vmatpush1.msra.mxu0 0.0
    %3782 = vmatprep.subr.mxu0 0.0
    %3783 = vmatpush1.msra.mxu0 0.0
    %3784 = vmatprep.subr.mxu0 0.0
    %3785 = vmatpush1.msra.mxu0 0.0
    %3786 = vmatprep.subr.mxu0 0.0
    %3787 = vmatpush1.msra.mxu0 0.0
    %3788 = vmatprep.subr.mxu0 0.0
    %3789 = vmatpush1.msra.mxu0 0.0
    %3790 = vmatprep.subr.mxu0 0.0
    %3791 = vmatpush1.msra.mxu0 0.0
    %3792 = vmatprep.subr.mxu0 0.0
    %3793 = vmatpush1.msra.mxu0 0.0
    %3794 = vmatprep.mubr.f32.mxu0 0.0
    %3795 = vmatmul.mubr.f32.gmra.mrb[0].mxu0 %v805
    %v3796 = vpop.f32.mrb[0].mxu0
    %v3797 = vadd.f32 0.0, %v3796
    %v3798 = vpop.f32.mrb[0].mxu0
    %3799 = vmatprep.mubr.f32.mxu0 0.0
    %3800 = vmatmul.mubr.f32.gmra.mrb[0].mxu0 %v807
    %v3801 = vpop.f32.mrb[0].mxu0
    %v3802 = vadd.f32 0.0, %v3801
    %v3803 = vpop.f32.mrb[0].mxu0
    %3804 = vmatprep.mubr.f32.mxu0 0.0
    %3805 = vmatmul.mubr.f32.gmra.mrb[0].mxu0 %v809
    %v3806 = vpop.f32.mrb[0].mxu0
    %v3807 = vadd.f32 0.0, %v3806
    %v3808 = vpop.f32.mrb[0].mxu0
    %3809 = vmatprep.mubr.f32.mxu0 0.0
    %3810 = vmatmul.mubr.f32.gmra.mrb[0].mxu0 %v811
    %v3811 = vpop.f32.mrb[0].mxu0
    %v3812 = vadd.f32 0.0, %v3811
    %v3813 = vpop.f32.mrb[0].mxu0
    %3814 = vmatprep.mubr.f32.mxu0 0.0
    %3815 = vmatmul.mubr.f32.gmra.mrb[0].mxu0 %v813
    %v3816 = vpop.f32.mrb[0].mxu0
    %v3817 = vadd.f32 0.0, %v3816
    %v3818 = vpop.f32.mrb[0].mxu0
    %3819 = vmatprep.mubr.f32.mxu0 0.0
    %3820 = vmatmul.mubr.f32.gmra.mrb[0].mxu0 %v815
    %v3821 = vpop.f32.mrb[0].mxu0
    %v3822 = vadd.f32 0.0, %v3821
    %v3823 = vpop.f32.mrb[0].mxu0
    %3824 = vmatprep.mubr.f32.mxu0 0.0
    %3825 = vmatmul.mubr.f32.gmra.mrb[0].mxu0 %v817
    %v3826 = vpop.f32.mrb[0].mxu0
    %v3827 = vadd.f32 0.0, %v3826
    %v3828 = vpop.f32.mrb[0].mxu0
    %3829 = vmatprep.mubr.f32.mxu0 0.0
    %3830 = vmatmul.mubr.f32.gmra.mrb[0].mxu0 %v1575
    %v3831 = vpop.f32.mrb[0].mxu0
    %v3832 = vadd.f32 0.0, %v3831
    %v3833 = vpop.f32.mrb[0].mxu0
    %3834 = vmatprep.mubr.f32.mxu0 0.0
    %3835 = vmatmul.mubr.f32.gmra.mrb[0].mxu0 %v2292
    %v3836 = vpop.f32.mrb[0].mxu0
    %v3837 = vadd.f32 0.0, %v3836
    %v3838 = vpop.f32.mrb[0].mxu0
    %3839 = vmatprep.mubr.f32.mxu0 0.0
    %3840 = vmatmul.mubr.f32.gmra.mrb[0].mxu0 %v3009
    %v3841 = vpop.f32.mrb[0].mxu0
    %v3842 = vadd.f32 0.0, %v3841
    %v3843 = vpop.f32.mrb[0].mxu0
    %3844 = vmatprep.mubr.f32.mxu0 0.0
    %3845 = vmatmul.mubr.f32.gmra.mrb[0].mxu0 %v3726
    %v3846 = vpop.f32.mrb[0].mxu0
    %v3847 = vadd.f32 0.0, %v3846
    %v3848 = vpop.f32.mrb[0].mxu0
    %3849 = vmatprep.mubr.f32.mxu0 0.0
    %3850 = vmatmul.mubr.f32.gmra.mrb[0].mxu0 %v3728
    %v3851 = vpop.f32.mrb[0].mxu0
    %v3852 = vadd.f32 0.0, %v3851
    %v3853 = vpop.f32.mrb[0].mxu0
    %3854 = vdwg.mxu0
    %v3855 = vadd.f32 %v3711, %v3797
    %v3856 = vadd.f32 %v3712, %v3802
    %v3857 = vadd.f32 %v3713, %v3807
    %v3858 = vadd.f32 %v3714, %v3812
    %v3859 = vadd.f32 %v3715, %v3817
    %v3860 = vadd.f32 %v3716, %v3822
    %v3861 = vadd.f32 %v3717, %v3827
    %v3862 = vadd.f32 %v3718, %v3832
    %v3863 = vadd.f32 %v3719, %v3837
    %v3864 = vadd.f32 %v3720, %v3842
    %v3865 = vadd.f32 %v3721, %v3847
    %v3866 = vadd.f32 %v3722, %v3852
    %v3867 = vld [vmem:[%s3 + $0xc0] sm:$0xff]
    %v3868 = vrot.slane %v247, 4
    %v3869 = vsel %vm146, %v3151, %v3868
    %v3870 = vsel %vm288, %v3869, 0
    %v3872 = vsel %vm288, %v3868, 0
    %3874 = vmatprep.subr.mxu0 0.0
    %3875 = vmatpush1.msra.mxu0 %v3867
    %3876 = vmatprep.subr.mxu0 0.0
    %3877 = vmatpush1.msra.mxu0 0.0
    %3878 = vmatprep.subr.mxu0 0.0
    %3879 = vmatpush1.msra.mxu0 0.0
    %3880 = vmatprep.subr.mxu0 0.0
    %3881 = vmatpush1.msra.mxu0 0.0
    %3882 = vmatprep.subr.mxu0 0.0
    %3883 = vmatpush1.msra.mxu0 0.0
    %3884 = vmatprep.subr.mxu0 0.0
    %3885 = vmatpush1.msra.mxu0 0.0
    %3886 = vmatprep.subr.mxu0 0.0
    %3887 = vmatpush1.msra.mxu0 0.0
    %3888 = vmatprep.subr.mxu0 0.0
    %3889 = vmatpush1.msra.mxu0 0.0
    %3890 = vmatprep.subr.mxu0 0.0
    %3891 = vmatpush1.msra.mxu0 0.0
    %3892 = vmatprep.subr.mxu0 0.0
    %3893 = vmatpush1.msra.mxu0 0.0
    %3894 = vmatprep.subr.mxu0 0.0
    %3895 = vmatpush1.msra.mxu0 0.0
    %3896 = vmatprep.subr.mxu0 0.0
    %3897 = vmatpush1.msra.mxu0 0.0
    %3898 = vmatprep.subr.mxu0 0.0
    %3899 = vmatpush1.msra.mxu0 0.0
    %3900 = vmatprep.subr.mxu0 0.0
    %3901 = vmatpush1.msra.mxu0 0.0
    %3902 = vmatprep.subr.mxu0 0.0
    %3903 = vmatpush1.msra.mxu0 0.0
    %3904 = vmatprep.subr.mxu0 0.0
    %3905 = vmatpush1.msra.mxu0 0.0
    %3906 = vmatprep.subr.mxu0 0.0
    %3907 = vmatpush1.msra.mxu0 0.0
    %3908 = vmatprep.subr.mxu0 0.0
    %3909 = vmatpush1.msra.mxu0 0.0
    %3910 = vmatprep.subr.mxu0 0.0
    %3911 = vmatpush1.msra.mxu0 0.0
    %3912 = vmatprep.subr.mxu0 0.0
    %3913 = vmatpush1.msra.mxu0 0.0
    %3914 = vmatprep.subr.mxu0 0.0
    %3915 = vmatpush1.msra.mxu0 0.0
    %3916 = vmatprep.subr.mxu0 0.0
    %3917 = vmatpush1.msra.mxu0 0.0
    %3918 = vmatprep.subr.mxu0 0.0
    %3919 = vmatpush1.msra.mxu0 0.0
    %3920 = vmatprep.subr.mxu0 0.0
    %3921 = vmatpush1.msra.mxu0 0.0
    %3922 = vmatprep.subr.mxu0 0.0
    %3923 = vmatpush1.msra.mxu0 0.0
    %3924 = vmatprep.subr.mxu0 0.0
    %3925 = vmatpush1.msra.mxu0 0.0
    %3926 = vmatprep.subr.mxu0 0.0
    %3927 = vmatpush1.msra.mxu0 0.0
    %3928 = vmatprep.subr.mxu0 0.0
    %3929 = vmatpush1.msra.mxu0 0.0
    %3930 = vmatprep.subr.mxu0 0.0
    %3931 = vmatpush1.msra.mxu0 0.0
    %3932 = vmatprep.subr.mxu0 0.0
    %3933 = vmatpush1.msra.mxu0 0.0
    %3934 = vmatprep.subr.mxu0 0.0
    %3935 = vmatpush1.msra.mxu0 0.0
    %3936 = vmatprep.subr.mxu0 0.0
    %3937 = vmatpush1.msra.mxu0 0.0
    %3938 = vmatprep.mubr.f32.mxu0 0.0
    %3939 = vmatmul.mubr.f32.gmra.mrb[0].mxu0 %v990
    %v3940 = vpop.f32.mrb[0].mxu0
    %v3941 = vadd.f32 0.0, %v3940
    %v3942 = vpop.f32.mrb[0].mxu0
    %3943 = vmatprep.mubr.f32.mxu0 0.0
    %3944 = vmatmul.mubr.f32.gmra.mrb[0].mxu0 %v992
    %v3945 = vpop.f32.mrb[0].mxu0
    %v3946 = vadd.f32 0.0, %v3945
    %v3947 = vpop.f32.mrb[0].mxu0
    %3948 = vmatprep.mubr.f32.mxu0 0.0
    %3949 = vmatmul.mubr.f32.gmra.mrb[0].mxu0 %v994
    %v3950 = vpop.f32.mrb[0].mxu0
    %v3951 = vadd.f32 0.0, %v3950
    %v3952 = vpop.f32.mrb[0].mxu0
    %3953 = vmatprep.mubr.f32.mxu0 0.0
    %3954 = vmatmul.mubr.f32.gmra.mrb[0].mxu0 %v996
    %v3955 = vpop.f32.mrb[0].mxu0
    %v3956 = vadd.f32 0.0, %v3955
    %v3957 = vpop.f32.mrb[0].mxu0
    %3958 = vmatprep.mubr.f32.mxu0 0.0
    %3959 = vmatmul.mubr.f32.gmra.mrb[0].mxu0 %v998
    %v3960 = vpop.f32.mrb[0].mxu0
    %v3961 = vadd.f32 0.0, %v3960
    %v3962 = vpop.f32.mrb[0].mxu0
    %3963 = vmatprep.mubr.f32.mxu0 0.0
    %3964 = vmatmul.mubr.f32.gmra.mrb[0].mxu0 %v1000
    %v3965 = vpop.f32.mrb[0].mxu0
    %v3966 = vadd.f32 0.0, %v3965
    %v3967 = vpop.f32.mrb[0].mxu0
    %3968 = vmatprep.mubr.f32.mxu0 0.0
    %3969 = vmatmul.mubr.f32.gmra.mrb[0].mxu0 %v1002
    %v3970 = vpop.f32.mrb[0].mxu0
    %v3971 = vadd.f32 0.0, %v3970
    %v3972 = vpop.f32.mrb[0].mxu0
    %3973 = vmatprep.mubr.f32.mxu0 0.0
    %3974 = vmatmul.mubr.f32.gmra.mrb[0].mxu0 %v1719
    %v3975 = vpop.f32.mrb[0].mxu0
    %v3976 = vadd.f32 0.0, %v3975
    %v3977 = vpop.f32.mrb[0].mxu0
    %3978 = vmatprep.mubr.f32.mxu0 0.0
    %3979 = vmatmul.mubr.f32.gmra.mrb[0].mxu0 %v2436
    %v3980 = vpop.f32.mrb[0].mxu0
    %v3981 = vadd.f32 0.0, %v3980
    %v3982 = vpop.f32.mrb[0].mxu0
    %3983 = vmatprep.mubr.f32.mxu0 0.0
    %3984 = vmatmul.mubr.f32.gmra.mrb[0].mxu0 %v3153
    %v3985 = vpop.f32.mrb[0].mxu0
    %v3986 = vadd.f32 0.0, %v3985
    %v3987 = vpop.f32.mrb[0].mxu0
    %3988 = vmatprep.mubr.f32.mxu0 0.0
    %3989 = vmatmul.mubr.f32.gmra.mrb[0].mxu0 %v3870
    %v3990 = vpop.f32.mrb[0].mxu0
    %v3991 = vadd.f32 0.0, %v3990
    %v3992 = vpop.f32.mrb[0].mxu0
    %3993 = vmatprep.mubr.f32.mxu0 0.0
    %3994 = vmatmul.mubr.f32.gmra.mrb[0].mxu0 %v3872
    %v3995 = vpop.f32.mrb[0].mxu0
    %v3996 = vadd.f32 0.0, %v3995
    %v3997 = vpop.f32.mrb[0].mxu0
    %3998 = vdwg.mxu0
    %v3999 = vadd.f32 %v3855, %v3941
    %v4000 = vadd.f32 %v3856, %v3946
    %v4001 = vadd.f32 %v3857, %v3951
    %v4002 = vadd.f32 %v3858, %v3956
    %v4003 = vadd.f32 %v3859, %v3961
    %v4004 = vadd.f32 %v3860, %v3966
    %v4005 = vadd.f32 %v3861, %v3971
    %v4006 = vadd.f32 %v3862, %v3976
    %v4007 = vadd.f32 %v3863, %v3981
    %v4008 = vadd.f32 %v3864, %v3986
    %v4009 = vadd.f32 %v3865, %v3991
    %v4010 = vadd.f32 %v3866, %v3996
    %v4011 = vld [vmem:[%s4] sm:$0x1]
    %v4013 = vlaneseq
    %v4014 = vshrl.u32 %v4013, 7
    %v4015 = vsub.s32 0, %v4014
    %v4016 = vrot.slane %v4011, %v4015
    %v4018 = vadd.f32 %v3999, %v4016
    %v4019 = vadd.f32 %v4000, %v4016
    %v4020 = vadd.f32 %v4001, %v4016
    %v4021 = vadd.f32 %v4002, %v4016
    %v4022 = vadd.f32 %v4003, %v4016
    %v4023 = vadd.f32 %v4004, %v4016
    %v4024 = vadd.f32 %v4005, %v4016
    %v4025 = vadd.f32 %v4006, %v4016
    %v4026 = vadd.f32 %v4007, %v4016
    %v4027 = vadd.f32 %v4008, %v4016
    %v4028 = vadd.f32 %v4009, %v4016
    %v4029 = vadd.f32 %v4010, %v4016
    %v4030 = vld [vmem:[%s5] sm:$0xff]
    %vm4031 = vcmask 752640
    %v4033 = vsel %vm4031, %v4030, 0
    %v4036 = vsel %vm146, %v4029, 0
    %4038 = vmatprep.subr.mxu0 0.0
    %4039 = vmatpush1.msra.mxu0 %v4018
    %4040 = vmatprep.subr.mxu0 0.0
    %4041 = vmatpush1.msra.mxu0 %v4019
    %4042 = vmatprep.subr.mxu0 0.0
    %4043 = vmatpush1.msra.mxu0 %v4020
    %4044 = vmatprep.subr.mxu0 0.0
    %4045 = vmatpush1.msra.mxu0 %v4021
    %4046 = vmatprep.subr.mxu0 0.0
    %4047 = vmatpush1.msra.mxu0 %v4022
    %4048 = vmatprep.subr.mxu0 0.0
    %4049 = vmatpush1.msra.mxu0 %v4023
    %4050 = vmatprep.subr.mxu0 0.0
    %4051 = vmatpush1.msra.mxu0 %v4024
    %4052 = vmatprep.subr.mxu0 0.0
    %4053 = vmatpush1.msra.mxu0 %v4025
    %4054 = vmatprep.subr.mxu0 0.0
    %4055 = vmatpush1.msra.mxu0 %v4026
    %4056 = vmatprep.subr.mxu0 0.0
    %4057 = vmatpush1.msra.mxu0 %v4027
    %4058 = vmatprep.subr.mxu0 0.0
    %4059 = vmatpush1.msra.mxu0 %v4028
    %4060 = vmatprep.subr.mxu0 0.0
    %4061 = vmatpush1.msra.mxu0 %v4036
    %4062 = vmatprep.subr.mxu0 0.0
    %4063 = vmatpush1.msra.mxu0 0.0
    %4064 = vmatprep.subr.mxu0 0.0
    %4065 = vmatpush1.msra.mxu0 0.0
    %4066 = vmatprep.subr.mxu0 0.0
    %4067 = vmatpush1.msra.mxu0 0.0
    %4068 = vmatprep.subr.mxu0 0.0
    %4069 = vmatpush1.msra.mxu0 0.0
    %4070 = vmatprep.subr.mxu0 0.0
    %4071 = vmatpush1.msra.mxu0 0.0
    %4072 = vmatprep.subr.mxu0 0.0
    %4073 = vmatpush1.msra.mxu0 0.0
    %4074 = vmatprep.subr.mxu0 0.0
    %4075 = vmatpush1.msra.mxu0 0.0
    %4076 = vmatprep.subr.mxu0 0.0
    %4077 = vmatpush1.msra.mxu0 0.0
    %4078 = vmatprep.subr.mxu0 0.0
    %4079 = vmatpush1.msra.mxu0 0.0
    %4080 = vmatprep.subr.mxu0 0.0
    %4081 = vmatpush1.msra.mxu0 0.0
    %4082 = vmatprep.subr.mxu0 0.0
    %4083 = vmatpush1.msra.mxu0 0.0
    %4084 = vmatprep.subr.mxu0 0.0
    %4085 = vmatpush1.msra.mxu0 0.0
    %4086 = vmatprep.subr.mxu0 0.0
    %4087 = vmatpush1.msra.mxu0 0.0
    %4088 = vmatprep.subr.mxu0 0.0
    %4089 = vmatpush1.msra.mxu0 0.0
    %4090 = vmatprep.subr.mxu0 0.0
    %4091 = vmatpush1.msra.mxu0 0.0
    %4092 = vmatprep.subr.mxu0 0.0
    %4093 = vmatpush1.msra.mxu0 0.0
    %4094 = vmatprep.subr.mxu0 0.0
    %4095 = vmatpush1.msra.mxu0 0.0
    %4096 = vmatprep.subr.mxu0 0.0
    %4097 = vmatpush1.msra.mxu0 0.0
    %4098 = vmatprep.subr.mxu0 0.0
    %4099 = vmatpush1.msra.mxu0 0.0
    %4100 = vmatprep.subr.mxu0 0.0
    %4101 = vmatpush1.msra.mxu0 0.0
    %4102 = vmatprep.mubr.f32.mxu0 0.0
    %4103 = vmatmul.mubr.f32.gmra.mrb[0].mxu0 %v4033
    %v4104 = vpop.f32.mrb[0].mxu0
    %v4105 = vadd.f32 0.0, %v4104
    %v4106 = vpop.f32.mrb[0].mxu0
    %4107 = vdwg.mxu0
    %v4108 = vld [vmem:[%s7] sm:$0x1]
    %v4110 = vlaneseq
    %v4111 = vshrl.u32 %v4110, 7
    %v4112 = vsub.s32 0, %v4111
    %v4113 = vrot.slane %v4108, %v4112
    %v4115 = vadd.f32 %v4113, 0.0
    %v4116 = vld [vmem:[%s6] sm:$0xff]
    %v4117 = vld [vmem:[%s6 + $0x8] sm:$0xff]
    %vm4118 = vcmask 130048
    %v4120 = vsel %vm4118, %v4105, 0
    %4122 = vmatprep.subr.mxu0 0.0
    %4123 = vmatpush1.msra.mxu0 %v4116
    %4124 = vmatprep.subr.mxu0 0.0
    %4125 = vmatpush1.msra.mxu0 %v4117
    %4126 = vmatprep.subr.mxu0 0.0
    %4127 = vmatpush1.msra.mxu0 0.0
    %4128 = vmatprep.subr.mxu0 0.0
    %4129 = vmatpush1.msra.mxu0 0.0
    %4130 = vmatprep.subr.mxu0 0.0
    %4131 = vmatpush1.msra.mxu0 0.0
    %4132 = vmatprep.subr.mxu0 0.0
    %4133 = vmatpush1.msra.mxu0 0.0
    %4134 = vmatprep.subr.mxu0 0.0
    %4135 = vmatpush1.msra.mxu0 0.0
    %4136 = vmatprep.subr.mxu0 0.0
    %4137 = vmatpush1.msra.mxu0 0.0
    %4138 = vmatprep.subr.mxu0 0.0
    %4139 = vmatpush1.msra.mxu0 0.0
    %4140 = vmatprep.subr.mxu0 0.0
    %4141 = vmatpush1.msra.mxu0 0.0
    %4142 = vmatprep.subr.mxu0 0.0
    %4143 = vmatpush1.msra.mxu0 0.0
    %4144 = vmatprep.subr.mxu0 0.0
    %4145 = vmatpush1.msra.mxu0 0.0
    %4146 = vmatprep.subr.mxu0 0.0
    %4147 = vmatpush1.msra.mxu0 0.0
    %4148 = vmatprep.subr.mxu0 0.0
    %4149 = vmatpush1.msra.mxu0 0.0
    %4150 = vmatprep.subr.mxu0 0.0
    %4151 = vmatpush1.msra.mxu0 0.0
    %4152 = vmatprep.subr.mxu0 0.0
    %4153 = vmatpush1.msra.mxu0 0.0
    %4154 = vmatprep.subr.mxu0 0.0
    %4155 = vmatpush1.msra.mxu0 0.0
    %4156 = vmatprep.subr.mxu0 0.0
    %4157 = vmatpush1.msra.mxu0 0.0
    %4158 = vmatprep.subr.mxu0 0.0
    %4159 = vmatpush1.msra.mxu0 0.0
    %4160 = vmatprep.subr.mxu0 0.0
    %4161 = vmatpush1.msra.mxu0 0.0
    %4162 = vmatprep.subr.mxu0 0.0
    %4163 = vmatpush1.msra.mxu0 0.0
    %4164 = vmatprep.subr.mxu0 0.0
    %4165 = vmatpush1.msra.mxu0 0.0
    %4166 = vmatprep.subr.mxu0 0.0
    %4167 = vmatpush1.msra.mxu0 0.0
    %4168 = vmatprep.subr.mxu0 0.0
    %4169 = vmatpush1.msra.mxu0 0.0
    %4170 = vmatprep.subr.mxu0 0.0
    %4171 = vmatpush1.msra.mxu0 0.0
    %4172 = vmatprep.subr.mxu0 0.0
    %4173 = vmatpush1.msra.mxu0 0.0
    %4174 = vmatprep.subr.mxu0 0.0
    %4175 = vmatpush1.msra.mxu0 0.0
    %4176 = vmatprep.subr.mxu0 0.0
    %4177 = vmatpush1.msra.mxu0 0.0
    %4178 = vmatprep.subr.mxu0 0.0
    %4179 = vmatpush1.msra.mxu0 0.0
    %4180 = vmatprep.subr.mxu0 0.0
    %4181 = vmatpush1.msra.mxu0 0.0
    %4182 = vmatprep.subr.mxu0 0.0
    %4183 = vmatpush1.msra.mxu0 0.0
    %4184 = vmatprep.subr.mxu0 0.0
    %4185 = vmatpush1.msra.mxu0 0.0
    %4186 = vmatprep.mubr.f32.mxu0 0.0
    %4187 = vmatmul.mubr.f32.gmra.mrb[0].mxu0 %v4120
    %v4188 = vpop.f32.mrb[0].mxu0
    %v4189 = vadd.f32 0.0, %v4188
    %v4190 = vpop.f32.mrb[0].mxu0
    %4191 = vdwg.mxu0
    %v4192 = vadd.f32 %v4115, %v4189
    %v4193 = vld [vmem:[%s6 + $0x10] sm:$0xff]
    %v4194 = vld [vmem:[%s6 + $0x18] sm:$0xff]
    %v4195 = vrot.slane %v4105, 2
    %v4196 = vsel %vm4118, %v4195, 0
    %4198 = vmatprep.subr.mxu0 0.0
    %4199 = vmatpush1.msra.mxu0 %v4193
    %4200 = vmatprep.subr.mxu0 0.0
    %4201 = vmatpush1.msra.mxu0 %v4194
    %4202 = vmatprep.subr.mxu0 0.0
    %4203 = vmatpush1.msra.mxu0 0.0
    %4204 = vmatprep.subr.mxu0 0.0
    %4205 = vmatpush1.msra.mxu0 0.0
    %4206 = vmatprep.subr.mxu0 0.0
    %4207 = vmatpush1.msra.mxu0 0.0
    %4208 = vmatprep.subr.mxu0 0.0
    %4209 = vmatpush1.msra.mxu0 0.0
    %4210 = vmatprep.subr.mxu0 0.0
    %4211 = vmatpush1.msra.mxu0 0.0
    %4212 = vmatprep.subr.mxu0 0.0
    %4213 = vmatpush1.msra.mxu0 0.0
    %4214 = vmatprep.subr.mxu0 0.0
    %4215 = vmatpush1.msra.mxu0 0.0
    %4216 = vmatprep.subr.mxu0 0.0
    %4217 = vmatpush1.msra.mxu0 0.0
    %4218 = vmatprep.subr.mxu0 0.0
    %4219 = vmatpush1.msra.mxu0 0.0
    %4220 = vmatprep.subr.mxu0 0.0
    %4221 = vmatpush1.msra.mxu0 0.0
    %4222 = vmatprep.subr.mxu0 0.0
    %4223 = vmatpush1.msra.mxu0 0.0
    %4224 = vmatprep.subr.mxu0 0.0
    %4225 = vmatpush1.msra.mxu0 0.0
    %4226 = vmatprep.subr.mxu0 0.0
    %4227 = vmatpush1.msra.mxu0 0.0
    %4228 = vmatprep.subr.mxu0 0.0
    %4229 = vmatpush1.msra.mxu0 0.0
    %4230 = vmatprep.subr.mxu0 0.0
    %4231 = vmatpush1.msra.mxu0 0.0
    %4232 = vmatprep.subr.mxu0 0.0
    %4233 = vmatpush1.msra.mxu0 0.0
    %4234 = vmatprep.subr.mxu0 0.0
    %4235 = vmatpush1.msra.mxu0 0.0
    %4236 = vmatprep.subr.mxu0 0.0
    %4237 = vmatpush1.msra.mxu0 0.0
    %4238 = vmatprep.subr.mxu0 0.0
    %4239 = vmatpush1.msra.mxu0 0.0
    %4240 = vmatprep.subr.mxu0 0.0
    %4241 = vmatpush1.msra.mxu0 0.0
    %4242 = vmatprep.subr.mxu0 0.0
    %4243 = vmatpush1.msra.mxu0 0.0
    %4244 = vmatprep.subr.mxu0 0.0
    %4245 = vmatpush1.msra.mxu0 0.0
    %4246 = vmatprep.subr.mxu0 0.0
    %4247 = vmatpush1.msra.mxu0 0.0
    %4248 = vmatprep.subr.mxu0 0.0
    %4249 = vmatpush1.msra.mxu0 0.0
    %4250 = vmatprep.subr.mxu0 0.0
    %4251 = vmatpush1.msra.mxu0 0.0
    %4252 = vmatprep.subr.mxu0 0.0
    %4253 = vmatpush1.msra.mxu0 0.0
    %4254 = vmatprep.subr.mxu0 0.0
    %4255 = vmatpush1.msra.mxu0 0.0
    %4256 = vmatprep.subr.mxu0 0.0
    %4257 = vmatpush1.msra.mxu0 0.0
    %4258 = vmatprep.subr.mxu0 0.0
    %4259 = vmatpush1.msra.mxu0 0.0
    %4260 = vmatprep.subr.mxu0 0.0
    %4261 = vmatpush1.msra.mxu0 0.0
    %4262 = vmatprep.mubr.f32.mxu0 0.0
    %4263 = vmatmul.mubr.f32.gmra.mrb[0].mxu0 %v4196
    %v4264 = vpop.f32.mrb[0].mxu0
    %v4265 = vadd.f32 0.0, %v4264
    %v4266 = vpop.f32.mrb[0].mxu0
    %4267 = vdwg.mxu0
    %v4268 = vadd.f32 %v4192, %v4265
    %v4269 = vld [vmem:[%s6 + $0x20] sm:$0xff]
    %v4270 = vld [vmem:[%s6 + $0x28] sm:$0xff]
    %v4271 = vrot.slane %v4105, 4
    %v4272 = vsel %vm4118, %v4271, 0
    %4274 = vmatprep.subr.mxu0 0.0
    %4275 = vmatpush1.msra.mxu0 %v4269
    %4276 = vmatprep.subr.mxu0 0.0
    %4277 = vmatpush1.msra.mxu0 %v4270
    %4278 = vmatprep.subr.mxu0 0.0
    %4279 = vmatpush1.msra.mxu0 0.0
    %4280 = vmatprep.subr.mxu0 0.0
    %4281 = vmatpush1.msra.mxu0 0.0
    %4282 = vmatprep.subr.mxu0 0.0
    %4283 = vmatpush1.msra.mxu0 0.0
    %4284 = vmatprep.subr.mxu0 0.0
    %4285 = vmatpush1.msra.mxu0 0.0
    %4286 = vmatprep.subr.mxu0 0.0
    %4287 = vmatpush1.msra.mxu0 0.0
    %4288 = vmatprep.subr.mxu0 0.0
    %4289 = vmatpush1.msra.mxu0 0.0
    %4290 = vmatprep.subr.mxu0 0.0
    %4291 = vmatpush1.msra.mxu0 0.0
    %4292 = vmatprep.subr.mxu0 0.0
    %4293 = vmatpush1.msra.mxu0 0.0
    %4294 = vmatprep.subr.mxu0 0.0
    %4295 = vmatpush1.msra.mxu0 0.0
    %4296 = vmatprep.subr.mxu0 0.0
    %4297 = vmatpush1.msra.mxu0 0.0
    %4298 = vmatprep.subr.mxu0 0.0
    %4299 = vmatpush1.msra.mxu0 0.0
    %4300 = vmatprep.subr.mxu0 0.0
    %4301 = vmatpush1.msra.mxu0 0.0
    %4302 = vmatprep.subr.mxu0 0.0
    %4303 = vmatpush1.msra.mxu0 0.0
    %4304 = vmatprep.subr.mxu0 0.0
    %4305 = vmatpush1.msra.mxu0 0.0
    %4306 = vmatprep.subr.mxu0 0.0
    %4307 = vmatpush1.msra.mxu0 0.0
    %4308 = vmatprep.subr.mxu0 0.0
    %4309 = vmatpush1.msra.mxu0 0.0
    %4310 = vmatprep.subr.mxu0 0.0
    %4311 = vmatpush1.msra.mxu0 0.0
    %4312 = vmatprep.subr.mxu0 0.0
    %4313 = vmatpush1.msra.mxu0 0.0
    %4314 = vmatprep.subr.mxu0 0.0
    %4315 = vmatpush1.msra.mxu0 0.0
    %4316 = vmatprep.subr.mxu0 0.0
    %4317 = vmatpush1.msra.mxu0 0.0
    %4318 = vmatprep.subr.mxu0 0.0
    %4319 = vmatpush1.msra.mxu0 0.0
    %4320 = vmatprep.subr.mxu0 0.0
    %4321 = vmatpush1.msra.mxu0 0.0
    %4322 = vmatprep.subr.mxu0 0.0
    %4323 = vmatpush1.msra.mxu0 0.0
    %4324 = vmatprep.subr.mxu0 0.0
    %4325 = vmatpush1.msra.mxu0 0.0
    %4326 = vmatprep.subr.mxu0 0.0
    %4327 = vmatpush1.msra.mxu0 0.0
    %4328 = vmatprep.subr.mxu0 0.0
    %4329 = vmatpush1.msra.mxu0 0.0
    %4330 = vmatprep.subr.mxu0 0.0
    %4331 = vmatpush1.msra.mxu0 0.0
    %4332 = vmatprep.subr.mxu0 0.0
    %4333 = vmatpush1.msra.mxu0 0.0
    %4334 = vmatprep.subr.mxu0 0.0
    %4335 = vmatpush1.msra.mxu0 0.0
    %4336 = vmatprep.subr.mxu0 0.0
    %4337 = vmatpush1.msra.mxu0 0.0
    %4338 = vmatprep.mubr.f32.mxu0 0.0
    %4339 = vmatmul.mubr.f32.gmra.mrb[0].mxu0 %v4272
    %v4340 = vpop.f32.mrb[0].mxu0
    %v4341 = vadd.f32 0.0, %v4340
    %v4342 = vpop.f32.mrb[0].mxu0
    %4343 = vdwg.mxu0
    %v4344 = vadd.f32 %v4268, %v4341
    %v4345 = vld [vmem:[%s6 + $0x30] sm:$0xff]
    %v4346 = vld [vmem:[%s6 + $0x38] sm:$0xff]
    %v4347 = vrot.slane %v4105, 6
    %v4348 = vsel %vm4118, %v4347, 0
    %4350 = vmatprep.subr.mxu0 0.0
    %4351 = vmatpush1.msra.mxu0 %v4345
    %4352 = vmatprep.subr.mxu0 0.0
    %4353 = vmatpush1.msra.mxu0 %v4346
    %4354 = vmatprep.subr.mxu0 0.0
    %4355 = vmatpush1.msra.mxu0 0.0
    %4356 = vmatprep.subr.mxu0 0.0
    %4357 = vmatpush1.msra.mxu0 0.0
    %4358 = vmatprep.subr.mxu0 0.0
    %4359 = vmatpush1.msra.mxu0 0.0
    %4360 = vmatprep.subr.mxu0 0.0
    %4361 = vmatpush1.msra.mxu0 0.0
    %4362 = vmatprep.subr.mxu0 0.0
    %4363 = vmatpush1.msra.mxu0 0.0
    %4364 = vmatprep.subr.mxu0 0.0
    %4365 = vmatpush1.msra.mxu0 0.0
    %4366 = vmatprep.subr.mxu0 0.0
    %4367 = vmatpush1.msra.mxu0 0.0
    %4368 = vmatprep.subr.mxu0 0.0
    %4369 = vmatpush1.msra.mxu0 0.0
    %4370 = vmatprep.subr.mxu0 0.0
    %4371 = vmatpush1.msra.mxu0 0.0
    %4372 = vmatprep.subr.mxu0 0.0
    %4373 = vmatpush1.msra.mxu0 0.0
    %4374 = vmatprep.subr.mxu0 0.0
    %4375 = vmatpush1.msra.mxu0 0.0
    %4376 = vmatprep.subr.mxu0 0.0
    %4377 = vmatpush1.msra.mxu0 0.0
    %4378 = vmatprep.subr.mxu0 0.0
    %4379 = vmatpush1.msra.mxu0 0.0
    %4380 = vmatprep.subr.mxu0 0.0
    %4381 = vmatpush1.msra.mxu0 0.0
    %4382 = vmatprep.subr.mxu0 0.0
    %4383 = vmatpush1.msra.mxu0 0.0
    %4384 = vmatprep.subr.mxu0 0.0
    %4385 = vmatpush1.msra.mxu0 0.0
    %4386 = vmatprep.subr.mxu0 0.0
    %4387 = vmatpush1.msra.mxu0 0.0
    %4388 = vmatprep.subr.mxu0 0.0
    %4389 = vmatpush1.msra.mxu0 0.0
    %4390 = vmatprep.subr.mxu0 0.0
    %4391 = vmatpush1.msra.mxu0 0.0
    %4392 = vmatprep.subr.mxu0 0.0
    %4393 = vmatpush1.msra.mxu0 0.0
    %4394 = vmatprep.subr.mxu0 0.0
    %4395 = vmatpush1.msra.mxu0 0.0
    %4396 = vmatprep.subr.mxu0 0.0
    %4397 = vmatpush1.msra.mxu0 0.0
    %4398 = vmatprep.subr.mxu0 0.0
    %4399 = vmatpush1.msra.mxu0 0.0
    %4400 = vmatprep.subr.mxu0 0.0
    %4401 = vmatpush1.msra.mxu0 0.0
    %4402 = vmatprep.subr.mxu0 0.0
    %4403 = vmatpush1.msra.mxu0 0.0
    %4404 = vmatprep.subr.mxu0 0.0
    %4405 = vmatpush1.msra.mxu0 0.0
    %4406 = vmatprep.subr.mxu0 0.0
    %4407 = vmatpush1.msra.mxu0 0.0
    %4408 = vmatprep.subr.mxu0 0.0
    %4409 = vmatpush1.msra.mxu0 0.0
    %4410 = vmatprep.subr.mxu0 0.0
    %4411 = vmatpush1.msra.mxu0 0.0
    %4412 = vmatprep.subr.mxu0 0.0
    %4413 = vmatpush1.msra.mxu0 0.0
    %4414 = vmatprep.mubr.f32.mxu0 0.0
    %4415 = vmatmul.mubr.f32.gmra.mrb[0].mxu0 %v4348
    %v4416 = vpop.f32.mrb[0].mxu0
    %v4417 = vadd.f32 0.0, %v4416
    %v4418 = vpop.f32.mrb[0].mxu0
    %4419 = vdwg.mxu0
    %v4420 = vadd.f32 %v4344, %v4417
    %v4421 = vsub.f32 0.0, %v4420
    %v4422 = vmul.f32 %v4421, 1.442695
    %v4423 = vpow.pop %v4422
    %v4424 = vadd.f32 %v4423, 1.0
    %v4425 = vrcp.pop %v4424
    %v4426 = vld [vmem:[%s8] sm:$0xff]
    %v4427 = vld [vmem:[%s8 + $0x8] sm:$0xff]
    %v4428 = vld [vmem:[%s8 + $0x10] sm:$0xff]
    %v4429 = vld [vmem:[%s8 + $0x18] sm:$0xff]
    %v4430 = vld [vmem:[%s8 + $0x20] sm:$0xff]
    %v4431 = vld [vmem:[%s8 + $0x28] sm:$0xff]
    %v4432 = vld [vmem:[%s8 + $0x30] sm:$0xff]
    %v4433 = vld [vmem:[%s8 + $0x38] sm:$0xff]
    %v4434 = vld [vmem:[%s8 + $0x40] sm:$0xff]
    %v4435 = vld [vmem:[%s8 + $0x48] sm:$0xff]
    %v4436 = vld [vmem:[%s8 + $0x50] sm:$0xff]
    %v4437 = vld [vmem:[%s8 + $0x58] sm:$0xff]
    %v4438 = vld [vmem:[%s8 + $0x60] sm:$0xff]
    %v4439 = vld [vmem:[%s8 + $0x68] sm:$0xff]
    %v4440 = vld [vmem:[%s8 + $0x70] sm:$0xff]
    %v4441 = vld [vmem:[%s9] sm:$0x1]
    %v4443 = vlaneseq
    %v4444 = vshrl.u32 %v4443, 7
    %v4445 = vsub.s32 0, %v4444
    %v4446 = vrot.slane %v4441, %v4445
    %vm4448 = vcmask 982016
    %v4450 = vsel %vm4448, %v4425, 0
    %4452 = vmatprep.subr.mxu0 0.0
    %4453 = vmatpush1.msra.mxu0 %v4426
    %4454 = vmatprep.subr.mxu0 0.0
    %4455 = vmatpush1.msra.mxu0 %v4427
    %4456 = vmatprep.subr.mxu0 0.0
    %4457 = vmatpush1.msra.mxu0 %v4428
    %4458 = vmatprep.subr.mxu0 0.0
    %4459 = vmatpush1.msra.mxu0 %v4429
    %4460 = vmatprep.subr.mxu0 0.0
    %4461 = vmatpush1.msra.mxu0 %v4430
    %4462 = vmatprep.subr.mxu0 0.0
    %4463 = vmatpush1.msra.mxu0 %v4431
    %4464 = vmatprep.subr.mxu0 0.0
    %4465 = vmatpush1.msra.mxu0 %v4432
    %4466 = vmatprep.subr.mxu0 0.0
    %4467 = vmatpush1.msra.mxu0 %v4433
    %4468 = vmatprep.subr.mxu0 0.0
    %4469 = vmatpush1.msra.mxu0 %v4434
    %4470 = vmatprep.subr.mxu0 0.0
    %4471 = vmatpush1.msra.mxu0 %v4435
    %4472 = vmatprep.subr.mxu0 0.0
    %4473 = vmatpush1.msra.mxu0 %v4436
    %4474 = vmatprep.subr.mxu0 0.0
    %4475 = vmatpush1.msra.mxu0 %v4437
    %4476 = vmatprep.subr.mxu0 0.0
    %4477 = vmatpush1.msra.mxu0 %v4438
    %4478 = vmatprep.subr.mxu0 0.0
    %4479 = vmatpush1.msra.mxu0 %v4439
    %4480 = vmatprep.subr.mxu0 0.0
    %4481 = vmatpush1.msra.mxu0 %v4440
    %4482 = vmatprep.subr.mxu0 0.0
    %4483 = vmatpush1.msra.mxu0 0.0
    %4484 = vmatprep.subr.mxu0 0.0
    %4485 = vmatpush1.msra.mxu0 0.0
    %4486 = vmatprep.subr.mxu0 0.0
    %4487 = vmatpush1.msra.mxu0 0.0
    %4488 = vmatprep.subr.mxu0 0.0
    %4489 = vmatpush1.msra.mxu0 0.0
    %4490 = vmatprep.subr.mxu0 0.0
    %4491 = vmatpush1.msra.mxu0 0.0
    %4492 = vmatprep.subr.mxu0 0.0
    %4493 = vmatpush1.msra.mxu0 0.0
    %4494 = vmatprep.subr.mxu0 0.0
    %4495 = vmatpush1.msra.mxu0 0.0
    %4496 = vmatprep.subr.mxu0 0.0
    %4497 = vmatpush1.msra.mxu0 0.0
    %4498 = vmatprep.subr.mxu0 0.0
    %4499 = vmatpush1.msra.mxu0 0.0
    %4500 = vmatprep.subr.mxu0 0.0
    %4501 = vmatpush1.msra.mxu0 0.0
    %4502 = vmatprep.subr.mxu0 0.0
    %4503 = vmatpush1.msra.mxu0 0.0
    %4504 = vmatprep.subr.mxu0 0.0
    %4505 = vmatpush1.msra.mxu0 0.0
    %4506 = vmatprep.subr.mxu0 0.0
    %4507 = vmatpush1.msra.mxu0 0.0
    %4508 = vmatprep.subr.mxu0 0.0
    %4509 = vmatpush1.msra.mxu0 0.0
    %4510 = vmatprep.subr.mxu0 0.0
    %4511 = vmatpush1.msra.mxu0 0.0
    %4512 = vmatprep.subr.mxu0 0.0
    %4513 = vmatpush1.msra.mxu0 0.0
    %4514 = vmatprep.subr.mxu0 0.0
    %4515 = vmatpush1.msra.mxu0 0.0
    %4516 = vmatprep.mubr.f32.mxu0 0.0
    %4517 = vmatmul.mubr.f32.gmra.mrb[0].mxu0 %v4450
    %v4518 = vpop.f32.mrb[0].mxu0
    %v4519 = vadd.f32 %v4446, %v4518
    %v4520 = vpop.f32.mrb[0].mxu0
    %4521 = vdwg.mxu0
    %v4522 = vsub.f32 0.0, %v4519
    %v4523 = vmul.f32 %v4522, 1.442695
    %v4524 = vpow.pop %v4523
    %v4525 = vadd.f32 %v4524, 1.0
    %v4526 = vrcp.pop %v4525
    %v4527 = vld [vmem:[%s10] sm:$0xff]
    %v4528 = vld [vmem:[%s10 + $0x8] sm:$0xff]
    %v4529 = vld [vmem:[%s10 + $0x10] sm:$0xff]
    %v4530 = vld [vmem:[%s10 + $0x18] sm:$0xff]
    %v4531 = vld [vmem:[%s10 + $0x20] sm:$0xff]
    %v4532 = vld [vmem:[%s10 + $0x28] sm:$0xff]
    %v4533 = vld [vmem:[%s10 + $0x30] sm:$0xff]
    %v4534 = vld [vmem:[%s10 + $0x38] sm:$0xff]
    %v4535 = vld [vmem:[%s10 + $0x40] sm:$0xff]
    %v4536 = vld [vmem:[%s10 + $0x48] sm:$0xff]
    %v4537 = vld [vmem:[%s10 + $0x50] sm:$0xf]
    %v4538 = vld [vmem:[%s11] sm:$0x1]
    %v4540 = vlaneseq
    %v4541 = vshrl.u32 %v4540, 7
    %v4542 = vsub.s32 0, %v4541
    %v4543 = vrot.slane %v4538, %v4542
    %vm4545 = vcmask 687104
    %v4547 = vsel %vm4545, %v4526, 0
    %v4550 = vsel %vm146, %v4537, 0
    %4552 = vmatprep.subr.mxu0 0.0
    %4553 = vmatpush1.msra.mxu0 %v4527
    %4554 = vmatprep.subr.mxu0 0.0
    %4555 = vmatpush1.msra.mxu0 %v4528
    %4556 = vmatprep.subr.mxu0 0.0
    %4557 = vmatpush1.msra.mxu0 %v4529
    %4558 = vmatprep.subr.mxu0 0.0
    %4559 = vmatpush1.msra.mxu0 %v4530
    %4560 = vmatprep.subr.mxu0 0.0
    %4561 = vmatpush1.msra.mxu0 %v4531
    %4562 = vmatprep.subr.mxu0 0.0
    %4563 = vmatpush1.msra.mxu0 %v4532
    %4564 = vmatprep.subr.mxu0 0.0
    %4565 = vmatpush1.msra.mxu0 %v4533
    %4566 = vmatprep.subr.mxu0 0.0
    %4567 = vmatpush1.msra.mxu0 %v4534
    %4568 = vmatprep.subr.mxu0 0.0
    %4569 = vmatpush1.msra.mxu0 %v4535
    %4570 = vmatprep.subr.mxu0 0.0
    %4571 = vmatpush1.msra.mxu0 %v4536
    %4572 = vmatprep.subr.mxu0 0.0
    %4573 = vmatpush1.msra.mxu0 %v4550
    %4574 = vmatprep.subr.mxu0 0.0
    %4575 = vmatpush1.msra.mxu0 0.0
    %4576 = vmatprep.subr.mxu0 0.0
    %4577 = vmatpush1.msra.mxu0 0.0
    %4578 = vmatprep.subr.mxu0 0.0
    %4579 = vmatpush1.msra.mxu0 0.0
    %4580 = vmatprep.subr.mxu0 0.0
    %4581 = vmatpush1.msra.mxu0 0.0
    %4582 = vmatprep.subr.mxu0 0.0
    %4583 = vmatpush1.msra.mxu0 0.0
    %4584 = vmatprep.subr.mxu0 0.0
    %4585 = vmatpush1.msra.mxu0 0.0
    %4586 = vmatprep.subr.mxu0 0.0
    %4587 = vmatpush1.msra.mxu0 0.0
    %4588 = vmatprep.subr.mxu0 0.0
    %4589 = vmatpush1.msra.mxu0 0.0
    %4590 = vmatprep.subr.mxu0 0.0
    %4591 = vmatpush1.msra.mxu0 0.0
    %4592 = vmatprep.subr.mxu0 0.0
    %4593 = vmatpush1.msra.mxu0 0.0
    %4594 = vmatprep.subr.mxu0 0.0
    %4595 = vmatpush1.msra.mxu0 0.0
    %4596 = vmatprep.subr.mxu0 0.0
    %4597 = vmatpush1.msra.mxu0 0.0
    %4598 = vmatprep.subr.mxu0 0.0
    %4599 = vmatpush1.msra.mxu0 0.0
    %4600 = vmatprep.subr.mxu0 0.0
    %4601 = vmatpush1.msra.mxu0 0.0
    %4602 = vmatprep.subr.mxu0 0.0
    %4603 = vmatpush1.msra.mxu0 0.0
    %4604 = vmatprep.subr.mxu0 0.0
    %4605 = vmatpush1.msra.mxu0 0.0
    %4606 = vmatprep.subr.mxu0 0.0
    %4607 = vmatpush1.msra.mxu0 0.0
    %4608 = vmatprep.subr.mxu0 0.0
    %4609 = vmatpush1.msra.mxu0 0.0
    %4610 = vmatprep.subr.mxu0 0.0
    %4611 = vmatpush1.msra.mxu0 0.0
    %4612 = vmatprep.subr.mxu0 0.0
    %4613 = vmatpush1.msra.mxu0 0.0
    %4614 = vmatprep.subr.mxu0 0.0
    %4615 = vmatpush1.msra.mxu0 0.0
    %4616 = vmatprep.mubr.f32.mxu0 0.0
    %4617 = vmatmul.mubr.f32.gmra.mrb[0].mxu0 %v4547
    %v4618 = vpop.f32.mrb[0].mxu0
    %v4619 = vadd.f32 %v4543, %v4618
    %v4620 = vpop.f32.mrb[0].mxu0
    %4621 = vdwg.mxu0
    %v4622 = vsub.f32 0.0, %v4619
    %v4623 = vmul.f32 %v4622, 1.442695
    %v4624 = vpow.pop %v4623
    %v4625 = vadd.f32 %v4624, 1.0
    %v4626 = vrcp.pop %v4625
    %vm4627 = vcmask 74752
    %v4628 = vsel %vm4627, %v4626, -inf
    %4629 = vmax.xlane.f32.xlu0 %v4628
    %v4630 = vpop.xlane.xlu0 %4629
    %v4631 = vsub.f32 %v4626, %v4630
    %v4632 = vmul.f32 %v4631, 1.442695
    %v4633 = vpow.pop %v4632
    %v4634 = vsel %vm4627, %v4633, 0.0
    %4635 = vadd.xlane.f32.xlu0 %v4634
    %v4636 = vpop.xlane.xlu0 %4635
    %v4637 = vrcp.pop %v4636
    %v4638 = vmul.f32 %v4633, %v4637
    %vm4639 = vcmask 73728
    %4640 = vst.msk [vmem:[#allocation2] sm:$0x1] %vm4639, %v4638
    %s4641 = scalar_lea.vmem [#allocation2], 1
    %vm4642 = vcmask 74753
    %4643 = vst.msk [vmem:[%s4641 - $0x1] sm:$0x2] %vm4642, %v4638
    // Predicated region
    $region50: #{lenet_forward.1} parent=1 // pred_check
      _
    $region51: #{lenet_forward.1} parent=1 // pred_check_branch
      %4645 = sbr.rel (0) target = $region53
    $region52: #{lenet_forward.1} parent=1 // pred_region
      %s4647 = ssub.s32 32, 32
      %4648 = vsyncadd [#allocation3], %s4647
      %s4649 = sshll.u32 [#allocation2], 4
      %s4650 = int_to_ptr.vmem [resolvable:$true] %s4649
      %4655 = dma.vmem_to_hbm [thread:$0]  %s4650, 32, %s12, [#allocation3], 16, 16, 1
    $region53: #{lenet_forward.1} parent=1 // pred_fallthru
      _
    // Predicated region
    $region54: #{lenet_forward.1} parent=1 // pred_check
      _
    $region55: #{lenet_forward.1} parent=1 // pred_check_branch
      %4657 = sbr.rel (0) target = $region57
    $region56: #{lenet_forward.1} parent=1 // pred_region
      %4658 = dma.done [#allocation3], 32
    $region57: #{lenet_forward.1} parent=1 // pred_fallthru
      _
    %4659 = vsyncpa [#allocation3], 1

</llo_original>
